<compile_context>
chip_gen: v7x
topology: tpu7x:2x2x1
jax: 0.10.0
libtpu: 0.0.40
codegen_flags: <defaults>
</compile_context>

<pallas_src>
import math
import functools

import jax
import jax.numpy as jnp
from jax import lax
from jax.experimental import pallas as pl
from jax.experimental.pallas import tpu as pltpu


# --------------------------------------------------------------------------- #
# Kernel: n_layers fused encoder layers over one (bB, S, D) activation block.
# --------------------------------------------------------------------------- #
def encoder_stack_kernel(x_ref,
                         wqkv_ref, bqkv_ref, wo_ref,
                         w1_ref, b1_ref, w2_ref,
                         vec_ref,
                         o_ref,
                         *, num_heads, n_layers, kv_tile, approx_softmax):
    bB, S, D = x_ref.shape
    H = num_heads
    dk = D // H
    M = bB * S                      # rows fed to every MXU matmul
    N = bB * H                      # attention batch (batch x heads)
    n_kv = S // kv_tile             # static KV-tile count (flash-style softmax)
    cdt = wqkv_ref.dtype            # matmul operand dtype (bf16 on all gens by default)

    # packed small vectors: bo, gamma1, beta1, b2, gamma2, beta2
    bo, g1, beta1, b2, g2, beta2 = (vec_ref[i] for i in range(6))

    x2d = x_ref[...].reshape(M, D).astype(jnp.float32)       # residual stream, f32

    def layer_norm(y, gamma, beta):
        mu = jnp.mean(y, axis=-1, keepdims=True)
        var = jnp.mean((y - mu) ** 2, axis=-1, keepdims=True)  # biased var (torch LN)
        return (y - mu) * lax.rsqrt(var + 1e-5) * gamma + beta

    def split_heads(t2d):
        # (M, D) -> (bB*H, S, dk).  With lane-dense d_k (multiple of 128) each
        # head slice is a full-lane tile and the stack is a cheap major-axis
        # concatenate (no masked relayout).
        t3 = t2d.reshape(bB, S, D)
        th = jnp.stack([t3[:, :, h * dk:(h + 1) * dk] for h in range(H)], axis=1)
        return th.reshape(N, S, dk).astype(cdt)

    def layer_body(_, x_res):
        xc = x_res.astype(cdt)                                 # cast once, reuse
        # fused QKV projection (score scale pre-folded into wq/bq on the host)
        qkv = jnp.dot(xc, wqkv_ref[...],
                      preferred_element_type=jnp.float32) + bqkv_ref[0]   # (M, 3D)
        qh = split_heads(qkv[:, :D])
        kh = split_heads(qkv[:, D:2 * D])
        vh = split_heads(qkv[:, 2 * D:])

        # ---- flash-style softmax over KV tiles (bounds the live score slab) --
        def scores(t):
            k_t = kh[:, t * kv_tile:(t + 1) * kv_tile, :]
            v_t = vh[:, t * kv_tile:(t + 1) * kv_tile, :]
            s = jnp.einsum("nqd,nkd->nqk", qh, k_t,
                           preferred_element_type=jnp.float32)            # (N,S,kv)
            return s, v_t

        s0, v0 = scores(0)
        m_i = jnp.max(s0, axis=-1, keepdims=True)
        p0 = jnp.exp(s0 - m_i)
        l_i = jnp.sum(p0, axis=-1, keepdims=True)
        acc = jnp.einsum("nqk,nkd->nqd", p0.astype(cdt), v0,
                         preferred_element_type=jnp.float32)
        for t in range(1, n_kv):
            s_t, v_t = scores(t)
            m_new = jnp.maximum(m_i, jnp.max(s_t, axis=-1, keepdims=True))
            alpha = jnp.exp(m_i - m_new)
            p_t = jnp.exp(s_t - m_new)
            l_i = alpha * l_i + jnp.sum(p_t, axis=-1, keepdims=True)
            acc = alpha * acc + jnp.einsum("nqk,nkd->nqd", p_t.astype(cdt), v_t,
                                           preferred_element_type=jnp.float32)
            m_i = m_new
        # deferred normalization: N*S*dk multiplies instead of N*S*S
        attn = acc * pl.reciprocal(l_i, approx=approx_softmax)            # (N,S,dk)

        # in-register head merge (no VMEM scratch round trip)
        attn4 = attn.reshape(bB, H, S, dk)
        concat = jnp.concatenate([attn4[:, h] for h in range(H)],
                                 axis=-1).reshape(M, D)                   # (M, D) f32

        mha = jnp.dot(concat.astype(cdt), wo_ref[...],
                      preferred_element_type=jnp.float32) + bo
        add1 = layer_norm(x_res + mha, g1, beta1)                         # (M, D) f32

        h1 = jnp.dot(add1.astype(cdt), w1_ref[...],
                     preferred_element_type=jnp.float32) + b1_ref[0]      # (M, d_ff)
        h1 = jnp.maximum(h1, 0.0)
        ffn = jnp.dot(h1.astype(cdt), w2_ref[...],
                      preferred_element_type=jnp.float32) + b2            # (M, D)
        return layer_norm(add1 + ffn, g2, beta2)

    out = lax.fori_loop(0, n_layers, layer_body, x2d)   # layers fused in-kernel
    o_ref[...] = out.reshape(bB, S, D).astype(o_ref.dtype)


# --------------------------------------------------------------------------- #
# Host-side helpers
# --------------------------------------------------------------------------- #
def _const_spec(shape):
    """Weight/bias BlockSpec: constant index_map, single-buffered."""
    index_map = lambda b: (0,) * len(shape)
    try:
        return pl.BlockSpec(shape, index_map, pipeline_mode=pl.Buffered(1))
    except Exception:  # older jax without pipeline_mode: default double-buffering
        return pl.BlockSpec(shape, index_map)


def _vmem_limit_bytes():
    cap = 64 * 1024 * 1024                     # conservative default (v7x physical)
    try:
        cap = int(pltpu.get_tpu_info().vmem_capacity_bytes)
    except Exception:
        pass
    return max(32 * 1024 * 1024, min(cap - 16 * 1024 * 1024, 100 * 1024 * 1024))


def _pick_block_batch(B, S, requested=None):
    if requested is not None:
        assert B % requested == 0, "block_batch must divide B"
        return requested
    bB = min(B, max(1, -(-256 // S)))          # target >= 256 matmul rows per step
    # keep >= 2 grid steps when possible so both v7x TensorCores get work
    while bB > 1 and (B % bB != 0 or B // bB < 2):
        bB -= 1
    return max(bB, 1)


def _pick_kv_tile(S, requested=None):
    if requested is not None:
        assert S % requested == 0, "kv_tile must divide S"
        return requested
    if S <= 256:
        return S
    for t in range(256, 0, -1):
        if S % t == 0:
            return t
    return S


def pack_layer_params(p, compute_dtype):
    """Fuse QKV weights/biases, fold the 1/sqrt(d_model) score scale into
    wq/bq (reference divides scores by sqrt(d_model), NOT sqrt(d_k)), pack the
    small (1, D) vectors into one slab, cast matmul weights to compute_dtype."""
    d_model = p["wq"].shape[0]
    inv = 1.0 / math.sqrt(d_model)
    wqkv = jnp.concatenate([p["wq"] * inv, p["wk"], p["wv"]], axis=1)      # (D, 3D)
    bqkv = jnp.concatenate([p["bq"] * inv, p["bk"], p["bv"]], axis=1)      # (1, 3D)
    vec = jnp.concatenate(
        [p["bo"], p["g1"], p["beta1"], p["b2"], p["g2"], p["beta2"]], axis=0)  # (6, D)
    return {
        "wqkv": wqkv.astype(compute_dtype),
        "bqkv": bqkv.astype(jnp.float32),
        "wo":   p["wo"].astype(compute_dtype),
        "w1":   p["w1"].astype(compute_dtype),
        "b1":   p["b1"].astype(jnp.float32),
        "w2":   p["w2"].astype(compute_dtype),
        "vec":  vec.astype(jnp.float32),
    }


def encoder_stack(x, pk, *, num_heads, n_layers, block_batch=None, kv_tile=None,
                  approx_softmax=False):
    B, S, D = x.shape
    d_ff = pk["w1"].shape[1]
    assert D % num_heads == 0
    bB = _pick_block_batch(B, S, block_batch)
    kv = _pick_kv_tile(S, kv_tile)

    kernel = functools.partial(encoder_stack_kernel,
                               num_heads=num_heads, n_layers=n_layers,
                               kv_tile=kv, approx_softmax=approx_softmax)

    in_specs = [
        pl.BlockSpec((bB, S, D), lambda b: (b, 0, 0)),   # activations (double-buffered)
        _const_spec((D, 3 * D)),                         # wqkv (fused, single-buffered)
        _const_spec((1, 3 * D)),                         # bqkv
        _const_spec((D, D)),                             # wo
        _const_spec((D, d_ff)),                          # w1
        _const_spec((1, d_ff)),                          # b1
        _const_spec((d_ff, D)),                          # w2
        _const_spec((6, D)),                             # packed bo/g1/beta1/b2/g2/beta2
    ]

    return pl.pallas_call(
        kernel,
        out_shape=jax.ShapeDtypeStruct((B, S, D), jnp.float32),
        grid_spec=pltpu.PrefetchScalarGridSpec(
            num_scalar_prefetch=0,
            grid=(B // bB,),
            in_specs=in_specs,
            out_specs=pl.BlockSpec((bB, S, D), lambda b: (b, 0, 0)),
        ),
        compiler_params=pltpu.CompilerParams(
            dimension_semantics=("parallel",),
            vmem_limit_bytes=_vmem_limit_bytes(),
        ),
    )(x, pk["wqkv"], pk["bqkv"], pk["wo"], pk["w1"], pk["b1"], pk["w2"], pk["vec"])


def encoder(x, layer_params_list, *, num_heads, compute_dtype=jnp.bfloat16,
            block_batch=None, kv_tile=None):
    """Full Encoder.  The PyTorch Encoder deep-copies one EncoderLayer, so all
    layers share identical weights; in that case the whole n_x-layer stack runs
    inside ONE pallas_call (no per-layer HBM round trips)."""
    approx = jnp.dtype(compute_dtype) != jnp.dtype(jnp.float32)
    first = layer_params_list[0]
    if all(p is first for p in layer_params_list):
        pk = pack_layer_params(first, compute_dtype)
        return encoder_stack(x, pk, num_heads=num_heads,
                             n_layers=len(layer_params_list),
                             block_batch=block_batch, kv_tile=kv_tile,
                             approx_softmax=approx)
    # TODO(synk): if layers ever carry distinct weights, pass stacked (n_x, ...)
    # weights and index them per fori_loop iteration instead of per-layer calls.
    out = x
    for p in layer_params_list:
        pk = pack_layer_params(p, compute_dtype)
        out = encoder_stack(out, pk, num_heads=num_heads, n_layers=1,
                            block_batch=block_batch, kv_tile=kv_tile,
                            approx_softmax=approx)
    return out


# --------------------------------------------------------------------------- #
# Parameters & pure-JAX reference
# --------------------------------------------------------------------------- #
def make_params(key, d_model, d_ff):
    ks = jax.random.split(key, 12)
    n = lambda k, shape, s=0.05: jax.random.normal(k, shape, jnp.float32) * s
    return {
        # stored pre-transposed: (in, out) so kernels do x @ W + b
        "wq": n(ks[0], (d_model, d_model)), "bq": n(ks[1], (1, d_model)),
        "wk": n(ks[2], (d_model, d_model)), "bk": n(ks[3], (1, d_model)),
        "wv": n(ks[4], (d_model, d_model)), "bv": n(ks[5], (1, d_model)),
        "wo": n(ks[6], (d_model, d_model)), "bo": n(ks[7], (1, d_model)),
        "g1": jnp.ones((1, d_model), jnp.float32),
        "beta1": jnp.zeros((1, d_model), jnp.float32),
        "w1": n(ks[8], (d_model, d_ff)), "b1": n(ks[9], (1, d_ff)),
        "w2": n(ks[10], (d_ff, d_model)), "b2": n(ks[11], (1, d_model)),
        "g2": jnp.ones((1, d_model), jnp.float32),
        "beta2": jnp.zeros((1, d_model), jnp.float32),
    }


def reference_encoder_layer(x, p, *, num_heads):
    B, S, D = x.shape
    d_k = D // num_heads

    def ln(y, g, b):
        mu = jnp.mean(y, axis=-1, keepdims=True)
        var = jnp.mean((y - mu) ** 2, axis=-1, keepdims=True)
        return (y - mu) / jnp.sqrt(var + 1e-5) * g[0] + b[0]

    q = x @ p["wq"] + p["bq"][0]
    k = x @ p["wk"] + p["bk"][0]
    v = x @ p["wv"] + p["bv"][0]
    qh = q.reshape(B, S, num_heads, d_k).transpose(0, 2, 1, 3)
    kh = k.reshape(B, S, num_heads, d_k).transpose(0, 2, 1, 3)
    vh = v.reshape(B, S, num_heads, d_k).transpose(0, 2, 1, 3)
    s = jnp.einsum("bhqd,bhkd->bhqk", qh, kh) / math.sqrt(D)   # NOTE: sqrt(d_model)
    a = jax.nn.softmax(s, axis=-1)
    o = jnp.einsum("bhqk,bhkd->bhqd", a, vh)
    concat = o.transpose(0, 2, 1, 3).reshape(B, S, D)
    mha = concat @ p["wo"] + p["bo"][0]

    add1 = ln(x + mha, p["g1"], p["beta1"])
    h1 = jnp.maximum(add1 @ p["w1"] + p["b1"][0], 0.0)
    ffn = h1 @ p["w2"] + p["b2"][0]
    return ln(add1 + ffn, p["g2"], p["beta2"])


def reference_encoder(x, layer_params_list, *, num_heads):
    for p in layer_params_list:
        x = reference_encoder_layer(x, p, num_heads=num_heads)
    return x


# --------------------------------------------------------------------------- #
# Demo / self-test
# --------------------------------------------------------------------------- #
if __name__ == "__main__":
    # Small, lane-dense demo shapes: d_model and d_ff are multiples of 128 and
    # H is chosen so d_k = D / H = 128 (full-lane head slices / merges).
    B, S, D, H, D_FF, N_X = 2, 16, 256, 2, 512, 2

    key = jax.random.PRNGKey(0)
    kx, kp = jax.random.split(key)
    x = jax.random.normal(kx, (B, S, D), jnp.float32)

    # Encoder deep-copies one EncoderLayer -> identical params for all n_x layers
    layer_params = make_params(kp, D, D_FF)
    all_params = [layer_params] * N_X

    ref = reference_encoder(x, all_params, num_heads=H)

    # 1) f32 path: tight correctness check.  kv_tile=8 exercises the multi-tile
    #    flash-softmax update (2 KV tiles at S=16) and block_batch defaults to 1
    #    (grid of 2 parallel steps).
    out_f32 = jax.block_until_ready(
        encoder(x, all_params, num_heads=H, compute_dtype=jnp.float32, kv_tile=8))
    assert out_f32.shape == (B, S, D)
    assert jnp.allclose(out_f32, ref, atol=1e-4, rtol=1e-4), "f32 mismatch vs reference"

    # 2) bf16 matmul-operand path (all generations, incl. v5e): f32 accumulation,
    #    f32 softmax/layernorm; also exercises block_batch=2 (whole batch per
    #    grid step).  Loose tolerance for bf16 operand rounding; the f32 path
    #    above is the tight correctness gate.
    out_bf16 = jax.block_until_ready(
        encoder(x, all_params, num_heads=H, compute_dtype=jnp.bfloat16, block_batch=2))
    assert out_bf16.shape == (B, S, D)
    assert jnp.allclose(out_bf16, ref, atol=1e-1, rtol=1e-1), "bf16 mismatch vs reference"

    print("KERNEL_OK")
</pallas_src>

<mosaic_0001>
module attributes {stable_mosaic.version = 11 : i64} {
  func.func @encoder_stack_kernel(%arg0: i32, %arg1: memref<1x16x256xf32, #tpu.memory_space<vmem>>, %arg2: memref<256x768xf32, #tpu.memory_space<vmem>>, %arg3: memref<1x768xf32, #tpu.memory_space<vmem>>, %arg4: memref<256x256xf32, #tpu.memory_space<vmem>>, %arg5: memref<256x512xf32, #tpu.memory_space<vmem>>, %arg6: memref<1x512xf32, #tpu.memory_space<vmem>>, %arg7: memref<512x256xf32, #tpu.memory_space<vmem>>, %arg8: memref<6x256xf32, #tpu.memory_space<vmem>>, %arg9: memref<1x16x256xf32, #tpu.memory_space<vmem>>) attributes {dimension_semantics = [#tpu.dimension_semantics<parallel>], iteration_bounds = array<i64: 2>, scalar_prefetch = 0 : i64, scratch_operands = 0 : i64, tpu.core_type = #tpu.core_type<tc>, window_params = [{transform_indices = @transform_0, window_bounds = array<i64: 1, 16, 256>}, {pipeline_mode = #tpu.pipeline_mode<synchronous>, transform_indices = @transform_1, window_bounds = array<i64: 256, 768>}, {pipeline_mode = #tpu.pipeline_mode<synchronous>, transform_indices = @transform_2, window_bounds = array<i64: 1, 768>}, {pipeline_mode = #tpu.pipeline_mode<synchronous>, transform_indices = @transform_3, window_bounds = array<i64: 256, 256>}, {pipeline_mode = #tpu.pipeline_mode<synchronous>, transform_indices = @transform_4, window_bounds = array<i64: 256, 512>}, {pipeline_mode = #tpu.pipeline_mode<synchronous>, transform_indices = @transform_5, window_bounds = array<i64: 1, 512>}, {pipeline_mode = #tpu.pipeline_mode<synchronous>, transform_indices = @transform_6, window_bounds = array<i64: 512, 256>}, {pipeline_mode = #tpu.pipeline_mode<synchronous>, transform_indices = @transform_7, window_bounds = array<i64: 6, 256>}, {transform_indices = @transform_8, window_bounds = array<i64: 1, 16, 256>}]} {
    %c0 = arith.constant 0 : index
    %c0_0 = arith.constant 0 : index
    %0 = vector.load %arg8[%c0, %c0_0] : memref<6x256xf32, #tpu.memory_space<vmem>>, vector<1x256xf32>
    %1 = vector.shape_cast %0 : vector<1x256xf32> to vector<256xf32>
    %c1 = arith.constant 1 : index
    %c0_1 = arith.constant 0 : index
    %2 = vector.load %arg8[%c1, %c0_1] : memref<6x256xf32, #tpu.memory_space<vmem>>, vector<1x256xf32>
    %3 = vector.shape_cast %2 : vector<1x256xf32> to vector<256xf32>
    %c2 = arith.constant 2 : index
    %c0_2 = arith.constant 0 : index
    %4 = vector.load %arg8[%c2, %c0_2] : memref<6x256xf32, #tpu.memory_space<vmem>>, vector<1x256xf32>
    %5 = vector.shape_cast %4 : vector<1x256xf32> to vector<256xf32>
    %c3 = arith.constant 3 : index
    %c0_3 = arith.constant 0 : index
    %6 = vector.load %arg8[%c3, %c0_3] : memref<6x256xf32, #tpu.memory_space<vmem>>, vector<1x256xf32>
    %7 = vector.shape_cast %6 : vector<1x256xf32> to vector<256xf32>
    %c4 = arith.constant 4 : index
    %c0_4 = arith.constant 0 : index
    %8 = vector.load %arg8[%c4, %c0_4] : memref<6x256xf32, #tpu.memory_space<vmem>>, vector<1x256xf32>
    %9 = vector.shape_cast %8 : vector<1x256xf32> to vector<256xf32>
    %c5 = arith.constant 5 : index
    %c0_5 = arith.constant 0 : index
    %10 = vector.load %arg8[%c5, %c0_5] : memref<6x256xf32, #tpu.memory_space<vmem>>, vector<1x256xf32>
    %11 = vector.shape_cast %10 : vector<1x256xf32> to vector<256xf32>
    %c0_6 = arith.constant 0 : index
    %c0_7 = arith.constant 0 : index
    %c0_8 = arith.constant 0 : index
    %12 = vector.load %arg1[%c0_6, %c0_7, %c0_8] : memref<1x16x256xf32, #tpu.memory_space<vmem>>, vector<1x16x256xf32>
    %13 = vector.shape_cast %12 : vector<1x16x256xf32> to vector<16x256xf32>
    %c0_i32 = arith.constant 0 : i32
    %c2_i32 = arith.constant 2 : i32
    %14 = arith.addi %c0_i32, %c2_i32 : i32
    %c1_i32 = arith.constant 1 : i32
    %15 = scf.for %arg10 = %c0_i32 to %14 step %c1_i32 iter_args(%arg11 = %13) -> (vector<16x256xf32>)  : i32 {
      %c0_12 = arith.constant 0 : index
      %c0_13 = arith.constant 0 : index
      %18 = vector.load %arg2[%c0_12, %c0_13] : memref<256x768xf32, #tpu.memory_space<vmem>>, vector<256x768xf32>
      %cst = arith.constant dense<0.000000e+00> : vector<16x768xf32>
      %19 = tpu.matmul %arg11, %18, %cst {dimension_numbers = #tpu.dot_dimension_numbers<[1], [0], [0], [1], [0, 0, 1, 1], [], []>} : vector<16x256xf32>, vector<256x768xf32>, vector<16x768xf32> -> vector<16x768xf32>
      %c0_14 = arith.constant 0 : index
      %c0_15 = arith.constant 0 : index
      %20 = vector.load %arg3[%c0_14, %c0_15] : memref<1x768xf32, #tpu.memory_space<vmem>>, vector<1x768xf32>
      %21 = vector.shape_cast %20 : vector<1x768xf32> to vector<768xf32>
      %22 = vector.shape_cast %21 : vector<768xf32> to vector<1x768xf32>
      %23 = vector.broadcast %22 : vector<1x768xf32> to vector<16x768xf32>
      %24 = arith.addf %19, %23 : vector<16x768xf32>
      %25 = vector.extract_strided_slice %24 {offsets = [0, 0], sizes = [16, 256], strides = [1, 1]} : vector<16x768xf32> to vector<16x256xf32>
      %26 = vector.shape_cast %25 : vector<16x256xf32> to vector<1x16x256xf32>
      %27 = vector.extract_strided_slice %26 {offsets = [0, 0, 0], sizes = [1, 16, 128], strides = [1, 1, 1]} : vector<1x16x256xf32> to vector<1x16x128xf32>
      %28 = vector.extract_strided_slice %26 {offsets = [0, 0, 128], sizes = [1, 16, 128], strides = [1, 1, 1]} : vector<1x16x256xf32> to vector<1x16x128xf32>
      %29 = vector.shape_cast %27 : vector<1x16x128xf32> to vector<1x1x16x128xf32>
      %30 = vector.shape_cast %28 : vector<1x16x128xf32> to vector<1x1x16x128xf32>
      %31 = tpu.concatenate %29, %30 in 1 : vector<1x1x16x128xf32>, vector<1x1x16x128xf32> -> vector<1x2x16x128xf32>
      %32 = vector.shape_cast %31 : vector<1x2x16x128xf32> to vector<2x16x128xf32>
      %33 = vector.extract_strided_slice %24 {offsets = [0, 256], sizes = [16, 256], strides = [1, 1]} : vector<16x768xf32> to vector<16x256xf32>
      %34 = vector.shape_cast %33 : vector<16x256xf32> to vector<1x16x256xf32>
      %35 = vector.extract_strided_slice %34 {offsets = [0, 0, 0], sizes = [1, 16, 128], strides = [1, 1, 1]} : vector<1x16x256xf32> to vector<1x16x128xf32>
      %36 = vector.extract_strided_slice %34 {offsets = [0, 0, 128], sizes = [1, 16, 128], strides = [1, 1, 1]} : vector<1x16x256xf32> to vector<1x16x128xf32>
      %37 = vector.shape_cast %35 : vector<1x16x128xf32> to vector<1x1x16x128xf32>
      %38 = vector.shape_cast %36 : vector<1x16x128xf32> to vector<1x1x16x128xf32>
      %39 = tpu.concatenate %37, %38 in 1 : vector<1x1x16x128xf32>, vector<1x1x16x128xf32> -> vector<1x2x16x128xf32>
      %40 = vector.shape_cast %39 : vector<1x2x16x128xf32> to vector<2x16x128xf32>
      %41 = vector.extract_strided_slice %24 {offsets = [0, 512], sizes = [16, 256], strides = [1, 1]} : vector<16x768xf32> to vector<16x256xf32>
      %42 = vector.shape_cast %41 : vector<16x256xf32> to vector<1x16x256xf32>
      %43 = vector.extract_strided_slice %42 {offsets = [0, 0, 0], sizes = [1, 16, 128], strides = [1, 1, 1]} : vector<1x16x256xf32> to vector<1x16x128xf32>
      %44 = vector.extract_strided_slice %42 {offsets = [0, 0, 128], sizes = [1, 16, 128], strides = [1, 1, 1]} : vector<1x16x256xf32> to vector<1x16x128xf32>
      %45 = vector.shape_cast %43 : vector<1x16x128xf32> to vector<1x1x16x128xf32>
      %46 = vector.shape_cast %44 : vector<1x16x128xf32> to vector<1x1x16x128xf32>
      %47 = tpu.concatenate %45, %46 in 1 : vector<1x1x16x128xf32>, vector<1x1x16x128xf32> -> vector<1x2x16x128xf32>
      %48 = vector.shape_cast %47 : vector<1x2x16x128xf32> to vector<2x16x128xf32>
      %49 = vector.extract_strided_slice %40 {offsets = [0, 0, 0], sizes = [2, 8, 128], strides = [1, 1, 1]} : vector<2x16x128xf32> to vector<2x8x128xf32>
      %50 = vector.extract_strided_slice %48 {offsets = [0, 0, 0], sizes = [2, 8, 128], strides = [1, 1, 1]} : vector<2x16x128xf32> to vector<2x8x128xf32>
      "tpu.trace_start"() <{level = 10 : i32, message = "nqd,nkd->nqk"}> : () -> ()
      %cst_16 = arith.constant dense<0.000000e+00> : vector<2x16x8xf32>
      %51 = tpu.matmul %32, %49, %cst_16 {dimension_numbers = #tpu.dot_dimension_numbers<[2], [2], [1], [1], [0, 0, 0, 1, 1, 1], [0], [0]>} : vector<2x16x128xf32>, vector<2x8x128xf32>, vector<2x16x8xf32> -> vector<2x16x8xf32>
      "tpu.trace_stop"() : () -> ()
      %cst_17 = arith.constant dense<0xFF800000> : vector<2x16xf32>
      %52 = vector.multi_reduction <maximumf>, %51, %cst_17 [2] : vector<2x16x8xf32> to vector<2x16xf32>
      %53 = vector.shape_cast %52 : vector<2x16xf32> to vector<2x16x1xf32>
      %54 = vector.broadcast %53 : vector<2x16x1xf32> to vector<2x16x8xf32>
      %55 = arith.subf %51, %54 : vector<2x16x8xf32>
      %56 = math.exp %55 : vector<2x16x8xf32>
      %cst_18 = arith.constant dense<0.000000e+00> : vector<2x16xf32>
      %57 = vector.multi_reduction <add>, %56, %cst_18 [2] : vector<2x16x8xf32> to vector<2x16xf32>
      %58 = vector.shape_cast %57 : vector<2x16xf32> to vector<2x16x1xf32>
      "tpu.trace_start"() <{level = 10 : i32, message = "nqk,nkd->nqd"}> : () -> ()
      %cst_19 = arith.constant dense<0.000000e+00> : vector<2x16x128xf32>
      %59 = tpu.matmul %56, %50, %cst_19 {dimension_numbers = #tpu.dot_dimension_numbers<[2], [1], [1], [2], [0, 0, 0, 1, 1, 2], [0], [0]>} : vector<2x16x8xf32>, vector<2x8x128xf32>, vector<2x16x128xf32> -> vector<2x16x128xf32>
      "tpu.trace_stop"() : () -> ()
      %60 = vector.extract_strided_slice %40 {offsets = [0, 8, 0], sizes = [2, 8, 128], strides = [1, 1, 1]} : vector<2x16x128xf32> to vector<2x8x128xf32>
      %61 = vector.extract_strided_slice %48 {offsets = [0, 8, 0], sizes = [2, 8, 128], strides = [1, 1, 1]} : vector<2x16x128xf32> to vector<2x8x128xf32>
      "tpu.trace_start"() <{level = 10 : i32, message = "nqd,nkd->nqk"}> : () -> ()
      %cst_20 = arith.constant dense<0.000000e+00> : vector<2x16x8xf32>
      %62 = tpu.matmul %32, %60, %cst_20 {dimension_numbers = #tpu.dot_dimension_numbers<[2], [2], [1], [1], [0, 0, 0, 1, 1, 1], [0], [0]>} : vector<2x16x128xf32>, vector<2x8x128xf32>, vector<2x16x8xf32> -> vector<2x16x8xf32>
      "tpu.trace_stop"() : () -> ()
      %cst_21 = arith.constant dense<0xFF800000> : vector<2x16xf32>
      %63 = vector.multi_reduction <maximumf>, %62, %cst_21 [2] : vector<2x16x8xf32> to vector<2x16xf32>
      %64 = vector.shape_cast %63 : vector<2x16xf32> to vector<2x16x1xf32>
      %65 = arith.maximumf %53, %64 : vector<2x16x1xf32>
      %66 = arith.subf %53, %65 : vector<2x16x1xf32>
      %67 = math.exp %66 : vector<2x16x1xf32>
      %68 = vector.broadcast %65 : vector<2x16x1xf32> to vector<2x16x8xf32>
      %69 = arith.subf %62, %68 : vector<2x16x8xf32>
      %70 = math.exp %69 : vector<2x16x8xf32>
      %71 = arith.mulf %67, %58 : vector<2x16x1xf32>
      %cst_22 = arith.constant dense<0.000000e+00> : vector<2x16xf32>
      %72 = vector.multi_reduction <add>, %70, %cst_22 [2] : vector<2x16x8xf32> to vector<2x16xf32>
      %73 = vector.shape_cast %72 : vector<2x16xf32> to vector<2x16x1xf32>
      %74 = arith.addf %71, %73 : vector<2x16x1xf32>
      %75 = vector.broadcast %67 : vector<2x16x1xf32> to vector<2x16x128xf32>
      %76 = arith.mulf %75, %59 : vector<2x16x128xf32>
      "tpu.trace_start"() <{level = 10 : i32, message = "nqk,nkd->nqd"}> : () -> ()
      %cst_23 = arith.constant dense<0.000000e+00> : vector<2x16x128xf32>
      %77 = tpu.matmul %70, %61, %cst_23 {dimension_numbers = #tpu.dot_dimension_numbers<[2], [1], [1], [2], [0, 0, 0, 1, 1, 2], [0], [0]>} : vector<2x16x8xf32>, vector<2x8x128xf32>, vector<2x16x128xf32> -> vector<2x16x128xf32>
      "tpu.trace_stop"() : () -> ()
      %78 = arith.addf %76, %77 : vector<2x16x128xf32>
      %79 = tpu.reciprocal %74 : vector<2x16x1xf32> -> vector<2x16x1xf32>
      %80 = vector.broadcast %79 : vector<2x16x1xf32> to vector<2x16x128xf32>
      %81 = arith.mulf %78, %80 : vector<2x16x128xf32>
      %82 = vector.shape_cast %81 : vector<2x16x128xf32> to vector<1x2x16x128xf32>
      %83 = vector.extract_strided_slice %82 {offsets = [0, 0, 0, 0], sizes = [1, 1, 16, 128], strides = [1, 1, 1, 1]} : vector<1x2x16x128xf32> to vector<1x1x16x128xf32>
      %84 = vector.shape_cast %83 : vector<1x1x16x128xf32> to vector<1x16x128xf32>
      %85 = vector.extract_strided_slice %82 {offsets = [0, 1, 0, 0], sizes = [1, 1, 16, 128], strides = [1, 1, 1, 1]} : vector<1x2x16x128xf32> to vector<1x1x16x128xf32>
      %86 = vector.shape_cast %85 : vector<1x1x16x128xf32> to vector<1x16x128xf32>
      %87 = tpu.concatenate %84, %86 in 2 : vector<1x16x128xf32>, vector<1x16x128xf32> -> vector<1x16x256xf32>
      %88 = vector.shape_cast %87 : vector<1x16x256xf32> to vector<16x256xf32>
      %c0_24 = arith.constant 0 : index
      %c0_25 = arith.constant 0 : index
      %89 = vector.load %arg4[%c0_24, %c0_25] : memref<256x256xf32, #tpu.memory_space<vmem>>, vector<256x256xf32>
      %cst_26 = arith.constant dense<0.000000e+00> : vector<16x256xf32>
      %90 = tpu.matmul %88, %89, %cst_26 {dimension_numbers = #tpu.dot_dimension_numbers<[1], [0], [0], [1], [0, 0, 1, 1], [], []>} : vector<16x256xf32>, vector<256x256xf32>, vector<16x256xf32> -> vector<16x256xf32>
      %91 = vector.shape_cast %1 : vector<256xf32> to vector<1x256xf32>
      %92 = vector.broadcast %91 : vector<1x256xf32> to vector<16x256xf32>
      %93 = arith.addf %90, %92 : vector<16x256xf32>
      %94 = arith.addf %arg11, %93 : vector<16x256xf32>
      %cst_27 = arith.constant dense<0.000000e+00> : vector<16xf32>
      %95 = vector.multi_reduction <add>, %94, %cst_27 [1] : vector<16x256xf32> to vector<16xf32>
      %96 = vector.shape_cast %95 : vector<16xf32> to vector<16x1xf32>
      %cst_28 = arith.constant 2.560000e+02 : f32
      %97 = vector.broadcast %cst_28 : f32 to vector<16x1xf32>
      %98 = arith.divf %96, %97 : vector<16x1xf32>
      %99 = vector.broadcast %98 : vector<16x1xf32> to vector<16x256xf32>
      %100 = arith.subf %94, %99 : vector<16x256xf32>
      %101 = arith.mulf %100, %100 : vector<16x256xf32>
      %cst_29 = arith.constant dense<0.000000e+00> : vector<16xf32>
      %102 = vector.multi_reduction <add>, %101, %cst_29 [1] : vector<16x256xf32> to vector<16xf32>
      %103 = vector.shape_cast %102 : vector<16xf32> to vector<16x1xf32>
      %cst_30 = arith.constant 2.560000e+02 : f32
      %104 = vector.broadcast %cst_30 : f32 to vector<16x1xf32>
      %105 = arith.divf %103, %104 : vector<16x1xf32>
      %106 = vector.broadcast %98 : vector<16x1xf32> to vector<16x256xf32>
      %107 = arith.subf %94, %106 : vector<16x256xf32>
      %cst_31 = arith.constant 9.99999974E-6 : f32
      %108 = vector.broadcast %cst_31 : f32 to vector<16x1xf32>
      %109 = arith.addf %105, %108 : vector<16x1xf32>
      %110 = math.rsqrt %109 : vector<16x1xf32>
      %111 = vector.broadcast %110 : vector<16x1xf32> to vector<16x256xf32>
      %112 = arith.mulf %107, %111 : vector<16x256xf32>
      %113 = vector.shape_cast %3 : vector<256xf32> to vector<1x256xf32>
      %114 = vector.broadcast %113 : vector<1x256xf32> to vector<16x256xf32>
      %115 = arith.mulf %112, %114 : vector<16x256xf32>
      %116 = vector.shape_cast %5 : vector<256xf32> to vector<1x256xf32>
      %117 = vector.broadcast %116 : vector<1x256xf32> to vector<16x256xf32>
      %118 = arith.addf %115, %117 : vector<16x256xf32>
      %c0_32 = arith.constant 0 : index
      %c0_33 = arith.constant 0 : index
      %119 = vector.load %arg5[%c0_32, %c0_33] : memref<256x512xf32, #tpu.memory_space<vmem>>, vector<256x512xf32>
      %cst_34 = arith.constant dense<0.000000e+00> : vector<16x512xf32>
      %120 = tpu.matmul %118, %119, %cst_34 {dimension_numbers = #tpu.dot_dimension_numbers<[1], [0], [0], [1], [0, 0, 1, 1], [], []>} : vector<16x256xf32>, vector<256x512xf32>, vector<16x512xf32> -> vector<16x512xf32>
      %c0_35 = arith.constant 0 : index
      %c0_36 = arith.constant 0 : index
      %121 = vector.load %arg6[%c0_35, %c0_36] : memref<1x512xf32, #tpu.memory_space<vmem>>, vector<1x512xf32>
      %122 = vector.shape_cast %121 : vector<1x512xf32> to vector<512xf32>
      %123 = vector.shape_cast %122 : vector<512xf32> to vector<1x512xf32>
      %124 = vector.broadcast %123 : vector<1x512xf32> to vector<16x512xf32>
      %125 = arith.addf %120, %124 : vector<16x512xf32>
      %cst_37 = arith.constant 0.000000e+00 : f32
      %126 = vector.broadcast %cst_37 : f32 to vector<16x512xf32>
      %127 = arith.maximumf %125, %126 : vector<16x512xf32>
      %c0_38 = arith.constant 0 : index
      %c0_39 = arith.constant 0 : index
      %128 = vector.load %arg7[%c0_38, %c0_39] : memref<512x256xf32, #tpu.memory_space<vmem>>, vector<512x256xf32>
      %cst_40 = arith.constant dense<0.000000e+00> : vector<16x256xf32>
      %129 = tpu.matmul %127, %128, %cst_40 {dimension_numbers = #tpu.dot_dimension_numbers<[1], [0], [0], [1], [0, 0, 1, 1], [], []>} : vector<16x512xf32>, vector<512x256xf32>, vector<16x256xf32> -> vector<16x256xf32>
      %130 = vector.shape_cast %7 : vector<256xf32> to vector<1x256xf32>
      %131 = vector.broadcast %130 : vector<1x256xf32> to vector<16x256xf32>
      %132 = arith.addf %129, %131 : vector<16x256xf32>
      %133 = arith.addf %118, %132 : vector<16x256xf32>
      %cst_41 = arith.constant dense<0.000000e+00> : vector<16xf32>
      %134 = vector.multi_reduction <add>, %133, %cst_41 [1] : vector<16x256xf32> to vector<16xf32>
      %135 = vector.shape_cast %134 : vector<16xf32> to vector<16x1xf32>
      %cst_42 = arith.constant 2.560000e+02 : f32
      %136 = vector.broadcast %cst_42 : f32 to vector<16x1xf32>
      %137 = arith.divf %135, %136 : vector<16x1xf32>
      %138 = vector.broadcast %137 : vector<16x1xf32> to vector<16x256xf32>
      %139 = arith.subf %133, %138 : vector<16x256xf32>
      %140 = arith.mulf %139, %139 : vector<16x256xf32>
      %cst_43 = arith.constant dense<0.000000e+00> : vector<16xf32>
      %141 = vector.multi_reduction <add>, %140, %cst_43 [1] : vector<16x256xf32> to vector<16xf32>
      %142 = vector.shape_cast %141 : vector<16xf32> to vector<16x1xf32>
      %cst_44 = arith.constant 2.560000e+02 : f32
      %143 = vector.broadcast %cst_44 : f32 to vector<16x1xf32>
      %144 = arith.divf %142, %143 : vector<16x1xf32>
      %145 = vector.broadcast %137 : vector<16x1xf32> to vector<16x256xf32>
      %146 = arith.subf %133, %145 : vector<16x256xf32>
      %cst_45 = arith.constant 9.99999974E-6 : f32
      %147 = vector.broadcast %cst_45 : f32 to vector<16x1xf32>
      %148 = arith.addf %144, %147 : vector<16x1xf32>
      %149 = math.rsqrt %148 : vector<16x1xf32>
      %150 = vector.broadcast %149 : vector<16x1xf32> to vector<16x256xf32>
      %151 = arith.mulf %146, %150 : vector<16x256xf32>
      %152 = vector.shape_cast %9 : vector<256xf32> to vector<1x256xf32>
      %153 = vector.broadcast %152 : vector<1x256xf32> to vector<16x256xf32>
      %154 = arith.mulf %151, %153 : vector<16x256xf32>
      %155 = vector.shape_cast %11 : vector<256xf32> to vector<1x256xf32>
      %156 = vector.broadcast %155 : vector<1x256xf32> to vector<16x256xf32>
      %157 = arith.addf %154, %156 : vector<16x256xf32>
      scf.yield %157 : vector<16x256xf32>
    }
    %16 = vector.shape_cast %15 : vector<16x256xf32> to vector<1x16x256xf32>
    %c0_9 = arith.constant 0 : index
    %c0_10 = arith.constant 0 : index
    %c0_11 = arith.constant 0 : index
    %17 = vector.load %arg9[%c0_9, %c0_10, %c0_11] : memref<1x16x256xf32, #tpu.memory_space<vmem>>, vector<1x16x256xf32>
    tpu.vector_store %arg9[%c0_9, %c0_10, %c0_11], %16 {strides = array<i32>} : memref<1x16x256xf32, #tpu.memory_space<vmem>>, vector<1x16x256xf32>,
    return
  }
  func.func @transform_0(%arg0: i32) -> (i32, i32, i32) {
    %c0_i32 = arith.constant 0 : i32
    %c0_i32_0 = arith.constant 0 : i32
    %c0_i32_1 = arith.constant 0 : i32
    return %arg0, %c0_i32, %c0_i32_0 : i32, i32, i32
  }
  func.func @transform_1(%arg0: i32) -> (i32, i32) {
    %c0_i32 = arith.constant 0 : i32
    %c0_i32_0 = arith.constant 0 : i32
    %c0_i32_1 = arith.constant 0 : i32
    return %c0_i32, %c0_i32_0 : i32, i32
  }
  func.func @transform_2(%arg0: i32) -> (i32, i32) {
    %c0_i32 = arith.constant 0 : i32
    %c0_i32_0 = arith.constant 0 : i32
    %c0_i32_1 = arith.constant 0 : i32
    return %c0_i32, %c0_i32_0 : i32, i32
  }
  func.func @transform_3(%arg0: i32) -> (i32, i32) {
    %c0_i32 = arith.constant 0 : i32
    %c0_i32_0 = arith.constant 0 : i32
    %c0_i32_1 = arith.constant 0 : i32
    return %c0_i32, %c0_i32_0 : i32, i32
  }
  func.func @transform_4(%arg0: i32) -> (i32, i32) {
    %c0_i32 = arith.constant 0 : i32
    %c0_i32_0 = arith.constant 0 : i32
    %c0_i32_1 = arith.constant 0 : i32
    return %c0_i32, %c0_i32_0 : i32, i32
  }
  func.func @transform_5(%arg0: i32) -> (i32, i32) {
    %c0_i32 = arith.constant 0 : i32
    %c0_i32_0 = arith.constant 0 : i32
    %c0_i32_1 = arith.constant 0 : i32
    return %c0_i32, %c0_i32_0 : i32, i32
  }
  func.func @transform_6(%arg0: i32) -> (i32, i32) {
    %c0_i32 = arith.constant 0 : i32
    %c0_i32_0 = arith.constant 0 : i32
    %c0_i32_1 = arith.constant 0 : i32
    return %c0_i32, %c0_i32_0 : i32, i32
  }
  func.func @transform_7(%arg0: i32) -> (i32, i32) {
    %c0_i32 = arith.constant 0 : i32
    %c0_i32_0 = arith.constant 0 : i32
    %c0_i32_1 = arith.constant 0 : i32
    return %c0_i32, %c0_i32_0 : i32, i32
  }
  func.func @transform_8(%arg0: i32) -> (i32, i32, i32) {
    %c0_i32 = arith.constant 0 : i32
    %c0_i32_0 = arith.constant 0 : i32
    %c0_i32_1 = arith.constant 0 : i32
    return %arg0, %c0_i32, %c0_i32_0 : i32, i32, i32
  }
}

</mosaic_0001>

<llo_original>
// kernel: tpu_custom_call.1
$region0: #{tpu_custom_call.1}
  #allocation0 [shape = 'u32[]', space=smem, size = 0x4, offset = 0x4, fixed_abs, tag = 'smem constant byte address 0x4 - core index']
  #allocation1 [shape = 'u32[144,128]{1,0:T(1,128)}', space=vmem, size = 0x12000, scoped, tag = 'internal scratch']
  %s0 = inlined_call_operand.hbm [shape: f32[2,16,256], index: 0, kind: input, shape index: {}]
  %s1 = inlined_call_operand.hbm [shape: f32[256,768], index: 1, kind: input, shape index: {}]
  %s2 = inlined_call_operand.vmem [shape: f32[1,768], index: 2, kind: input, shape index: {}]
  %s3 = inlined_call_operand.hbm [shape: f32[256,256], index: 3, kind: input, shape index: {}]
  %s4 = inlined_call_operand.hbm [shape: f32[256,512], index: 4, kind: input, shape index: {}]
  %s5 = inlined_call_operand.vmem [shape: f32[1,512], index: 5, kind: input, shape index: {}]
  %s6 = inlined_call_operand.hbm [shape: f32[512,256], index: 6, kind: input, shape index: {}]
  %s7 = inlined_call_operand.vmem [shape: f32[6,256], index: 7, kind: input, shape index: {}]
  %s8 = inlined_call_operand.hbm [shape: f32[2,16,256], index: 8, kind: output, shape index: {}]
  %s9 = sld [smem:[#allocation0]]
  $region92: #{tpu_custom_call.1} parent=0
    _
  %s11 = ssub.s32 1, %s9
  %s12 = scalar_select 0, %s11, %s9
  $region1: #{tpu_custom_call.1} parent=0
    #allocation2 [shape = 'u8[32768]{0}', space=vmem, size = 0x8000, scoped, tag = 'input window, operand 0']
    #allocation3 [shape = 's32[2]{0}', space=sflag, size = 0x8, scoped, tag = 'scoped memory for tpu_custom_call.1']
    #allocation4 [shape = 's32[2]{0}', space=sflag, size = 0x8, scoped, tag = 'scoped memory for tpu_custom_call.1']
    #allocation5 [shape = 'u8[786432]{0}', space=vmem, size = 0xc0000, scoped, tag = 'input window, operand 1, single buffered']
    #allocation6 [shape = 's32[1]{0}', space=sflag, size = 0x4, scoped, tag = 'scoped memory for tpu_custom_call.1']
    #allocation7 [shape = 'u8[262144]{0}', space=vmem, size = 0x40000, scoped, tag = 'input window, operand 3, single buffered']
    #allocation8 [shape = 'u8[524288]{0}', space=vmem, size = 0x80000, scoped, tag = 'input window, operand 4, single buffered']
    #allocation9 [shape = 's32[1]{0}', space=sflag, size = 0x4, scoped, tag = 'scoped memory for tpu_custom_call.1']
    #allocation10 [shape = 'u8[524288]{0}', space=vmem, size = 0x80000, scoped, tag = 'input window, operand 6, single buffered']
    #allocation11 [shape = 'u8[32768]{0}', space=vmem, size = 0x8000, scoped, tag = 'output window, operand 0']
    %13 = vsyncpa [#allocation3], 0
    %s14 = scalar_lea.sflag [#allocation3], 1
    %15 = vsyncpa %s14, 0
    %16 = vsyncpa [#allocation6], 0
    %17 = vsyncpa [#allocation9], 0
    %18 = vsyncpa [#allocation4], 0
    %s19 = scalar_lea.sflag [#allocation4], 1
    %20 = vsyncpa %s19, 0
    loop: start=0, step=1, limit=4
    $region2: #{tpu_custom_call.1} parent=1 // loop_pre_header
      _
    $region3: #{tpu_custom_call.1} parent=1 // loop_header
      %s22 = sphi 0, %s26
      %p23 = scmp.ge.s32.totalorder %s22, 4
      %s32 = sphi 0, %s34
      %s35 = sphi 0, %s32
      %s36 = sphi 0, %s35
      %s52 = sphi 0, %s36
      %s56 = sphi 0, %s56
      %s58 = sphi 0, %s56
      %s59 = sphi 0, %s58
      %s73 = sphi 0, %s59
      %s77 = sphi 0, %s77
      %s79 = sphi 0, %s77
      %s80 = sphi 0, %s79
      %s94 = sphi 0, %s80
      %s98 = sphi 0, %s98
      %s100 = sphi 0, %s98
      %s101 = sphi 0, %s100
      %s115 = sphi 0, %s101
      %s119 = sphi 0, %s119
      %s121 = sphi 0, %s119
      %s122 = sphi 0, %s121
      %s136 = sphi 0, %s122
      %s140 = sphi 0, %s140
      %s142 = sphi 0, %s140
      %s143 = sphi 0, %s142
      %s157 = sphi 0, %s143
      %s161 = sphi 0, %s161
      %s163 = sphi 0, %s161
      %s164 = sphi 0, %s163
      %s178 = sphi 0, %s164
      %s182 = sphi 0, %s182
      %s184 = sphi 0, %s182
      %s185 = sphi 0, %s184
      %s199 = sphi 0, %s185
      %s205 = sphi 0, %s207
      %s208 = sphi 0, %s205
      %s209 = sphi 0, %s208
      %s225 = sphi 0, %s209
    $region4: #{tpu_custom_call.1} parent=1 // loop_header_branch
      %25 = sbr.rel (%p23) target = $region8
    $region5: #{tpu_custom_call.1} parent=1 // loop_body
      %s27 = ssub.s32 %s22, 1
      %s28 = ssub.s32 %s22, 2
      %s29 = sadd.s32 %s22, 1
      %s30 = ssub.s32 %s22, %s29
      %p31 = scmp.eq.s32.totalorder %s30, 0
      %s33 = sadd.s32 %s32, 1
      %s34 = scalar_select %p31, %s32, %s33
      %p37 = pneg %p31
      %p38 = scmp.eq.s32.totalorder %s22, 1
      %p39 = por %p37, %p38
      %p40 = scmp.ne.s32.totalorder %s32, %s35
      %p41 = scmp.eq.s32.totalorder %s22, 0
      %p42 = por %p40, %p41
      %p43 = scmp.ne.s32.totalorder %s32, %s35
      %p44 = scmp.eq.s32.totalorder %s27, 1
      %p45 = por %p43, %p44
      %p46 = scmp.ne.s32.totalorder %s35, %s36
      %p47 = scmp.eq.s32.totalorder %s27, 0
      %p48 = por %p46, %p47
      %p49 = scmp.ne.s32.totalorder %s35, %s36
      %p50 = scmp.eq.s32.totalorder %s28, 1
      %p51 = por %p49, %p50
      %p53 = scmp.ne.s32.totalorder %s36, %s52
      %p54 = scmp.eq.s32.totalorder %s28, 0
      %p55 = por %p53, %p54
      %s57 = sadd.s32 %s56, 1
      %p60 = scmp.eq.s32.totalorder %s22, 1
      %p61 = scmp.ne.s32.totalorder %s56, %s58
      %p62 = scmp.eq.s32.totalorder %s22, 0
      %p63 = por %p61, %p62
      %p64 = scmp.ne.s32.totalorder %s56, %s58
      %p65 = scmp.eq.s32.totalorder %s27, 1
      %p66 = por %p64, %p65
      %p67 = scmp.ne.s32.totalorder %s58, %s59
      %p68 = scmp.eq.s32.totalorder %s27, 0
      %p69 = por %p67, %p68
      %p70 = scmp.ne.s32.totalorder %s58, %s59
      %p71 = scmp.eq.s32.totalorder %s28, 1
      %p72 = por %p70, %p71
      %p74 = scmp.ne.s32.totalorder %s59, %s73
      %p75 = scmp.eq.s32.totalorder %s28, 0
      %p76 = por %p74, %p75
      %s78 = sadd.s32 %s77, 1
      %p81 = scmp.eq.s32.totalorder %s22, 1
      %p82 = scmp.ne.s32.totalorder %s77, %s79
      %p83 = scmp.eq.s32.totalorder %s22, 0
      %p84 = por %p82, %p83
      %p85 = scmp.ne.s32.totalorder %s77, %s79
      %p86 = scmp.eq.s32.totalorder %s27, 1
      %p87 = por %p85, %p86
      %p88 = scmp.ne.s32.totalorder %s79, %s80
      %p89 = scmp.eq.s32.totalorder %s27, 0
      %p90 = por %p88, %p89
      %p91 = scmp.ne.s32.totalorder %s79, %s80
      %p92 = scmp.eq.s32.totalorder %s28, 1
      %p93 = por %p91, %p92
      %p95 = scmp.ne.s32.totalorder %s80, %s94
      %p96 = scmp.eq.s32.totalorder %s28, 0
      %p97 = por %p95, %p96
      %s99 = sadd.s32 %s98, 1
      %p102 = scmp.eq.s32.totalorder %s22, 1
      %p103 = scmp.ne.s32.totalorder %s98, %s100
      %p104 = scmp.eq.s32.totalorder %s22, 0
      %p105 = por %p103, %p104
      %p106 = scmp.ne.s32.totalorder %s98, %s100
      %p107 = scmp.eq.s32.totalorder %s27, 1
      %p108 = por %p106, %p107
      %p109 = scmp.ne.s32.totalorder %s100, %s101
      %p110 = scmp.eq.s32.totalorder %s27, 0
      %p111 = por %p109, %p110
      %p112 = scmp.ne.s32.totalorder %s100, %s101
      %p113 = scmp.eq.s32.totalorder %s28, 1
      %p114 = por %p112, %p113
      %p116 = scmp.ne.s32.totalorder %s101, %s115
      %p117 = scmp.eq.s32.totalorder %s28, 0
      %p118 = por %p116, %p117
      %s120 = sadd.s32 %s119, 1
      %p123 = scmp.eq.s32.totalorder %s22, 1
      %p124 = scmp.ne.s32.totalorder %s119, %s121
      %p125 = scmp.eq.s32.totalorder %s22, 0
      %p126 = por %p124, %p125
      %p127 = scmp.ne.s32.totalorder %s119, %s121
      %p128 = scmp.eq.s32.totalorder %s27, 1
      %p129 = por %p127, %p128
      %p130 = scmp.ne.s32.totalorder %s121, %s122
      %p131 = scmp.eq.s32.totalorder %s27, 0
      %p132 = por %p130, %p131
      %p133 = scmp.ne.s32.totalorder %s121, %s122
      %p134 = scmp.eq.s32.totalorder %s28, 1
      %p135 = por %p133, %p134
      %p137 = scmp.ne.s32.totalorder %s122, %s136
      %p138 = scmp.eq.s32.totalorder %s28, 0
      %p139 = por %p137, %p138
      %s141 = sadd.s32 %s140, 1
      %p144 = scmp.eq.s32.totalorder %s22, 1
      %p145 = scmp.ne.s32.totalorder %s140, %s142
      %p146 = scmp.eq.s32.totalorder %s22, 0
      %p147 = por %p145, %p146
      %p148 = scmp.ne.s32.totalorder %s140, %s142
      %p149 = scmp.eq.s32.totalorder %s27, 1
      %p150 = por %p148, %p149
      %p151 = scmp.ne.s32.totalorder %s142, %s143
      %p152 = scmp.eq.s32.totalorder %s27, 0
      %p153 = por %p151, %p152
      %p154 = scmp.ne.s32.totalorder %s142, %s143
      %p155 = scmp.eq.s32.totalorder %s28, 1
      %p156 = por %p154, %p155
      %p158 = scmp.ne.s32.totalorder %s143, %s157
      %p159 = scmp.eq.s32.totalorder %s28, 0
      %p160 = por %p158, %p159
      %s162 = sadd.s32 %s161, 1
      %p165 = scmp.eq.s32.totalorder %s22, 1
      %p166 = scmp.ne.s32.totalorder %s161, %s163
      %p167 = scmp.eq.s32.totalorder %s22, 0
      %p168 = por %p166, %p167
      %p169 = scmp.ne.s32.totalorder %s161, %s163
      %p170 = scmp.eq.s32.totalorder %s27, 1
      %p171 = por %p169, %p170
      %p172 = scmp.ne.s32.totalorder %s163, %s164
      %p173 = scmp.eq.s32.totalorder %s27, 0
      %p174 = por %p172, %p173
      %p175 = scmp.ne.s32.totalorder %s163, %s164
      %p176 = scmp.eq.s32.totalorder %s28, 1
      %p177 = por %p175, %p176
      %p179 = scmp.ne.s32.totalorder %s164, %s178
      %p180 = scmp.eq.s32.totalorder %s28, 0
      %p181 = por %p179, %p180
      %s183 = sadd.s32 %s182, 1
      %p186 = scmp.eq.s32.totalorder %s22, 1
      %p187 = scmp.ne.s32.totalorder %s182, %s184
      %p188 = scmp.eq.s32.totalorder %s22, 0
      %p189 = por %p187, %p188
      %p190 = scmp.ne.s32.totalorder %s182, %s184
      %p191 = scmp.eq.s32.totalorder %s27, 1
      %p192 = por %p190, %p191
      %p193 = scmp.ne.s32.totalorder %s184, %s185
      %p194 = scmp.eq.s32.totalorder %s27, 0
      %p195 = por %p193, %p194
      %p196 = scmp.ne.s32.totalorder %s184, %s185
      %p197 = scmp.eq.s32.totalorder %s28, 1
      %p198 = por %p196, %p197
      %p200 = scmp.ne.s32.totalorder %s185, %s199
      %p201 = scmp.eq.s32.totalorder %s28, 0
      %p202 = por %p200, %p201
      %s203 = ssub.s32 %s22, %s29
      %p204 = scmp.eq.s32.totalorder %s203, 0
      %s206 = sadd.s32 %s205, 1
      %s207 = scalar_select %p204, %s205, %s206
      %p210 = pneg %p204
      %p211 = scmp.eq.s32.totalorder %s22, 1
      %p212 = por %p210, %p211
      %p213 = scmp.ne.s32.totalorder %s205, %s208
      %p214 = scmp.eq.s32.totalorder %s22, 0
      %p215 = por %p213, %p214
      %p216 = scmp.ne.s32.totalorder %s205, %s208
      %p217 = scmp.eq.s32.totalorder %s27, 1
      %p218 = por %p216, %p217
      %p219 = scmp.ne.s32.totalorder %s208, %s209
      %p220 = scmp.eq.s32.totalorder %s27, 0
      %p221 = por %p219, %p220
      %p222 = scmp.ne.s32.totalorder %s208, %s209
      %p223 = scmp.eq.s32.totalorder %s28, 1
      %p224 = por %p222, %p223
      %p226 = scmp.ne.s32.totalorder %s209, %s225
      %p227 = scmp.eq.s32.totalorder %s28, 0
      %p228 = por %p226, %p227
      %p229 = scmp.le.s32.totalorder 1, %s22
      %p230 = scmp.lt.s32.totalorder %s22, 3
      %p231 = pnand %p229, %p230
      %p232 = pneg %p231
      // Predicated region
      $region9: #{tpu_custom_call.1} parent=5 // pred_check
        _
      $region10: #{tpu_custom_call.1} parent=5 // pred_check_branch
        %234 = sbr.rel (%p231) target = $region12
      $region11: #{tpu_custom_call.1} parent=5 // pred_region
        %s235 = ssub.s32 %s22, 1
        // Predicated region
        $region13: #{tpu_custom_call.1} parent=11 // pred_check
          %p236 = pneg %p69
        $region14: #{tpu_custom_call.1} parent=11 // pred_check_branch
          %238 = sbr.rel (%p236) target = $region16
        $region15: #{tpu_custom_call.1} parent=11 // pred_region
          %s240 = ssub.s32 24576, 24576
          %241 = vsyncadd [#allocation6], %s240
          %s242 = sshll.u32 [#allocation5], 4
          %s243 = int_to_ptr.vmem [resolvable:$true] %s242
          %248 = dma.hbm_to_vmem [thread:$0]  %s1, 24576, %s243, [#allocation6], 768, 768, 48
        $region16: #{tpu_custom_call.1} parent=11 // pred_fallthru
          _
        // Predicated region
        $region17: #{tpu_custom_call.1} parent=11 // pred_check
          %p249 = pneg %p90
        $region18: #{tpu_custom_call.1} parent=11 // pred_check_branch
          %251 = sbr.rel (%p249) target = $region20
        $region19: #{tpu_custom_call.1} parent=11 // pred_region
          _
        $region20: #{tpu_custom_call.1} parent=11 // pred_fallthru
          _
        // Predicated region
        $region21: #{tpu_custom_call.1} parent=11 // pred_check
          %p252 = pneg %p111
        $region22: #{tpu_custom_call.1} parent=11 // pred_check_branch
          %254 = sbr.rel (%p252) target = $region24
        $region23: #{tpu_custom_call.1} parent=11 // pred_region
          %s256 = ssub.s32 8192, 8192
          %257 = vsyncadd [#allocation6], %s256
          %s258 = sshll.u32 [#allocation7], 4
          %s259 = int_to_ptr.vmem [resolvable:$true] %s258
          %264 = dma.hbm_to_vmem [thread:$0]  %s3, 8192, %s259, [#allocation6], 256, 256, 16
        $region24: #{tpu_custom_call.1} parent=11 // pred_fallthru
          _
        // Predicated region
        $region25: #{tpu_custom_call.1} parent=11 // pred_check
          %p265 = pneg %p132
        $region26: #{tpu_custom_call.1} parent=11 // pred_check_branch
          %267 = sbr.rel (%p265) target = $region28
        $region27: #{tpu_custom_call.1} parent=11 // pred_region
          %s269 = ssub.s32 16384, 16384
          %270 = vsyncadd [#allocation9], %s269
          %s271 = sshll.u32 [#allocation8], 4
          %s272 = int_to_ptr.vmem [resolvable:$true] %s271
          %277 = dma.hbm_to_vmem [thread:$0]  %s4, 16384, %s272, [#allocation9], 512, 512, 32
        $region28: #{tpu_custom_call.1} parent=11 // pred_fallthru
          _
        // Predicated region
        $region29: #{tpu_custom_call.1} parent=11 // pred_check
          %p278 = pneg %p153
        $region30: #{tpu_custom_call.1} parent=11 // pred_check_branch
          %280 = sbr.rel (%p278) target = $region32
        $region31: #{tpu_custom_call.1} parent=11 // pred_region
          _
        $region32: #{tpu_custom_call.1} parent=11 // pred_fallthru
          _
        // Predicated region
        $region33: #{tpu_custom_call.1} parent=11 // pred_check
          %p281 = pneg %p174
        $region34: #{tpu_custom_call.1} parent=11 // pred_check_branch
          %283 = sbr.rel (%p281) target = $region36
        $region35: #{tpu_custom_call.1} parent=11 // pred_region
          %s285 = ssub.s32 16384, 16384
          %286 = vsyncadd [#allocation9], %s285
          %s287 = sshll.u32 [#allocation10], 4
          %s288 = int_to_ptr.vmem [resolvable:$true] %s287
          %293 = dma.hbm_to_vmem [thread:$0]  %s6, 16384, %s288, [#allocation9], 256, 256, 16
        $region36: #{tpu_custom_call.1} parent=11 // pred_fallthru
          _
        // Predicated region
        $region37: #{tpu_custom_call.1} parent=11 // pred_check
          %p294 = pneg %p195
        $region38: #{tpu_custom_call.1} parent=11 // pred_check_branch
          %296 = sbr.rel (%p294) target = $region40
        $region39: #{tpu_custom_call.1} parent=11 // pred_region
          _
        $region40: #{tpu_custom_call.1} parent=11 // pred_fallthru
          _
      $region12: #{tpu_custom_call.1} parent=5 // pred_fallthru
        _
      %p297 = scmp.lt.s32.totalorder %s22, 2
      // Predicated region
      $region41: #{tpu_custom_call.1} parent=5 // pred_check
        %p298 = pneg %p297
      $region42: #{tpu_custom_call.1} parent=5 // pred_check_branch
        %300 = sbr.rel (%p298) target = $region44
      $region43: #{tpu_custom_call.1} parent=5 // pred_region
        // Predicated region
        $region45: #{tpu_custom_call.1} parent=43 // pred_check
          %p301 = pneg %p42
        $region46: #{tpu_custom_call.1} parent=43 // pred_check_branch
          %303 = sbr.rel (%p301) target = $region48
        $region47: #{tpu_custom_call.1} parent=43 // pred_region
          %s304 = sand.u32 %s32, 1
          %s305 = scalar_lea.sflag [#allocation3], %s304
          %s306 = sand.u32 %s32, 1
          %s307 = smul.addr %s306, 32
          %s308 = scalar_lea.vmem [#allocation2], %s307
          %s310 = ssub.s32 512, 512
          %311 = vsyncadd %s305, %s310
          %s312 = smul.addr %s22, 4
          %s313 = smul.addr %s312, 128
          %s314 = scalar_lea.hbm %s0, %s313
          %s315 = sshll.u32 %s308, 4
          %s316 = int_to_ptr.vmem [resolvable:$true] %s315
          %321 = dma.hbm_to_vmem [thread:$0]  %s314, 512, %s316, %s305, 256, 256, 16
        $region48: #{tpu_custom_call.1} parent=43 // pred_fallthru
          _
      $region44: #{tpu_custom_call.1} parent=5 // pred_fallthru
        _
      %p322 = scmp.le.s32.totalorder 1, %s22
      %p323 = scmp.lt.s32.totalorder %s22, 3
      %p324 = pnand %p322, %p323
      %p325 = pneg %p324
      // Predicated region
      $region49: #{tpu_custom_call.1} parent=5 // pred_check
        _
      $region50: #{tpu_custom_call.1} parent=5 // pred_check_branch
        %327 = sbr.rel (%p324) target = $region52
      $region51: #{tpu_custom_call.1} parent=5 // pred_region
        %s328 = ssub.s32 %s22, 1
        %s329 = sand.u32 %s35, 1
        %s330 = scalar_lea.sflag [#allocation3], %s329
        %s331 = sand.u32 %s35, 1
        %s332 = smul.addr %s331, 32
        %s333 = scalar_lea.vmem [#allocation2], %s332
        // Predicated region
        $region53: #{tpu_custom_call.1} parent=51 // pred_check
          %p334 = pneg %p48
        $region54: #{tpu_custom_call.1} parent=51 // pred_check_branch
          %336 = sbr.rel (%p334) target = $region56
        $region55: #{tpu_custom_call.1} parent=51 // pred_region
          %337 = dma.done %s330, 512
        $region56: #{tpu_custom_call.1} parent=51 // pred_fallthru
          _
        // Predicated region
        $region57: #{tpu_custom_call.1} parent=51 // pred_check
          %p338 = pneg %p69
        $region58: #{tpu_custom_call.1} parent=51 // pred_check_branch
          %340 = sbr.rel (%p338) target = $region60
        $region59: #{tpu_custom_call.1} parent=51 // pred_region
          %341 = dma.done [#allocation6], 24576
        $region60: #{tpu_custom_call.1} parent=51 // pred_fallthru
          _
        // Predicated region
        $region61: #{tpu_custom_call.1} parent=51 // pred_check
          %p342 = pneg %p111
        $region62: #{tpu_custom_call.1} parent=51 // pred_check_branch
          %344 = sbr.rel (%p342) target = $region64
        $region63: #{tpu_custom_call.1} parent=51 // pred_region
          %345 = dma.done [#allocation6], 8192
        $region64: #{tpu_custom_call.1} parent=51 // pred_fallthru
          _
        // Predicated region
        $region65: #{tpu_custom_call.1} parent=51 // pred_check
          %p346 = pneg %p132
        $region66: #{tpu_custom_call.1} parent=51 // pred_check_branch
          %348 = sbr.rel (%p346) target = $region68
        $region67: #{tpu_custom_call.1} parent=51 // pred_region
          %349 = dma.done [#allocation9], 16384
        $region68: #{tpu_custom_call.1} parent=51 // pred_fallthru
          _
        // Predicated region
        $region69: #{tpu_custom_call.1} parent=51 // pred_check
          %p350 = pneg %p174
        $region70: #{tpu_custom_call.1} parent=51 // pred_check_branch
          %352 = sbr.rel (%p350) target = $region72
        $region71: #{tpu_custom_call.1} parent=51 // pred_region
          %353 = dma.done [#allocation9], 16384
        $region72: #{tpu_custom_call.1} parent=51 // pred_fallthru
          _
        %s354 = sand.u32 %s35, 1
        %s355 = scalar_lea.sflag [#allocation3], %s354
        %s356 = sand.u32 %s35, 1
        %s357 = smul.addr %s356, 32
        %s358 = scalar_lea.vmem [#allocation2], %s357
        %p359 = pneg %p48
        %p360 = pneg %p45
        %p361 = pneg %p69
        %p362 = pneg %p66
        %p363 = pneg %p90
        %p364 = pneg %p87
        %p365 = pneg %p111
        %p366 = pneg %p108
        %p367 = pneg %p132
        %p368 = pneg %p129
        %p369 = pneg %p153
        %p370 = pneg %p150
        %p371 = pneg %p174
        %p372 = pneg %p171
        %p373 = pneg %p195
        %p374 = pneg %p192
        %p375 = pneg %p221
        %p376 = pneg %p218
        %s377 = sand.u32 %s208, 1
        %s378 = scalar_lea.sflag [#allocation4], %s377
        %s379 = sand.u32 %s208, 1
        %s380 = smul.addr %s379, 32
        %s381 = scalar_lea.vmem [#allocation11], %s380
        %v382 = vld [vmem:[%s7] ss:$8 sm:$0x3]
        %s383 = scalar_lea.vmem %s7, 1
        %v384 = vld [vmem:[%s383] ss:$8 sm:$0x3]
        %s385 = scalar_lea.vmem %s7, 2
        %v386 = vld [vmem:[%s385] ss:$8 sm:$0x3]
        %s387 = scalar_lea.vmem %s7, 3
        %v388 = vld [vmem:[%s387] ss:$8 sm:$0x3]
        %s389 = scalar_lea.vmem %s7, 4
        %v390 = vld [vmem:[%s389] ss:$8 sm:$0x3]
        %s391 = scalar_lea.vmem %s7, 5
        %v392 = vld [vmem:[%s391] ss:$8 sm:$0x3]
        %v393 = vld [vmem:[%s333] sm:$0xff]
        %v394 = vld [vmem:[%s333 + $0x8] sm:$0xff]
        %v395 = vld [vmem:[%s333 + $0x10] sm:$0xff]
        %v396 = vld [vmem:[%s333 + $0x18] sm:$0xff]
        loop: start=0, step=1, limit=2
        $region73: #{tpu_custom_call.1} parent=51 // loop_pre_header
          _
        $region74: #{tpu_custom_call.1} parent=51 // loop_header
          %s398 = sphi 0, %s402
          %p399 = scmp.ge.s32.totalorder %s398, 2
          %v403 = vphi %v393, %v2485
          %v404 = vphi %v394, %v2486
          %v405 = vphi %v395, %v2487
          %v406 = vphi %v396, %v2488
        $region75: #{tpu_custom_call.1} parent=51 // loop_header_branch
          %401 = sbr.rel (%p399) target = $region79
        $region76: #{tpu_custom_call.1} parent=51 // loop_body
          %v407 = vld [vmem:[#allocation5] sm:$0xff]
          %v408 = vld [vmem:[#allocation5 + $0x8] sm:$0xff]
          %v409 = vld [vmem:[#allocation5 + $0x10] sm:$0xff]
          %v410 = vld [vmem:[#allocation5 + $0x18] sm:$0xff]
          %v411 = vld [vmem:[#allocation5 + $0x20] sm:$0xff]
          %v412 = vld [vmem:[#allocation5 + $0x28] sm:$0xff]
          %v413 = vld [vmem:[#allocation5 + $0x30] sm:$0xff]
          %v414 = vld [vmem:[#allocation5 + $0x38] sm:$0xff]
          %v415 = vld [vmem:[#allocation5 + $0x40] sm:$0xff]
          %v416 = vld [vmem:[#allocation5 + $0x48] sm:$0xff]
          %v417 = vld [vmem:[#allocation5 + $0x50] sm:$0xff]
          %v418 = vld [vmem:[#allocation5 + $0x58] sm:$0xff]
          %v419 = vld [vmem:[#allocation5 + $0x60] sm:$0xff]
          %v420 = vld [vmem:[#allocation5 + $0x68] sm:$0xff]
          %v421 = vld [vmem:[#allocation5 + $0x70] sm:$0xff]
          %v422 = vld [vmem:[#allocation5 + $0x78] sm:$0xff]
          %v423 = vld [vmem:[#allocation5 + $0x80] sm:$0xff]
          %v424 = vld [vmem:[#allocation5 + $0x88] sm:$0xff]
          %v425 = vld [vmem:[#allocation5 + $0x90] sm:$0xff]
          %v426 = vld [vmem:[#allocation5 + $0x98] sm:$0xff]
          %v427 = vld [vmem:[#allocation5 + $0xa0] sm:$0xff]
          %v428 = vld [vmem:[#allocation5 + $0xa8] sm:$0xff]
          %v429 = vld [vmem:[#allocation5 + $0xb0] sm:$0xff]
          %v430 = vld [vmem:[#allocation5 + $0xb8] sm:$0xff]
          %v431 = vld [vmem:[#allocation5 + $0xc0] sm:$0xff]
          %v432 = vld [vmem:[#allocation5 + $0xc8] sm:$0xff]
          %v433 = vld [vmem:[#allocation5 + $0xd0] sm:$0xff]
          %v434 = vld [vmem:[#allocation5 + $0xd8] sm:$0xff]
          %v435 = vld [vmem:[#allocation5 + $0xe0] sm:$0xff]
          %v436 = vld [vmem:[#allocation5 + $0xe8] sm:$0xff]
          %v437 = vld [vmem:[#allocation5 + $0xf0] sm:$0xff]
          %v438 = vld [vmem:[#allocation5 + $0xf8] sm:$0xff]
          %v439 = vld [vmem:[#allocation5 + $0x100] sm:$0xff]
          %v440 = vld [vmem:[#allocation5 + $0x108] sm:$0xff]
          %v441 = vld [vmem:[#allocation5 + $0x110] sm:$0xff]
          %v442 = vld [vmem:[#allocation5 + $0x118] sm:$0xff]
          %v443 = vld [vmem:[#allocation5 + $0x120] sm:$0xff]
          %v444 = vld [vmem:[#allocation5 + $0x128] sm:$0xff]
          %v445 = vld [vmem:[#allocation5 + $0x130] sm:$0xff]
          %v446 = vld [vmem:[#allocation5 + $0x138] sm:$0xff]
          %v447 = vld [vmem:[#allocation5 + $0x140] sm:$0xff]
          %v448 = vld [vmem:[#allocation5 + $0x148] sm:$0xff]
          %v449 = vld [vmem:[#allocation5 + $0x150] sm:$0xff]
          %v450 = vld [vmem:[#allocation5 + $0x158] sm:$0xff]
          %v451 = vld [vmem:[#allocation5 + $0x160] sm:$0xff]
          %v452 = vld [vmem:[#allocation5 + $0x168] sm:$0xff]
          %v453 = vld [vmem:[#allocation5 + $0x170] sm:$0xff]
          %v454 = vld [vmem:[#allocation5 + $0x178] sm:$0xff]
          %v455 = vld [vmem:[#allocation5 + $0x180] sm:$0xff]
          %v456 = vld [vmem:[#allocation5 + $0x188] sm:$0xff]
          %v457 = vld [vmem:[#allocation5 + $0x190] sm:$0xff]
          %v458 = vld [vmem:[#allocation5 + $0x198] sm:$0xff]
          %v459 = vld [vmem:[#allocation5 + $0x1a0] sm:$0xff]
          %v460 = vld [vmem:[#allocation5 + $0x1a8] sm:$0xff]
          %v461 = vld [vmem:[#allocation5 + $0x1b0] sm:$0xff]
          %v462 = vld [vmem:[#allocation5 + $0x1b8] sm:$0xff]
          %v463 = vld [vmem:[#allocation5 + $0x1c0] sm:$0xff]
          %v464 = vld [vmem:[#allocation5 + $0x1c8] sm:$0xff]
          %v465 = vld [vmem:[#allocation5 + $0x1d0] sm:$0xff]
          %v466 = vld [vmem:[#allocation5 + $0x1d8] sm:$0xff]
          %v467 = vld [vmem:[#allocation5 + $0x1e0] sm:$0xff]
          %v468 = vld [vmem:[#allocation5 + $0x1e8] sm:$0xff]
          %v469 = vld [vmem:[#allocation5 + $0x1f0] sm:$0xff]
          %v470 = vld [vmem:[#allocation5 + $0x1f8] sm:$0xff]
          %v471 = vld [vmem:[#allocation5 + $0x200] sm:$0xff]
          %v472 = vld [vmem:[#allocation5 + $0x208] sm:$0xff]
          %v473 = vld [vmem:[#allocation5 + $0x210] sm:$0xff]
          %v474 = vld [vmem:[#allocation5 + $0x218] sm:$0xff]
          %v475 = vld [vmem:[#allocation5 + $0x220] sm:$0xff]
          %v476 = vld [vmem:[#allocation5 + $0x228] sm:$0xff]
          %v477 = vld [vmem:[#allocation5 + $0x230] sm:$0xff]
          %v478 = vld [vmem:[#allocation5 + $0x238] sm:$0xff]
          %v479 = vld [vmem:[#allocation5 + $0x240] sm:$0xff]
          %v480 = vld [vmem:[#allocation5 + $0x248] sm:$0xff]
          %v481 = vld [vmem:[#allocation5 + $0x250] sm:$0xff]
          %v482 = vld [vmem:[#allocation5 + $0x258] sm:$0xff]
          %v483 = vld [vmem:[#allocation5 + $0x260] sm:$0xff]
          %v484 = vld [vmem:[#allocation5 + $0x268] sm:$0xff]
          %v485 = vld [vmem:[#allocation5 + $0x270] sm:$0xff]
          %v486 = vld [vmem:[#allocation5 + $0x278] sm:$0xff]
          %v487 = vld [vmem:[#allocation5 + $0x280] sm:$0xff]
          %v488 = vld [vmem:[#allocation5 + $0x288] sm:$0xff]
          %v489 = vld [vmem:[#allocation5 + $0x290] sm:$0xff]
          %v490 = vld [vmem:[#allocation5 + $0x298] sm:$0xff]
          %v491 = vld [vmem:[#allocation5 + $0x2a0] sm:$0xff]
          %v492 = vld [vmem:[#allocation5 + $0x2a8] sm:$0xff]
          %v493 = vld [vmem:[#allocation5 + $0x2b0] sm:$0xff]
          %v494 = vld [vmem:[#allocation5 + $0x2b8] sm:$0xff]
          %v495 = vld [vmem:[#allocation5 + $0x2c0] sm:$0xff]
          %v496 = vld [vmem:[#allocation5 + $0x2c8] sm:$0xff]
          %v497 = vld [vmem:[#allocation5 + $0x2d0] sm:$0xff]
          %v498 = vld [vmem:[#allocation5 + $0x2d8] sm:$0xff]
          %v499 = vld [vmem:[#allocation5 + $0x2e0] sm:$0xff]
          %v500 = vld [vmem:[#allocation5 + $0x2e8] sm:$0xff]
          %v501 = vld [vmem:[#allocation5 + $0x2f0] sm:$0xff]
          %v502 = vld [vmem:[#allocation5 + $0x2f8] sm:$0xff]
          %v503 = vld [vmem:[#allocation5 + $0x300] sm:$0xff]
          %v504 = vld [vmem:[#allocation5 + $0x308] sm:$0xff]
          %v505 = vld [vmem:[#allocation5 + $0x310] sm:$0xff]
          %v506 = vld [vmem:[#allocation5 + $0x318] sm:$0xff]
          %v507 = vld [vmem:[#allocation5 + $0x320] sm:$0xff]
          %v508 = vld [vmem:[#allocation5 + $0x328] sm:$0xff]
          %v509 = vld [vmem:[#allocation5 + $0x330] sm:$0xff]
          %v510 = vld [vmem:[#allocation5 + $0x338] sm:$0xff]
          %v511 = vld [vmem:[#allocation5 + $0x340] sm:$0xff]
          %v512 = vld [vmem:[#allocation5 + $0x348] sm:$0xff]
          %v513 = vld [vmem:[#allocation5 + $0x350] sm:$0xff]
          %v514 = vld [vmem:[#allocation5 + $0x358] sm:$0xff]
          %v515 = vld [vmem:[#allocation5 + $0x360] sm:$0xff]
          %v516 = vld [vmem:[#allocation5 + $0x368] sm:$0xff]
          %v517 = vld [vmem:[#allocation5 + $0x370] sm:$0xff]
          %v518 = vld [vmem:[#allocation5 + $0x378] sm:$0xff]
          %v519 = vld [vmem:[#allocation5 + $0x380] sm:$0xff]
          %v520 = vld [vmem:[#allocation5 + $0x388] sm:$0xff]
          %v521 = vld [vmem:[#allocation5 + $0x390] sm:$0xff]
          %v522 = vld [vmem:[#allocation5 + $0x398] sm:$0xff]
          %v523 = vld [vmem:[#allocation5 + $0x3a0] sm:$0xff]
          %v524 = vld [vmem:[#allocation5 + $0x3a8] sm:$0xff]
          %v525 = vld [vmem:[#allocation5 + $0x3b0] sm:$0xff]
          %v526 = vld [vmem:[#allocation5 + $0x3b8] sm:$0xff]
          %v527 = vld [vmem:[#allocation5 + $0x3c0] sm:$0xff]
          %v528 = vld [vmem:[#allocation5 + $0x3c8] sm:$0xff]
          %v529 = vld [vmem:[#allocation5 + $0x3d0] sm:$0xff]
          %v530 = vld [vmem:[#allocation5 + $0x3d8] sm:$0xff]
          %v531 = vld [vmem:[#allocation5 + $0x3e0] sm:$0xff]
          %v532 = vld [vmem:[#allocation5 + $0x3e8] sm:$0xff]
          %v533 = vld [vmem:[#allocation5 + $0x3f0] sm:$0xff]
          %v534 = vld [vmem:[#allocation5 + $0x3f8] sm:$0xff]
          %v535 = vld [vmem:[#allocation5 + $0x400] sm:$0xff]
          %v536 = vld [vmem:[#allocation5 + $0x408] sm:$0xff]
          %v537 = vld [vmem:[#allocation5 + $0x410] sm:$0xff]
          %v538 = vld [vmem:[#allocation5 + $0x418] sm:$0xff]
          %v539 = vld [vmem:[#allocation5 + $0x420] sm:$0xff]
          %v540 = vld [vmem:[#allocation5 + $0x428] sm:$0xff]
          %v541 = vld [vmem:[#allocation5 + $0x430] sm:$0xff]
          %v542 = vld [vmem:[#allocation5 + $0x438] sm:$0xff]
          %v543 = vld [vmem:[#allocation5 + $0x440] sm:$0xff]
          %v544 = vld [vmem:[#allocation5 + $0x448] sm:$0xff]
          %v545 = vld [vmem:[#allocation5 + $0x450] sm:$0xff]
          %v546 = vld [vmem:[#allocation5 + $0x458] sm:$0xff]
          %v547 = vld [vmem:[#allocation5 + $0x460] sm:$0xff]
          %v548 = vld [vmem:[#allocation5 + $0x468] sm:$0xff]
          %v549 = vld [vmem:[#allocation5 + $0x470] sm:$0xff]
          %v550 = vld [vmem:[#allocation5 + $0x478] sm:$0xff]
          %v551 = vld [vmem:[#allocation5 + $0x480] sm:$0xff]
          %v552 = vld [vmem:[#allocation5 + $0x488] sm:$0xff]
          %v553 = vld [vmem:[#allocation5 + $0x490] sm:$0xff]
          %v554 = vld [vmem:[#allocation5 + $0x498] sm:$0xff]
          %v555 = vld [vmem:[#allocation5 + $0x4a0] sm:$0xff]
          %v556 = vld [vmem:[#allocation5 + $0x4a8] sm:$0xff]
          %v557 = vld [vmem:[#allocation5 + $0x4b0] sm:$0xff]
          %v558 = vld [vmem:[#allocation5 + $0x4b8] sm:$0xff]
          %v559 = vld [vmem:[#allocation5 + $0x4c0] sm:$0xff]
          %v560 = vld [vmem:[#allocation5 + $0x4c8] sm:$0xff]
          %v561 = vld [vmem:[#allocation5 + $0x4d0] sm:$0xff]
          %v562 = vld [vmem:[#allocation5 + $0x4d8] sm:$0xff]
          %v563 = vld [vmem:[#allocation5 + $0x4e0] sm:$0xff]
          %v564 = vld [vmem:[#allocation5 + $0x4e8] sm:$0xff]
          %v565 = vld [vmem:[#allocation5 + $0x4f0] sm:$0xff]
          %v566 = vld [vmem:[#allocation5 + $0x4f8] sm:$0xff]
          %v567 = vld [vmem:[#allocation5 + $0x500] sm:$0xff]
          %v568 = vld [vmem:[#allocation5 + $0x508] sm:$0xff]
          %v569 = vld [vmem:[#allocation5 + $0x510] sm:$0xff]
          %v570 = vld [vmem:[#allocation5 + $0x518] sm:$0xff]
          %v571 = vld [vmem:[#allocation5 + $0x520] sm:$0xff]
          %v572 = vld [vmem:[#allocation5 + $0x528] sm:$0xff]
          %v573 = vld [vmem:[#allocation5 + $0x530] sm:$0xff]
          %v574 = vld [vmem:[#allocation5 + $0x538] sm:$0xff]
          %v575 = vld [vmem:[#allocation5 + $0x540] sm:$0xff]
          %v576 = vld [vmem:[#allocation5 + $0x548] sm:$0xff]
          %v577 = vld [vmem:[#allocation5 + $0x550] sm:$0xff]
          %v578 = vld [vmem:[#allocation5 + $0x558] sm:$0xff]
          %v579 = vld [vmem:[#allocation5 + $0x560] sm:$0xff]
          %v580 = vld [vmem:[#allocation5 + $0x568] sm:$0xff]
          %v581 = vld [vmem:[#allocation5 + $0x570] sm:$0xff]
          %v582 = vld [vmem:[#allocation5 + $0x578] sm:$0xff]
          %v583 = vld [vmem:[#allocation5 + $0x580] sm:$0xff]
          %v584 = vld [vmem:[#allocation5 + $0x588] sm:$0xff]
          %v585 = vld [vmem:[#allocation5 + $0x590] sm:$0xff]
          %v586 = vld [vmem:[#allocation5 + $0x598] sm:$0xff]
          %v587 = vld [vmem:[#allocation5 + $0x5a0] sm:$0xff]
          %v588 = vld [vmem:[#allocation5 + $0x5a8] sm:$0xff]
          %v589 = vld [vmem:[#allocation5 + $0x5b0] sm:$0xff]
          %v590 = vld [vmem:[#allocation5 + $0x5b8] sm:$0xff]
          %v591 = vld [vmem:[#allocation5 + $0x5c0] sm:$0xff]
          %v592 = vld [vmem:[#allocation5 + $0x5c8] sm:$0xff]
          %v593 = vld [vmem:[#allocation5 + $0x5d0] sm:$0xff]
          %v594 = vld [vmem:[#allocation5 + $0x5d8] sm:$0xff]
          %v595 = vld [vmem:[#allocation5 + $0x5e0] sm:$0xff]
          %v596 = vld [vmem:[#allocation5 + $0x5e8] sm:$0xff]
          %v597 = vld [vmem:[#allocation5 + $0x5f0] sm:$0xff]
          %v598 = vld [vmem:[#allocation5 + $0x5f8] sm:$0xff]
          %v599 = vld [vmem:[%s2] sm:$0x3f]
          %v601 = vlaneseq
          %v602 = vshrl.u32 %v601, 7
          %v603 = vsub.s32 0, %v602
          %v604 = vrot.slane %v599, %v603
          %v605 = vlaneseq
          %v606 = vshrl.u32 %v605, 7
          %v607 = vsub.s32 1, %v606
          %v608 = vrot.slane %v599, %v607
          %v609 = vlaneseq
          %v610 = vshrl.u32 %v609, 7
          %v611 = vsub.s32 2, %v610
          %v612 = vrot.slane %v599, %v611
          %v613 = vlaneseq
          %v614 = vshrl.u32 %v613, 7
          %v615 = vsub.s32 3, %v614
          %v616 = vrot.slane %v599, %v615
          %v617 = vlaneseq
          %v618 = vshrl.u32 %v617, 7
          %v619 = vsub.s32 4, %v618
          %v620 = vrot.slane %v599, %v619
          %v621 = vlaneseq
          %v622 = vshrl.u32 %v621, 7
          %v623 = vsub.s32 5, %v622
          %v624 = vrot.slane %v599, %v623
          %631 = vmatprep.subr.mxu0 %v408
          %632 = vmatpush1.msra.mxu0 %v407
          %633 = vmatprep.subr.mxu0 %v414
          %634 = vmatpush1.msra.mxu0 %v413
          %635 = vmatprep.subr.mxu0 %v420
          %636 = vmatpush1.msra.mxu0 %v419
          %637 = vmatprep.subr.mxu0 %v426
          %638 = vmatpush1.msra.mxu0 %v425
          %639 = vmatprep.subr.mxu0 %v432
          %640 = vmatpush1.msra.mxu0 %v431
          %641 = vmatprep.subr.mxu0 %v438
          %642 = vmatpush1.msra.mxu0 %v437
          %643 = vmatprep.subr.mxu0 %v444
          %644 = vmatpush1.msra.mxu0 %v443
          %645 = vmatprep.subr.mxu0 %v450
          %646 = vmatpush1.msra.mxu0 %v449
          %647 = vmatprep.subr.mxu0 %v456
          %648 = vmatpush1.msra.mxu0 %v455
          %649 = vmatprep.subr.mxu0 %v462
          %650 = vmatpush1.msra.mxu0 %v461
          %651 = vmatprep.subr.mxu0 %v468
          %652 = vmatpush1.msra.mxu0 %v467
          %653 = vmatprep.subr.mxu0 %v474
          %654 = vmatpush1.msra.mxu0 %v473
          %655 = vmatprep.subr.mxu0 %v480
          %656 = vmatpush1.msra.mxu0 %v479
          %657 = vmatprep.subr.mxu0 %v486
          %658 = vmatpush1.msra.mxu0 %v485
          %659 = vmatprep.subr.mxu0 %v492
          %660 = vmatpush1.msra.mxu0 %v491
          %661 = vmatprep.subr.mxu0 %v498
          %662 = vmatpush1.msra.mxu0 %v497
          %663 = vmatprep.subr.mxu0 %v504
          %664 = vmatpush1.msra.mxu0 %v503
          %665 = vmatprep.subr.mxu0 %v510
          %666 = vmatpush1.msra.mxu0 %v509
          %667 = vmatprep.subr.mxu0 %v516
          %668 = vmatpush1.msra.mxu0 %v515
          %669 = vmatprep.subr.mxu0 %v522
          %670 = vmatpush1.msra.mxu0 %v521
          %671 = vmatprep.subr.mxu0 %v528
          %672 = vmatpush1.msra.mxu0 %v527
          %673 = vmatprep.subr.mxu0 %v534
          %674 = vmatpush1.msra.mxu0 %v533
          %675 = vmatprep.subr.mxu0 %v540
          %676 = vmatpush1.msra.mxu0 %v539
          %677 = vmatprep.subr.mxu0 %v546
          %678 = vmatpush1.msra.mxu0 %v545
          %679 = vmatprep.subr.mxu0 %v552
          %680 = vmatpush1.msra.mxu0 %v551
          %681 = vmatprep.subr.mxu0 %v558
          %682 = vmatpush1.msra.mxu0 %v557
          %683 = vmatprep.subr.mxu0 %v564
          %684 = vmatpush1.msra.mxu0 %v563
          %685 = vmatprep.subr.mxu0 %v570
          %686 = vmatpush1.msra.mxu0 %v569
          %687 = vmatprep.subr.mxu0 %v576
          %688 = vmatpush1.msra.mxu0 %v575
          %689 = vmatprep.subr.mxu0 %v582
          %690 = vmatpush1.msra.mxu0 %v581
          %691 = vmatprep.subr.mxu0 %v588
          %692 = vmatpush1.msra.mxu0 %v587
          %693 = vmatprep.subr.mxu0 %v594
          %694 = vmatpush1.msra.mxu0 %v593
          %695 = vmatprep.mubr.f32.mxu0 %v404
          %696 = vmatmul.mubr.f32.gmra.mrb[0].mxu0 %v403
          %v697 = vpop.f32.mrb[0].mxu0
          %v698 = vadd.f32 %v604, %v697
          %v699 = vpop.f32.mrb[0].mxu0
          %v700 = vadd.f32 %v608, %v699
          %701 = vmatprep.mubr.f32.mxu0 %v406
          %702 = vmatmul.mubr.f32.gmra.mrb[0].mxu0 %v405
          %v703 = vpop.f32.mrb[0].mxu0
          %v704 = vadd.f32 %v604, %v703
          %v705 = vpop.f32.mrb[0].mxu0
          %v706 = vadd.f32 %v608, %v705
          %707 = vdwg.mxu0
          %708 = vmatprep.subr.mxu0 %v410
          %709 = vmatpush1.msra.mxu0 %v409
          %710 = vmatprep.subr.mxu0 %v416
          %711 = vmatpush1.msra.mxu0 %v415
          %712 = vmatprep.subr.mxu0 %v422
          %713 = vmatpush1.msra.mxu0 %v421
          %714 = vmatprep.subr.mxu0 %v428
          %715 = vmatpush1.msra.mxu0 %v427
          %716 = vmatprep.subr.mxu0 %v434
          %717 = vmatpush1.msra.mxu0 %v433
          %718 = vmatprep.subr.mxu0 %v440
          %719 = vmatpush1.msra.mxu0 %v439
          %720 = vmatprep.subr.mxu0 %v446
          %721 = vmatpush1.msra.mxu0 %v445
          %722 = vmatprep.subr.mxu0 %v452
          %723 = vmatpush1.msra.mxu0 %v451
          %724 = vmatprep.subr.mxu0 %v458
          %725 = vmatpush1.msra.mxu0 %v457
          %726 = vmatprep.subr.mxu0 %v464
          %727 = vmatpush1.msra.mxu0 %v463
          %728 = vmatprep.subr.mxu0 %v470
          %729 = vmatpush1.msra.mxu0 %v469
          %730 = vmatprep.subr.mxu0 %v476
          %731 = vmatpush1.msra.mxu0 %v475
          %732 = vmatprep.subr.mxu0 %v482
          %733 = vmatpush1.msra.mxu0 %v481
          %734 = vmatprep.subr.mxu0 %v488
          %735 = vmatpush1.msra.mxu0 %v487
          %736 = vmatprep.subr.mxu0 %v494
          %737 = vmatpush1.msra.mxu0 %v493
          %738 = vmatprep.subr.mxu0 %v500
          %739 = vmatpush1.msra.mxu0 %v499
          %740 = vmatprep.subr.mxu0 %v506
          %741 = vmatpush1.msra.mxu0 %v505
          %742 = vmatprep.subr.mxu0 %v512
          %743 = vmatpush1.msra.mxu0 %v511
          %744 = vmatprep.subr.mxu0 %v518
          %745 = vmatpush1.msra.mxu0 %v517
          %746 = vmatprep.subr.mxu0 %v524
          %747 = vmatpush1.msra.mxu0 %v523
          %748 = vmatprep.subr.mxu0 %v530
          %749 = vmatpush1.msra.mxu0 %v529
          %750 = vmatprep.subr.mxu0 %v536
          %751 = vmatpush1.msra.mxu0 %v535
          %752 = vmatprep.subr.mxu0 %v542
          %753 = vmatpush1.msra.mxu0 %v541
          %754 = vmatprep.subr.mxu0 %v548
          %755 = vmatpush1.msra.mxu0 %v547
          %756 = vmatprep.subr.mxu0 %v554
          %757 = vmatpush1.msra.mxu0 %v553
          %758 = vmatprep.subr.mxu0 %v560
          %759 = vmatpush1.msra.mxu0 %v559
          %760 = vmatprep.subr.mxu0 %v566
          %761 = vmatpush1.msra.mxu0 %v565
          %762 = vmatprep.subr.mxu0 %v572
          %763 = vmatpush1.msra.mxu0 %v571
          %764 = vmatprep.subr.mxu0 %v578
          %765 = vmatpush1.msra.mxu0 %v577
          %766 = vmatprep.subr.mxu0 %v584
          %767 = vmatpush1.msra.mxu0 %v583
          %768 = vmatprep.subr.mxu0 %v590
          %769 = vmatpush1.msra.mxu0 %v589
          %770 = vmatprep.subr.mxu0 %v596
          %771 = vmatpush1.msra.mxu0 %v595
          %772 = vmatprep.mubr.f32.mxu0 %v404
          %773 = vmatmul.mubr.f32.gmra.mrb[0].mxu0 %v403
          %v774 = vpop.f32.mrb[0].mxu0
          %v775 = vadd.f32 %v612, %v774
          %v776 = vpop.f32.mrb[0].mxu0
          %v777 = vadd.f32 %v616, %v776
          %778 = vmatprep.mubr.f32.mxu0 %v406
          %779 = vmatmul.mubr.f32.gmra.mrb[0].mxu0 %v405
          %v780 = vpop.f32.mrb[0].mxu0
          %v781 = vadd.f32 %v612, %v780
          %v782 = vpop.f32.mrb[0].mxu0
          %v783 = vadd.f32 %v616, %v782
          %784 = vdwg.mxu0
          %785 = vmatprep.subr.mxu0 %v412
          %786 = vmatpush1.msra.mxu0 %v411
          %787 = vmatprep.subr.mxu0 %v418
          %788 = vmatpush1.msra.mxu0 %v417
          %789 = vmatprep.subr.mxu0 %v424
          %790 = vmatpush1.msra.mxu0 %v423
          %791 = vmatprep.subr.mxu0 %v430
          %792 = vmatpush1.msra.mxu0 %v429
          %793 = vmatprep.subr.mxu0 %v436
          %794 = vmatpush1.msra.mxu0 %v435
          %795 = vmatprep.subr.mxu0 %v442
          %796 = vmatpush1.msra.mxu0 %v441
          %797 = vmatprep.subr.mxu0 %v448
          %798 = vmatpush1.msra.mxu0 %v447
          %799 = vmatprep.subr.mxu0 %v454
          %800 = vmatpush1.msra.mxu0 %v453
          %801 = vmatprep.subr.mxu0 %v460
          %802 = vmatpush1.msra.mxu0 %v459
          %803 = vmatprep.subr.mxu0 %v466
          %804 = vmatpush1.msra.mxu0 %v465
          %805 = vmatprep.subr.mxu0 %v472
          %806 = vmatpush1.msra.mxu0 %v471
          %807 = vmatprep.subr.mxu0 %v478
          %808 = vmatpush1.msra.mxu0 %v477
          %809 = vmatprep.subr.mxu0 %v484
          %810 = vmatpush1.msra.mxu0 %v483
          %811 = vmatprep.subr.mxu0 %v490
          %812 = vmatpush1.msra.mxu0 %v489
          %813 = vmatprep.subr.mxu0 %v496
          %814 = vmatpush1.msra.mxu0 %v495
          %815 = vmatprep.subr.mxu0 %v502
          %816 = vmatpush1.msra.mxu0 %v501
          %817 = vmatprep.subr.mxu0 %v508
          %818 = vmatpush1.msra.mxu0 %v507
          %819 = vmatprep.subr.mxu0 %v514
          %820 = vmatpush1.msra.mxu0 %v513
          %821 = vmatprep.subr.mxu0 %v520
          %822 = vmatpush1.msra.mxu0 %v519
          %823 = vmatprep.subr.mxu0 %v526
          %824 = vmatpush1.msra.mxu0 %v525
          %825 = vmatprep.subr.mxu0 %v532
          %826 = vmatpush1.msra.mxu0 %v531
          %827 = vmatprep.subr.mxu0 %v538
          %828 = vmatpush1.msra.mxu0 %v537
          %829 = vmatprep.subr.mxu0 %v544
          %830 = vmatpush1.msra.mxu0 %v543
          %831 = vmatprep.subr.mxu0 %v550
          %832 = vmatpush1.msra.mxu0 %v549
          %833 = vmatprep.subr.mxu0 %v556
          %834 = vmatpush1.msra.mxu0 %v555
          %835 = vmatprep.subr.mxu0 %v562
          %836 = vmatpush1.msra.mxu0 %v561
          %837 = vmatprep.subr.mxu0 %v568
          %838 = vmatpush1.msra.mxu0 %v567
          %839 = vmatprep.subr.mxu0 %v574
          %840 = vmatpush1.msra.mxu0 %v573
          %841 = vmatprep.subr.mxu0 %v580
          %842 = vmatpush1.msra.mxu0 %v579
          %843 = vmatprep.subr.mxu0 %v586
          %844 = vmatpush1.msra.mxu0 %v585
          %845 = vmatprep.subr.mxu0 %v592
          %846 = vmatpush1.msra.mxu0 %v591
          %847 = vmatprep.subr.mxu0 %v598
          %848 = vmatpush1.msra.mxu0 %v597
          %849 = vmatprep.mubr.f32.mxu0 %v404
          %850 = vmatmul.mubr.f32.gmra.mrb[0].mxu0 %v403
          %v851 = vpop.f32.mrb[0].mxu0
          %v852 = vadd.f32 %v620, %v851
          %v853 = vpop.f32.mrb[0].mxu0
          %v854 = vadd.f32 %v624, %v853
          %855 = vmatprep.mubr.f32.mxu0 %v406
          %856 = vmatmul.mubr.f32.gmra.mrb[0].mxu0 %v405
          %v857 = vpop.f32.mrb[0].mxu0
          %v858 = vadd.f32 %v620, %v857
          %v859 = vpop.f32.mrb[0].mxu0
          %v860 = vadd.f32 %v624, %v859
          %861 = vdwg.mxu0
          %862 = vmatprep.subr.mxu0 0.0
          %863 = vmatpush1.xpose.msra.mxu0 %v775
          %864 = vmatprep.subr.mxu0 0.0
          %865 = vmatpush1.xpose.msra.mxu0 0.0
          %866 = vmatprep.subr.mxu0 0.0
          %867 = vmatpush1.xpose.msra.mxu0 0.0
          %868 = vmatprep.subr.mxu0 0.0
          %869 = vmatpush1.xpose.msra.mxu0 0.0
          %870 = vmatprep.subr.mxu0 0.0
          %871 = vmatpush1.xpose.msra.mxu0 0.0
          %872 = vmatprep.subr.mxu0 0.0
          %873 = vmatpush1.xpose.msra.mxu0 0.0
          %874 = vmatprep.subr.mxu0 0.0
          %875 = vmatpush1.xpose.msra.mxu0 0.0
          %876 = vmatprep.subr.mxu0 0.0
          %877 = vmatpush1.xpose.msra.mxu0 0.0
          %878 = vmatprep.subr.mxu0 0.0
          %879 = vmatpush1.xpose.msra.mxu0 0.0
          %880 = vmatprep.subr.mxu0 0.0
          %881 = vmatpush1.xpose.msra.mxu0 0.0
          %882 = vmatprep.subr.mxu0 0.0
          %883 = vmatpush1.xpose.msra.mxu0 0.0
          %884 = vmatprep.subr.mxu0 0.0
          %885 = vmatpush1.xpose.msra.mxu0 0.0
          %886 = vmatprep.subr.mxu0 0.0
          %887 = vmatpush1.xpose.msra.mxu0 0.0
          %888 = vmatprep.subr.mxu0 0.0
          %889 = vmatpush1.xpose.msra.mxu0 0.0
          %890 = vmatprep.subr.mxu0 0.0
          %891 = vmatpush1.xpose.msra.mxu0 0.0
          %892 = vmatprep.subr.mxu0 0.0
          %893 = vmatpush1.xpose.msra.mxu0 0.0
          %894 = vmatprep.subr.mxu0 0.0
          %895 = vmatpush1.xpose.msra.mxu0 0.0
          %896 = vmatprep.subr.mxu0 0.0
          %897 = vmatpush1.xpose.msra.mxu0 0.0
          %898 = vmatprep.subr.mxu0 0.0
          %899 = vmatpush1.xpose.msra.mxu0 0.0
          %900 = vmatprep.subr.mxu0 0.0
          %901 = vmatpush1.xpose.msra.mxu0 0.0
          %902 = vmatprep.subr.mxu0 0.0
          %903 = vmatpush1.xpose.msra.mxu0 0.0
          %904 = vmatprep.subr.mxu0 0.0
          %905 = vmatpush1.xpose.msra.mxu0 0.0
          %906 = vmatprep.subr.mxu0 0.0
          %907 = vmatpush1.xpose.msra.mxu0 0.0
          %908 = vmatprep.subr.mxu0 0.0
          %909 = vmatpush1.xpose.msra.mxu0 0.0
          %910 = vmatprep.subr.mxu0 0.0
          %911 = vmatpush1.xpose.msra.mxu0 0.0
          %912 = vmatprep.subr.mxu0 0.0
          %913 = vmatpush1.xpose.msra.mxu0 0.0
          %914 = vmatprep.subr.mxu0 0.0
          %915 = vmatpush1.xpose.msra.mxu0 0.0
          %916 = vmatprep.subr.mxu0 0.0
          %917 = vmatpush1.xpose.msra.mxu0 0.0
          %918 = vmatprep.subr.mxu0 0.0
          %919 = vmatpush1.xpose.msra.mxu0 0.0
          %920 = vmatprep.subr.mxu0 0.0
          %921 = vmatpush1.xpose.msra.mxu0 0.0
          %922 = vmatprep.subr.mxu0 0.0
          %923 = vmatpush1.xpose.msra.mxu0 0.0
          %924 = vmatprep.subr.mxu0 0.0
          %925 = vmatpush1.xpose.msra.mxu0 0.0
          %926 = vmatprep.mubr.f32.mxu0 0.0
          %927 = vmatmul.mubr.f32.gmra.mrb[0].mxu0 %v698
          %v928 = vpop.f32.mrb[0].mxu0
          %v929 = vadd.f32 0.0, %v928
          %v930 = vpop.f32.mrb[0].mxu0
          %931 = vmatprep.mubr.f32.mxu0 0.0
          %932 = vmatmul.mubr.f32.gmra.mrb[0].mxu0 %v704
          %v933 = vpop.f32.mrb[0].mxu0
          %v934 = vadd.f32 0.0, %v933
          %v935 = vpop.f32.mrb[0].mxu0
          %936 = vdwg.mxu0
          %937 = vmatprep.subr.mxu0 0.0
          %938 = vmatpush1.xpose.msra.mxu0 %v777
          %939 = vmatprep.subr.mxu0 0.0
          %940 = vmatpush1.xpose.msra.mxu0 0.0
          %941 = vmatprep.subr.mxu0 0.0
          %942 = vmatpush1.xpose.msra.mxu0 0.0
          %943 = vmatprep.subr.mxu0 0.0
          %944 = vmatpush1.xpose.msra.mxu0 0.0
          %945 = vmatprep.subr.mxu0 0.0
          %946 = vmatpush1.xpose.msra.mxu0 0.0
          %947 = vmatprep.subr.mxu0 0.0
          %948 = vmatpush1.xpose.msra.mxu0 0.0
          %949 = vmatprep.subr.mxu0 0.0
          %950 = vmatpush1.xpose.msra.mxu0 0.0
          %951 = vmatprep.subr.mxu0 0.0
          %952 = vmatpush1.xpose.msra.mxu0 0.0
          %953 = vmatprep.subr.mxu0 0.0
          %954 = vmatpush1.xpose.msra.mxu0 0.0
          %955 = vmatprep.subr.mxu0 0.0
          %956 = vmatpush1.xpose.msra.mxu0 0.0
          %957 = vmatprep.subr.mxu0 0.0
          %958 = vmatpush1.xpose.msra.mxu0 0.0
          %959 = vmatprep.subr.mxu0 0.0
          %960 = vmatpush1.xpose.msra.mxu0 0.0
          %961 = vmatprep.subr.mxu0 0.0
          %962 = vmatpush1.xpose.msra.mxu0 0.0
          %963 = vmatprep.subr.mxu0 0.0
          %964 = vmatpush1.xpose.msra.mxu0 0.0
          %965 = vmatprep.subr.mxu0 0.0
          %966 = vmatpush1.xpose.msra.mxu0 0.0
          %967 = vmatprep.subr.mxu0 0.0
          %968 = vmatpush1.xpose.msra.mxu0 0.0
          %969 = vmatprep.subr.mxu0 0.0
          %970 = vmatpush1.xpose.msra.mxu0 0.0
          %971 = vmatprep.subr.mxu0 0.0
          %972 = vmatpush1.xpose.msra.mxu0 0.0
          %973 = vmatprep.subr.mxu0 0.0
          %974 = vmatpush1.xpose.msra.mxu0 0.0
          %975 = vmatprep.subr.mxu0 0.0
          %976 = vmatpush1.xpose.msra.mxu0 0.0
          %977 = vmatprep.subr.mxu0 0.0
          %978 = vmatpush1.xpose.msra.mxu0 0.0
          %979 = vmatprep.subr.mxu0 0.0
          %980 = vmatpush1.xpose.msra.mxu0 0.0
          %981 = vmatprep.subr.mxu0 0.0
          %982 = vmatpush1.xpose.msra.mxu0 0.0
          %983 = vmatprep.subr.mxu0 0.0
          %984 = vmatpush1.xpose.msra.mxu0 0.0
          %985 = vmatprep.subr.mxu0 0.0
          %986 = vmatpush1.xpose.msra.mxu0 0.0
          %987 = vmatprep.subr.mxu0 0.0
          %988 = vmatpush1.xpose.msra.mxu0 0.0
          %989 = vmatprep.subr.mxu0 0.0
          %990 = vmatpush1.xpose.msra.mxu0 0.0
          %991 = vmatprep.subr.mxu0 0.0
          %992 = vmatpush1.xpose.msra.mxu0 0.0
          %993 = vmatprep.subr.mxu0 0.0
          %994 = vmatpush1.xpose.msra.mxu0 0.0
          %995 = vmatprep.subr.mxu0 0.0
          %996 = vmatpush1.xpose.msra.mxu0 0.0
          %997 = vmatprep.subr.mxu0 0.0
          %998 = vmatpush1.xpose.msra.mxu0 0.0
          %999 = vmatprep.subr.mxu0 0.0
          %1000 = vmatpush1.xpose.msra.mxu0 0.0
          %1001 = vmatprep.mubr.f32.mxu0 0.0
          %1002 = vmatmul.mubr.f32.gmra.mrb[0].mxu0 %v700
          %v1003 = vpop.f32.mrb[0].mxu0
          %v1004 = vadd.f32 0.0, %v1003
          %v1005 = vpop.f32.mrb[0].mxu0
          %1006 = vmatprep.mubr.f32.mxu0 0.0
          %1007 = vmatmul.mubr.f32.gmra.mrb[0].mxu0 %v706
          %v1008 = vpop.f32.mrb[0].mxu0
          %v1009 = vadd.f32 0.0, %v1008
          %v1010 = vpop.f32.mrb[0].mxu0
          %1011 = vdwg.mxu0
          %vm1012 = vcmask 64512
          %v1013 = vsel %vm1012, %v929, -inf
          %1014 = vmax.xlane.f32.xlu0 %v1013
          %v1015 = vpop.xlane.xlu0 %1014
          %v1016 = vsel %vm1012, %v934, -inf
          %1017 = vmax.xlane.f32.xlu0 %v1016
          %v1018 = vpop.xlane.xlu0 %1017
          %v1019 = vsel %vm1012, %v1004, -inf
          %1020 = vmax.xlane.f32.xlu0 %v1019
          %v1021 = vpop.xlane.xlu0 %1020
          %v1022 = vsel %vm1012, %v1009, -inf
          %1023 = vmax.xlane.f32.xlu0 %v1022
          %v1024 = vpop.xlane.xlu0 %1023
          %v1025 = vsub.f32 %v929, %v1015
          %v1026 = vsub.f32 %v934, %v1018
          %v1027 = vsub.f32 %v1004, %v1021
          %v1028 = vsub.f32 %v1009, %v1024
          %v1029 = vmul.f32 %v1025, 1.442695
          %v1030 = vpow.pop %v1029
          %v1031 = vmul.f32 %v1026, 1.442695
          %v1032 = vpow.pop %v1031
          %v1033 = vmul.f32 %v1027, 1.442695
          %v1034 = vpow.pop %v1033
          %v1035 = vmul.f32 %v1028, 1.442695
          %v1036 = vpow.pop %v1035
          %v1037 = vsel %vm1012, %v1030, 0.0
          %1038 = vadd.xlane.f32.xlu0 %v1037
          %v1039 = vpop.xlane.xlu0 %1038
          %v1040 = vsel %vm1012, %v1032, 0.0
          %1041 = vadd.xlane.f32.xlu0 %v1040
          %v1042 = vpop.xlane.xlu0 %1041
          %v1043 = vsel %vm1012, %v1034, 0.0
          %1044 = vadd.xlane.f32.xlu0 %v1043
          %v1045 = vpop.xlane.xlu0 %1044
          %v1046 = vsel %vm1012, %v1036, 0.0
          %1047 = vadd.xlane.f32.xlu0 %v1046
          %v1048 = vpop.xlane.xlu0 %1047
          %v1050 = vsel %vm1012, %v1030, 0
          %v1053 = vsel %vm1012, %v1032, 0
          %1055 = vmatprep.subr.mxu0 0.0
          %1056 = vmatpush1.msra.mxu0 %v852
          %1057 = vmatprep.subr.mxu0 0.0
          %1058 = vmatpush1.msra.mxu0 0.0
          %1059 = vmatprep.subr.mxu0 0.0
          %1060 = vmatpush1.msra.mxu0 0.0
          %1061 = vmatprep.subr.mxu0 0.0
          %1062 = vmatpush1.msra.mxu0 0.0
          %1063 = vmatprep.subr.mxu0 0.0
          %1064 = vmatpush1.msra.mxu0 0.0
          %1065 = vmatprep.subr.mxu0 0.0
          %1066 = vmatpush1.msra.mxu0 0.0
          %1067 = vmatprep.subr.mxu0 0.0
          %1068 = vmatpush1.msra.mxu0 0.0
          %1069 = vmatprep.subr.mxu0 0.0
          %1070 = vmatpush1.msra.mxu0 0.0
          %1071 = vmatprep.subr.mxu0 0.0
          %1072 = vmatpush1.msra.mxu0 0.0
          %1073 = vmatprep.subr.mxu0 0.0
          %1074 = vmatpush1.msra.mxu0 0.0
          %1075 = vmatprep.subr.mxu0 0.0
          %1076 = vmatpush1.msra.mxu0 0.0
          %1077 = vmatprep.subr.mxu0 0.0
          %1078 = vmatpush1.msra.mxu0 0.0
          %1079 = vmatprep.subr.mxu0 0.0
          %1080 = vmatpush1.msra.mxu0 0.0
          %1081 = vmatprep.subr.mxu0 0.0
          %1082 = vmatpush1.msra.mxu0 0.0
          %1083 = vmatprep.subr.mxu0 0.0
          %1084 = vmatpush1.msra.mxu0 0.0
          %1085 = vmatprep.subr.mxu0 0.0
          %1086 = vmatpush1.msra.mxu0 0.0
          %1087 = vmatprep.subr.mxu0 0.0
          %1088 = vmatpush1.msra.mxu0 0.0
          %1089 = vmatprep.subr.mxu0 0.0
          %1090 = vmatpush1.msra.mxu0 0.0
          %1091 = vmatprep.subr.mxu0 0.0
          %1092 = vmatpush1.msra.mxu0 0.0
          %1093 = vmatprep.subr.mxu0 0.0
          %1094 = vmatpush1.msra.mxu0 0.0
          %1095 = vmatprep.subr.mxu0 0.0
          %1096 = vmatpush1.msra.mxu0 0.0
          %1097 = vmatprep.subr.mxu0 0.0
          %1098 = vmatpush1.msra.mxu0 0.0
          %1099 = vmatprep.subr.mxu0 0.0
          %1100 = vmatpush1.msra.mxu0 0.0
          %1101 = vmatprep.subr.mxu0 0.0
          %1102 = vmatpush1.msra.mxu0 0.0
          %1103 = vmatprep.subr.mxu0 0.0
          %1104 = vmatpush1.msra.mxu0 0.0
          %1105 = vmatprep.subr.mxu0 0.0
          %1106 = vmatpush1.msra.mxu0 0.0
          %1107 = vmatprep.subr.mxu0 0.0
          %1108 = vmatpush1.msra.mxu0 0.0
          %1109 = vmatprep.subr.mxu0 0.0
          %1110 = vmatpush1.msra.mxu0 0.0
          %1111 = vmatprep.subr.mxu0 0.0
          %1112 = vmatpush1.msra.mxu0 0.0
          %1113 = vmatprep.subr.mxu0 0.0
          %1114 = vmatpush1.msra.mxu0 0.0
          %1115 = vmatprep.subr.mxu0 0.0
          %1116 = vmatpush1.msra.mxu0 0.0
          %1117 = vmatprep.subr.mxu0 0.0
          %1118 = vmatpush1.msra.mxu0 0.0
          %1119 = vmatprep.mubr.f32.mxu0 0.0
          %1120 = vmatmul.mubr.f32.gmra.mrb[0].mxu0 %v1050
          %v1121 = vpop.f32.mrb[0].mxu0
          %v1122 = vadd.f32 0.0, %v1121
          %v1123 = vpop.f32.mrb[0].mxu0
          %1124 = vmatprep.mubr.f32.mxu0 0.0
          %1125 = vmatmul.mubr.f32.gmra.mrb[0].mxu0 %v1053
          %v1126 = vpop.f32.mrb[0].mxu0
          %v1127 = vadd.f32 0.0, %v1126
          %v1128 = vpop.f32.mrb[0].mxu0
          %1129 = vdwg.mxu0
          %v1131 = vsel %vm1012, %v1034, 0
          %v1134 = vsel %vm1012, %v1036, 0
          %1136 = vmatprep.subr.mxu0 0.0
          %1137 = vmatpush1.msra.mxu0 %v854
          %1138 = vmatprep.subr.mxu0 0.0
          %1139 = vmatpush1.msra.mxu0 0.0
          %1140 = vmatprep.subr.mxu0 0.0
          %1141 = vmatpush1.msra.mxu0 0.0
          %1142 = vmatprep.subr.mxu0 0.0
          %1143 = vmatpush1.msra.mxu0 0.0
          %1144 = vmatprep.subr.mxu0 0.0
          %1145 = vmatpush1.msra.mxu0 0.0
          %1146 = vmatprep.subr.mxu0 0.0
          %1147 = vmatpush1.msra.mxu0 0.0
          %1148 = vmatprep.subr.mxu0 0.0
          %1149 = vmatpush1.msra.mxu0 0.0
          %1150 = vmatprep.subr.mxu0 0.0
          %1151 = vmatpush1.msra.mxu0 0.0
          %1152 = vmatprep.subr.mxu0 0.0
          %1153 = vmatpush1.msra.mxu0 0.0
          %1154 = vmatprep.subr.mxu0 0.0
          %1155 = vmatpush1.msra.mxu0 0.0
          %1156 = vmatprep.subr.mxu0 0.0
          %1157 = vmatpush1.msra.mxu0 0.0
          %1158 = vmatprep.subr.mxu0 0.0
          %1159 = vmatpush1.msra.mxu0 0.0
          %1160 = vmatprep.subr.mxu0 0.0
          %1161 = vmatpush1.msra.mxu0 0.0
          %1162 = vmatprep.subr.mxu0 0.0
          %1163 = vmatpush1.msra.mxu0 0.0
          %1164 = vmatprep.subr.mxu0 0.0
          %1165 = vmatpush1.msra.mxu0 0.0
          %1166 = vmatprep.subr.mxu0 0.0
          %1167 = vmatpush1.msra.mxu0 0.0
          %1168 = vmatprep.subr.mxu0 0.0
          %1169 = vmatpush1.msra.mxu0 0.0
          %1170 = vmatprep.subr.mxu0 0.0
          %1171 = vmatpush1.msra.mxu0 0.0
          %1172 = vmatprep.subr.mxu0 0.0
          %1173 = vmatpush1.msra.mxu0 0.0
          %1174 = vmatprep.subr.mxu0 0.0
          %1175 = vmatpush1.msra.mxu0 0.0
          %1176 = vmatprep.subr.mxu0 0.0
          %1177 = vmatpush1.msra.mxu0 0.0
          %1178 = vmatprep.subr.mxu0 0.0
          %1179 = vmatpush1.msra.mxu0 0.0
          %1180 = vmatprep.subr.mxu0 0.0
          %1181 = vmatpush1.msra.mxu0 0.0
          %1182 = vmatprep.subr.mxu0 0.0
          %1183 = vmatpush1.msra.mxu0 0.0
          %1184 = vmatprep.subr.mxu0 0.0
          %1185 = vmatpush1.msra.mxu0 0.0
          %1186 = vmatprep.subr.mxu0 0.0
          %1187 = vmatpush1.msra.mxu0 0.0
          %1188 = vmatprep.subr.mxu0 0.0
          %1189 = vmatpush1.msra.mxu0 0.0
          %1190 = vmatprep.subr.mxu0 0.0
          %1191 = vmatpush1.msra.mxu0 0.0
          %1192 = vmatprep.subr.mxu0 0.0
          %1193 = vmatpush1.msra.mxu0 0.0
          %1194 = vmatprep.subr.mxu0 0.0
          %1195 = vmatpush1.msra.mxu0 0.0
          %1196 = vmatprep.subr.mxu0 0.0
          %1197 = vmatpush1.msra.mxu0 0.0
          %1198 = vmatprep.subr.mxu0 0.0
          %1199 = vmatpush1.msra.mxu0 0.0
          %1200 = vmatprep.mubr.f32.mxu0 0.0
          %1201 = vmatmul.mubr.f32.gmra.mrb[0].mxu0 %v1131
          %v1202 = vpop.f32.mrb[0].mxu0
          %v1203 = vadd.f32 0.0, %v1202
          %v1204 = vpop.f32.mrb[0].mxu0
          %1205 = vmatprep.mubr.f32.mxu0 0.0
          %1206 = vmatmul.mubr.f32.gmra.mrb[0].mxu0 %v1134
          %v1207 = vpop.f32.mrb[0].mxu0
          %v1208 = vadd.f32 0.0, %v1207
          %v1209 = vpop.f32.mrb[0].mxu0
          %1210 = vdwg.mxu0
          %1211 = vmatprep.subr.mxu0 0.0
          %1212 = vmatpush1.xpose.msra.mxu0 %v781
          %1213 = vmatprep.subr.mxu0 0.0
          %1214 = vmatpush1.xpose.msra.mxu0 0.0
          %1215 = vmatprep.subr.mxu0 0.0
          %1216 = vmatpush1.xpose.msra.mxu0 0.0
          %1217 = vmatprep.subr.mxu0 0.0
          %1218 = vmatpush1.xpose.msra.mxu0 0.0
          %1219 = vmatprep.subr.mxu0 0.0
          %1220 = vmatpush1.xpose.msra.mxu0 0.0
          %1221 = vmatprep.subr.mxu0 0.0
          %1222 = vmatpush1.xpose.msra.mxu0 0.0
          %1223 = vmatprep.subr.mxu0 0.0
          %1224 = vmatpush1.xpose.msra.mxu0 0.0
          %1225 = vmatprep.subr.mxu0 0.0
          %1226 = vmatpush1.xpose.msra.mxu0 0.0
          %1227 = vmatprep.subr.mxu0 0.0
          %1228 = vmatpush1.xpose.msra.mxu0 0.0
          %1229 = vmatprep.subr.mxu0 0.0
          %1230 = vmatpush1.xpose.msra.mxu0 0.0
          %1231 = vmatprep.subr.mxu0 0.0
          %1232 = vmatpush1.xpose.msra.mxu0 0.0
          %1233 = vmatprep.subr.mxu0 0.0
          %1234 = vmatpush1.xpose.msra.mxu0 0.0
          %1235 = vmatprep.subr.mxu0 0.0
          %1236 = vmatpush1.xpose.msra.mxu0 0.0
          %1237 = vmatprep.subr.mxu0 0.0
          %1238 = vmatpush1.xpose.msra.mxu0 0.0
          %1239 = vmatprep.subr.mxu0 0.0
          %1240 = vmatpush1.xpose.msra.mxu0 0.0
          %1241 = vmatprep.subr.mxu0 0.0
          %1242 = vmatpush1.xpose.msra.mxu0 0.0
          %1243 = vmatprep.subr.mxu0 0.0
          %1244 = vmatpush1.xpose.msra.mxu0 0.0
          %1245 = vmatprep.subr.mxu0 0.0
          %1246 = vmatpush1.xpose.msra.mxu0 0.0
          %1247 = vmatprep.subr.mxu0 0.0
          %1248 = vmatpush1.xpose.msra.mxu0 0.0
          %1249 = vmatprep.subr.mxu0 0.0
          %1250 = vmatpush1.xpose.msra.mxu0 0.0
          %1251 = vmatprep.subr.mxu0 0.0
          %1252 = vmatpush1.xpose.msra.mxu0 0.0
          %1253 = vmatprep.subr.mxu0 0.0
          %1254 = vmatpush1.xpose.msra.mxu0 0.0
          %1255 = vmatprep.subr.mxu0 0.0
          %1256 = vmatpush1.xpose.msra.mxu0 0.0
          %1257 = vmatprep.subr.mxu0 0.0
          %1258 = vmatpush1.xpose.msra.mxu0 0.0
          %1259 = vmatprep.subr.mxu0 0.0
          %1260 = vmatpush1.xpose.msra.mxu0 0.0
          %1261 = vmatprep.subr.mxu0 0.0
          %1262 = vmatpush1.xpose.msra.mxu0 0.0
          %1263 = vmatprep.subr.mxu0 0.0
          %1264 = vmatpush1.xpose.msra.mxu0 0.0
          %1265 = vmatprep.subr.mxu0 0.0
          %1266 = vmatpush1.xpose.msra.mxu0 0.0
          %1267 = vmatprep.subr.mxu0 0.0
          %1268 = vmatpush1.xpose.msra.mxu0 0.0
          %1269 = vmatprep.subr.mxu0 0.0
          %1270 = vmatpush1.xpose.msra.mxu0 0.0
          %1271 = vmatprep.subr.mxu0 0.0
          %1272 = vmatpush1.xpose.msra.mxu0 0.0
          %1273 = vmatprep.subr.mxu0 0.0
          %1274 = vmatpush1.xpose.msra.mxu0 0.0
          %1275 = vmatprep.mubr.f32.mxu0 0.0
          %1276 = vmatmul.mubr.f32.gmra.mrb[0].mxu0 %v698
          %v1277 = vpop.f32.mrb[0].mxu0
          %v1278 = vadd.f32 0.0, %v1277
          %v1279 = vpop.f32.mrb[0].mxu0
          %1280 = vmatprep.mubr.f32.mxu0 0.0
          %1281 = vmatmul.mubr.f32.gmra.mrb[0].mxu0 %v704
          %v1282 = vpop.f32.mrb[0].mxu0
          %v1283 = vadd.f32 0.0, %v1282
          %v1284 = vpop.f32.mrb[0].mxu0
          %1285 = vdwg.mxu0
          %1286 = vmatprep.subr.mxu0 0.0
          %1287 = vmatpush1.xpose.msra.mxu0 %v783
          %1288 = vmatprep.subr.mxu0 0.0
          %1289 = vmatpush1.xpose.msra.mxu0 0.0
          %1290 = vmatprep.subr.mxu0 0.0
          %1291 = vmatpush1.xpose.msra.mxu0 0.0
          %1292 = vmatprep.subr.mxu0 0.0
          %1293 = vmatpush1.xpose.msra.mxu0 0.0
          %1294 = vmatprep.subr.mxu0 0.0
          %1295 = vmatpush1.xpose.msra.mxu0 0.0
          %1296 = vmatprep.subr.mxu0 0.0
          %1297 = vmatpush1.xpose.msra.mxu0 0.0
          %1298 = vmatprep.subr.mxu0 0.0
          %1299 = vmatpush1.xpose.msra.mxu0 0.0
          %1300 = vmatprep.subr.mxu0 0.0
          %1301 = vmatpush1.xpose.msra.mxu0 0.0
          %1302 = vmatprep.subr.mxu0 0.0
          %1303 = vmatpush1.xpose.msra.mxu0 0.0
          %1304 = vmatprep.subr.mxu0 0.0
          %1305 = vmatpush1.xpose.msra.mxu0 0.0
          %1306 = vmatprep.subr.mxu0 0.0
          %1307 = vmatpush1.xpose.msra.mxu0 0.0
          %1308 = vmatprep.subr.mxu0 0.0
          %1309 = vmatpush1.xpose.msra.mxu0 0.0
          %1310 = vmatprep.subr.mxu0 0.0
          %1311 = vmatpush1.xpose.msra.mxu0 0.0
          %1312 = vmatprep.subr.mxu0 0.0
          %1313 = vmatpush1.xpose.msra.mxu0 0.0
          %1314 = vmatprep.subr.mxu0 0.0
          %1315 = vmatpush1.xpose.msra.mxu0 0.0
          %1316 = vmatprep.subr.mxu0 0.0
          %1317 = vmatpush1.xpose.msra.mxu0 0.0
          %1318 = vmatprep.subr.mxu0 0.0
          %1319 = vmatpush1.xpose.msra.mxu0 0.0
          %1320 = vmatprep.subr.mxu0 0.0
          %1321 = vmatpush1.xpose.msra.mxu0 0.0
          %1322 = vmatprep.subr.mxu0 0.0
          %1323 = vmatpush1.xpose.msra.mxu0 0.0
          %1324 = vmatprep.subr.mxu0 0.0
          %1325 = vmatpush1.xpose.msra.mxu0 0.0
          %1326 = vmatprep.subr.mxu0 0.0
          %1327 = vmatpush1.xpose.msra.mxu0 0.0
          %1328 = vmatprep.subr.mxu0 0.0
          %1329 = vmatpush1.xpose.msra.mxu0 0.0
          %1330 = vmatprep.subr.mxu0 0.0
          %1331 = vmatpush1.xpose.msra.mxu0 0.0
          %1332 = vmatprep.subr.mxu0 0.0
          %1333 = vmatpush1.xpose.msra.mxu0 0.0
          %1334 = vmatprep.subr.mxu0 0.0
          %1335 = vmatpush1.xpose.msra.mxu0 0.0
          %1336 = vmatprep.subr.mxu0 0.0
          %1337 = vmatpush1.xpose.msra.mxu0 0.0
          %1338 = vmatprep.subr.mxu0 0.0
          %1339 = vmatpush1.xpose.msra.mxu0 0.0
          %1340 = vmatprep.subr.mxu0 0.0
          %1341 = vmatpush1.xpose.msra.mxu0 0.0
          %1342 = vmatprep.subr.mxu0 0.0
          %1343 = vmatpush1.xpose.msra.mxu0 0.0
          %1344 = vmatprep.subr.mxu0 0.0
          %1345 = vmatpush1.xpose.msra.mxu0 0.0
          %1346 = vmatprep.subr.mxu0 0.0
          %1347 = vmatpush1.xpose.msra.mxu0 0.0
          %1348 = vmatprep.subr.mxu0 0.0
          %1349 = vmatpush1.xpose.msra.mxu0 0.0
          %1350 = vmatprep.mubr.f32.mxu0 0.0
          %1351 = vmatmul.mubr.f32.gmra.mrb[0].mxu0 %v700
          %v1352 = vpop.f32.mrb[0].mxu0
          %v1353 = vadd.f32 0.0, %v1352
          %v1354 = vpop.f32.mrb[0].mxu0
          %1355 = vmatprep.mubr.f32.mxu0 0.0
          %1356 = vmatmul.mubr.f32.gmra.mrb[0].mxu0 %v706
          %v1357 = vpop.f32.mrb[0].mxu0
          %v1358 = vadd.f32 0.0, %v1357
          %v1359 = vpop.f32.mrb[0].mxu0
          %1360 = vdwg.mxu0
          %v1361 = vsel %vm1012, %v1278, -inf
          %1362 = vmax.xlane.f32.xlu0 %v1361
          %v1363 = vpop.xlane.xlu0 %1362
          %v1364 = vsel %vm1012, %v1283, -inf
          %1365 = vmax.xlane.f32.xlu0 %v1364
          %v1366 = vpop.xlane.xlu0 %1365
          %v1367 = vsel %vm1012, %v1353, -inf
          %1368 = vmax.xlane.f32.xlu0 %v1367
          %v1369 = vpop.xlane.xlu0 %1368
          %v1370 = vsel %vm1012, %v1358, -inf
          %1371 = vmax.xlane.f32.xlu0 %v1370
          %v1372 = vpop.xlane.xlu0 %1371
          %v1373 = vmax.f32 %v1015, %v1363
          %v1374 = vmax.f32 %v1018, %v1366
          %v1375 = vmax.f32 %v1021, %v1369
          %v1376 = vmax.f32 %v1024, %v1372
          %v1377 = vsub.f32 %v1015, %v1373
          %v1378 = vsub.f32 %v1018, %v1374
          %v1379 = vsub.f32 %v1021, %v1375
          %v1380 = vsub.f32 %v1024, %v1376
          %v1381 = vmul.f32 %v1377, 1.442695
          %v1382 = vpow.pop %v1381
          %v1383 = vmul.f32 %v1378, 1.442695
          %v1384 = vpow.pop %v1383
          %v1385 = vmul.f32 %v1379, 1.442695
          %v1386 = vpow.pop %v1385
          %v1387 = vmul.f32 %v1380, 1.442695
          %v1388 = vpow.pop %v1387
          %v1389 = vsub.f32 %v1278, %v1373
          %v1390 = vsub.f32 %v1283, %v1374
          %v1391 = vsub.f32 %v1353, %v1375
          %v1392 = vsub.f32 %v1358, %v1376
          %v1393 = vmul.f32 %v1389, 1.442695
          %v1394 = vpow.pop %v1393
          %v1395 = vmul.f32 %v1390, 1.442695
          %v1396 = vpow.pop %v1395
          %v1397 = vmul.f32 %v1391, 1.442695
          %v1398 = vpow.pop %v1397
          %v1399 = vmul.f32 %v1392, 1.442695
          %v1400 = vpow.pop %v1399
          %v1401 = vmul.f32 %v1382, %v1039
          %v1402 = vmul.f32 %v1384, %v1042
          %v1403 = vmul.f32 %v1386, %v1045
          %v1404 = vmul.f32 %v1388, %v1048
          %v1405 = vsel %vm1012, %v1394, 0.0
          %1406 = vadd.xlane.f32.xlu0 %v1405
          %v1407 = vpop.xlane.xlu0 %1406
          %v1408 = vsel %vm1012, %v1396, 0.0
          %1409 = vadd.xlane.f32.xlu0 %v1408
          %v1410 = vpop.xlane.xlu0 %1409
          %v1411 = vsel %vm1012, %v1398, 0.0
          %1412 = vadd.xlane.f32.xlu0 %v1411
          %v1413 = vpop.xlane.xlu0 %1412
          %v1414 = vsel %vm1012, %v1400, 0.0
          %1415 = vadd.xlane.f32.xlu0 %v1414
          %v1416 = vpop.xlane.xlu0 %1415
          %v1417 = vadd.f32 %v1401, %v1407
          %v1418 = vadd.f32 %v1402, %v1410
          %v1419 = vadd.f32 %v1403, %v1413
          %v1420 = vadd.f32 %v1404, %v1416
          %v1421 = vmul.f32 %v1382, %v1122
          %v1422 = vmul.f32 %v1384, %v1127
          %v1423 = vmul.f32 %v1386, %v1203
          %v1424 = vmul.f32 %v1388, %v1208
          %v1426 = vsel %vm1012, %v1394, 0
          %v1429 = vsel %vm1012, %v1396, 0
          %1431 = vmatprep.subr.mxu0 0.0
          %1432 = vmatpush1.msra.mxu0 %v858
          %1433 = vmatprep.subr.mxu0 0.0
          %1434 = vmatpush1.msra.mxu0 0.0
          %1435 = vmatprep.subr.mxu0 0.0
          %1436 = vmatpush1.msra.mxu0 0.0
          %1437 = vmatprep.subr.mxu0 0.0
          %1438 = vmatpush1.msra.mxu0 0.0
          %1439 = vmatprep.subr.mxu0 0.0
          %1440 = vmatpush1.msra.mxu0 0.0
          %1441 = vmatprep.subr.mxu0 0.0
          %1442 = vmatpush1.msra.mxu0 0.0
          %1443 = vmatprep.subr.mxu0 0.0
          %1444 = vmatpush1.msra.mxu0 0.0
          %1445 = vmatprep.subr.mxu0 0.0
          %1446 = vmatpush1.msra.mxu0 0.0
          %1447 = vmatprep.subr.mxu0 0.0
          %1448 = vmatpush1.msra.mxu0 0.0
          %1449 = vmatprep.subr.mxu0 0.0
          %1450 = vmatpush1.msra.mxu0 0.0
          %1451 = vmatprep.subr.mxu0 0.0
          %1452 = vmatpush1.msra.mxu0 0.0
          %1453 = vmatprep.subr.mxu0 0.0
          %1454 = vmatpush1.msra.mxu0 0.0
          %1455 = vmatprep.subr.mxu0 0.0
          %1456 = vmatpush1.msra.mxu0 0.0
          %1457 = vmatprep.subr.mxu0 0.0
          %1458 = vmatpush1.msra.mxu0 0.0
          %1459 = vmatprep.subr.mxu0 0.0
          %1460 = vmatpush1.msra.mxu0 0.0
          %1461 = vmatprep.subr.mxu0 0.0
          %1462 = vmatpush1.msra.mxu0 0.0
          %1463 = vmatprep.subr.mxu0 0.0
          %1464 = vmatpush1.msra.mxu0 0.0
          %1465 = vmatprep.subr.mxu0 0.0
          %1466 = vmatpush1.msra.mxu0 0.0
          %1467 = vmatprep.subr.mxu0 0.0
          %1468 = vmatpush1.msra.mxu0 0.0
          %1469 = vmatprep.subr.mxu0 0.0
          %1470 = vmatpush1.msra.mxu0 0.0
          %1471 = vmatprep.subr.mxu0 0.0
          %1472 = vmatpush1.msra.mxu0 0.0
          %1473 = vmatprep.subr.mxu0 0.0
          %1474 = vmatpush1.msra.mxu0 0.0
          %1475 = vmatprep.subr.mxu0 0.0
          %1476 = vmatpush1.msra.mxu0 0.0
          %1477 = vmatprep.subr.mxu0 0.0
          %1478 = vmatpush1.msra.mxu0 0.0
          %1479 = vmatprep.subr.mxu0 0.0
          %1480 = vmatpush1.msra.mxu0 0.0
          %1481 = vmatprep.subr.mxu0 0.0
          %1482 = vmatpush1.msra.mxu0 0.0
          %1483 = vmatprep.subr.mxu0 0.0
          %1484 = vmatpush1.msra.mxu0 0.0
          %1485 = vmatprep.subr.mxu0 0.0
          %1486 = vmatpush1.msra.mxu0 0.0
          %1487 = vmatprep.subr.mxu0 0.0
          %1488 = vmatpush1.msra.mxu0 0.0
          %1489 = vmatprep.subr.mxu0 0.0
          %1490 = vmatpush1.msra.mxu0 0.0
          %1491 = vmatprep.subr.mxu0 0.0
          %1492 = vmatpush1.msra.mxu0 0.0
          %1493 = vmatprep.subr.mxu0 0.0
          %1494 = vmatpush1.msra.mxu0 0.0
          %1495 = vmatprep.mubr.f32.mxu0 0.0
          %1496 = vmatmul.mubr.f32.gmra.mrb[0].mxu0 %v1426
          %v1497 = vpop.f32.mrb[0].mxu0
          %v1498 = vadd.f32 0.0, %v1497
          %v1499 = vpop.f32.mrb[0].mxu0
          %1500 = vmatprep.mubr.f32.mxu0 0.0
          %1501 = vmatmul.mubr.f32.gmra.mrb[0].mxu0 %v1429
          %v1502 = vpop.f32.mrb[0].mxu0
          %v1503 = vadd.f32 0.0, %v1502
          %v1504 = vpop.f32.mrb[0].mxu0
          %1505 = vdwg.mxu0
          %v1507 = vsel %vm1012, %v1398, 0
          %v1510 = vsel %vm1012, %v1400, 0
          %1512 = vmatprep.subr.mxu0 0.0
          %1513 = vmatpush1.msra.mxu0 %v860
          %1514 = vmatprep.subr.mxu0 0.0
          %1515 = vmatpush1.msra.mxu0 0.0
          %1516 = vmatprep.subr.mxu0 0.0
          %1517 = vmatpush1.msra.mxu0 0.0
          %1518 = vmatprep.subr.mxu0 0.0
          %1519 = vmatpush1.msra.mxu0 0.0
          %1520 = vmatprep.subr.mxu0 0.0
          %1521 = vmatpush1.msra.mxu0 0.0
          %1522 = vmatprep.subr.mxu0 0.0
          %1523 = vmatpush1.msra.mxu0 0.0
          %1524 = vmatprep.subr.mxu0 0.0
          %1525 = vmatpush1.msra.mxu0 0.0
          %1526 = vmatprep.subr.mxu0 0.0
          %1527 = vmatpush1.msra.mxu0 0.0
          %1528 = vmatprep.subr.mxu0 0.0
          %1529 = vmatpush1.msra.mxu0 0.0
          %1530 = vmatprep.subr.mxu0 0.0
          %1531 = vmatpush1.msra.mxu0 0.0
          %1532 = vmatprep.subr.mxu0 0.0
          %1533 = vmatpush1.msra.mxu0 0.0
          %1534 = vmatprep.subr.mxu0 0.0
          %1535 = vmatpush1.msra.mxu0 0.0
          %1536 = vmatprep.subr.mxu0 0.0
          %1537 = vmatpush1.msra.mxu0 0.0
          %1538 = vmatprep.subr.mxu0 0.0
          %1539 = vmatpush1.msra.mxu0 0.0
          %1540 = vmatprep.subr.mxu0 0.0
          %1541 = vmatpush1.msra.mxu0 0.0
          %1542 = vmatprep.subr.mxu0 0.0
          %1543 = vmatpush1.msra.mxu0 0.0
          %1544 = vmatprep.subr.mxu0 0.0
          %1545 = vmatpush1.msra.mxu0 0.0
          %1546 = vmatprep.subr.mxu0 0.0
          %1547 = vmatpush1.msra.mxu0 0.0
          %1548 = vmatprep.subr.mxu0 0.0
          %1549 = vmatpush1.msra.mxu0 0.0
          %1550 = vmatprep.subr.mxu0 0.0
          %1551 = vmatpush1.msra.mxu0 0.0
          %1552 = vmatprep.subr.mxu0 0.0
          %1553 = vmatpush1.msra.mxu0 0.0
          %1554 = vmatprep.subr.mxu0 0.0
          %1555 = vmatpush1.msra.mxu0 0.0
          %1556 = vmatprep.subr.mxu0 0.0
          %1557 = vmatpush1.msra.mxu0 0.0
          %1558 = vmatprep.subr.mxu0 0.0
          %1559 = vmatpush1.msra.mxu0 0.0
          %1560 = vmatprep.subr.mxu0 0.0
          %1561 = vmatpush1.msra.mxu0 0.0
          %1562 = vmatprep.subr.mxu0 0.0
          %1563 = vmatpush1.msra.mxu0 0.0
          %1564 = vmatprep.subr.mxu0 0.0
          %1565 = vmatpush1.msra.mxu0 0.0
          %1566 = vmatprep.subr.mxu0 0.0
          %1567 = vmatpush1.msra.mxu0 0.0
          %1568 = vmatprep.subr.mxu0 0.0
          %1569 = vmatpush1.msra.mxu0 0.0
          %1570 = vmatprep.subr.mxu0 0.0
          %1571 = vmatpush1.msra.mxu0 0.0
          %1572 = vmatprep.subr.mxu0 0.0
          %1573 = vmatpush1.msra.mxu0 0.0
          %1574 = vmatprep.subr.mxu0 0.0
          %1575 = vmatpush1.msra.mxu0 0.0
          %1576 = vmatprep.mubr.f32.mxu0 0.0
          %1577 = vmatmul.mubr.f32.gmra.mrb[0].mxu0 %v1507
          %v1578 = vpop.f32.mrb[0].mxu0
          %v1579 = vadd.f32 0.0, %v1578
          %v1580 = vpop.f32.mrb[0].mxu0
          %1581 = vmatprep.mubr.f32.mxu0 0.0
          %1582 = vmatmul.mubr.f32.gmra.mrb[0].mxu0 %v1510
          %v1583 = vpop.f32.mrb[0].mxu0
          %v1584 = vadd.f32 0.0, %v1583
          %v1585 = vpop.f32.mrb[0].mxu0
          %1586 = vdwg.mxu0
          %v1587 = vadd.f32 %v1421, %v1498
          %v1588 = vadd.f32 %v1422, %v1503
          %v1589 = vadd.f32 %v1423, %v1579
          %v1590 = vadd.f32 %v1424, %v1584
          %v1591 = vrcp.pop %v1417
          %v1592 = vrcp.pop %v1418
          %v1593 = vrcp.pop %v1419
          %v1594 = vrcp.pop %v1420
          %v1595 = vmul.f32 %v1587, %v1591
          %v1596 = vmul.f32 %v1588, %v1592
          %v1597 = vmul.f32 %v1589, %v1593
          %v1598 = vmul.f32 %v1590, %v1594
          %v1599 = vld [vmem:[#allocation7] sm:$0xff]
          %v1600 = vld [vmem:[#allocation7 + $0x8] sm:$0xff]
          %v1601 = vld [vmem:[#allocation7 + $0x10] sm:$0xff]
          %v1602 = vld [vmem:[#allocation7 + $0x18] sm:$0xff]
          %v1603 = vld [vmem:[#allocation7 + $0x20] sm:$0xff]
          %v1604 = vld [vmem:[#allocation7 + $0x28] sm:$0xff]
          %v1605 = vld [vmem:[#allocation7 + $0x30] sm:$0xff]
          %v1606 = vld [vmem:[#allocation7 + $0x38] sm:$0xff]
          %v1607 = vld [vmem:[#allocation7 + $0x40] sm:$0xff]
          %v1608 = vld [vmem:[#allocation7 + $0x48] sm:$0xff]
          %v1609 = vld [vmem:[#allocation7 + $0x50] sm:$0xff]
          %v1610 = vld [vmem:[#allocation7 + $0x58] sm:$0xff]
          %v1611 = vld [vmem:[#allocation7 + $0x60] sm:$0xff]
          %v1612 = vld [vmem:[#allocation7 + $0x68] sm:$0xff]
          %v1613 = vld [vmem:[#allocation7 + $0x70] sm:$0xff]
          %v1614 = vld [vmem:[#allocation7 + $0x78] sm:$0xff]
          %v1615 = vld [vmem:[#allocation7 + $0x80] sm:$0xff]
          %v1616 = vld [vmem:[#allocation7 + $0x88] sm:$0xff]
          %v1617 = vld [vmem:[#allocation7 + $0x90] sm:$0xff]
          %v1618 = vld [vmem:[#allocation7 + $0x98] sm:$0xff]
          %v1619 = vld [vmem:[#allocation7 + $0xa0] sm:$0xff]
          %v1620 = vld [vmem:[#allocation7 + $0xa8] sm:$0xff]
          %v1621 = vld [vmem:[#allocation7 + $0xb0] sm:$0xff]
          %v1622 = vld [vmem:[#allocation7 + $0xb8] sm:$0xff]
          %v1623 = vld [vmem:[#allocation7 + $0xc0] sm:$0xff]
          %v1624 = vld [vmem:[#allocation7 + $0xc8] sm:$0xff]
          %v1625 = vld [vmem:[#allocation7 + $0xd0] sm:$0xff]
          %v1626 = vld [vmem:[#allocation7 + $0xd8] sm:$0xff]
          %v1627 = vld [vmem:[#allocation7 + $0xe0] sm:$0xff]
          %v1628 = vld [vmem:[#allocation7 + $0xe8] sm:$0xff]
          %v1629 = vld [vmem:[#allocation7 + $0xf0] sm:$0xff]
          %v1630 = vld [vmem:[#allocation7 + $0xf8] sm:$0xff]
          %v1631 = vld [vmem:[#allocation7 + $0x100] sm:$0xff]
          %v1632 = vld [vmem:[#allocation7 + $0x108] sm:$0xff]
          %v1633 = vld [vmem:[#allocation7 + $0x110] sm:$0xff]
          %v1634 = vld [vmem:[#allocation7 + $0x118] sm:$0xff]
          %v1635 = vld [vmem:[#allocation7 + $0x120] sm:$0xff]
          %v1636 = vld [vmem:[#allocation7 + $0x128] sm:$0xff]
          %v1637 = vld [vmem:[#allocation7 + $0x130] sm:$0xff]
          %v1638 = vld [vmem:[#allocation7 + $0x138] sm:$0xff]
          %v1639 = vld [vmem:[#allocation7 + $0x140] sm:$0xff]
          %v1640 = vld [vmem:[#allocation7 + $0x148] sm:$0xff]
          %v1641 = vld [vmem:[#allocation7 + $0x150] sm:$0xff]
          %v1642 = vld [vmem:[#allocation7 + $0x158] sm:$0xff]
          %v1643 = vld [vmem:[#allocation7 + $0x160] sm:$0xff]
          %v1644 = vld [vmem:[#allocation7 + $0x168] sm:$0xff]
          %v1645 = vld [vmem:[#allocation7 + $0x170] sm:$0xff]
          %v1646 = vld [vmem:[#allocation7 + $0x178] sm:$0xff]
          %v1647 = vld [vmem:[#allocation7 + $0x180] sm:$0xff]
          %v1648 = vld [vmem:[#allocation7 + $0x188] sm:$0xff]
          %v1649 = vld [vmem:[#allocation7 + $0x190] sm:$0xff]
          %v1650 = vld [vmem:[#allocation7 + $0x198] sm:$0xff]
          %v1651 = vld [vmem:[#allocation7 + $0x1a0] sm:$0xff]
          %v1652 = vld [vmem:[#allocation7 + $0x1a8] sm:$0xff]
          %v1653 = vld [vmem:[#allocation7 + $0x1b0] sm:$0xff]
          %v1654 = vld [vmem:[#allocation7 + $0x1b8] sm:$0xff]
          %v1655 = vld [vmem:[#allocation7 + $0x1c0] sm:$0xff]
          %v1656 = vld [vmem:[#allocation7 + $0x1c8] sm:$0xff]
          %v1657 = vld [vmem:[#allocation7 + $0x1d0] sm:$0xff]
          %v1658 = vld [vmem:[#allocation7 + $0x1d8] sm:$0xff]
          %v1659 = vld [vmem:[#allocation7 + $0x1e0] sm:$0xff]
          %v1660 = vld [vmem:[#allocation7 + $0x1e8] sm:$0xff]
          %v1661 = vld [vmem:[#allocation7 + $0x1f0] sm:$0xff]
          %v1662 = vld [vmem:[#allocation7 + $0x1f8] sm:$0xff]
          %v1664 = vlaneseq
          %v1665 = vshrl.u32 %v1664, 7
          %v1666 = vsub.s32 0, %v1665
          %v1667 = vrot.slane %v382, %v1666
          %v1668 = vlaneseq
          %v1669 = vshrl.u32 %v1668, 7
          %v1670 = vsub.s32 1, %v1669
          %v1671 = vrot.slane %v382, %v1670
          %1674 = vmatprep.subr.mxu0 %v1600
          %1675 = vmatpush1.msra.mxu0 %v1599
          %1676 = vmatprep.subr.mxu0 %v1602
          %1677 = vmatpush1.msra.mxu0 %v1601
          %1678 = vmatprep.subr.mxu0 %v1604
          %1679 = vmatpush1.msra.mxu0 %v1603
          %1680 = vmatprep.subr.mxu0 %v1606
          %1681 = vmatpush1.msra.mxu0 %v1605
          %1682 = vmatprep.subr.mxu0 %v1608
          %1683 = vmatpush1.msra.mxu0 %v1607
          %1684 = vmatprep.subr.mxu0 %v1610
          %1685 = vmatpush1.msra.mxu0 %v1609
          %1686 = vmatprep.subr.mxu0 %v1612
          %1687 = vmatpush1.msra.mxu0 %v1611
          %1688 = vmatprep.subr.mxu0 %v1614
          %1689 = vmatpush1.msra.mxu0 %v1613
          %1690 = vmatprep.subr.mxu0 %v1616
          %1691 = vmatpush1.msra.mxu0 %v1615
          %1692 = vmatprep.subr.mxu0 %v1618
          %1693 = vmatpush1.msra.mxu0 %v1617
          %1694 = vmatprep.subr.mxu0 %v1620
          %1695 = vmatpush1.msra.mxu0 %v1619
          %1696 = vmatprep.subr.mxu0 %v1622
          %1697 = vmatpush1.msra.mxu0 %v1621
          %1698 = vmatprep.subr.mxu0 %v1624
          %1699 = vmatpush1.msra.mxu0 %v1623
          %1700 = vmatprep.subr.mxu0 %v1626
          %1701 = vmatpush1.msra.mxu0 %v1625
          %1702 = vmatprep.subr.mxu0 %v1628
          %1703 = vmatpush1.msra.mxu0 %v1627
          %1704 = vmatprep.subr.mxu0 %v1630
          %1705 = vmatpush1.msra.mxu0 %v1629
          %1706 = vmatprep.subr.mxu0 %v1632
          %1707 = vmatpush1.msra.mxu0 %v1631
          %1708 = vmatprep.subr.mxu0 %v1634
          %1709 = vmatpush1.msra.mxu0 %v1633
          %1710 = vmatprep.subr.mxu0 %v1636
          %1711 = vmatpush1.msra.mxu0 %v1635
          %1712 = vmatprep.subr.mxu0 %v1638
          %1713 = vmatpush1.msra.mxu0 %v1637
          %1714 = vmatprep.subr.mxu0 %v1640
          %1715 = vmatpush1.msra.mxu0 %v1639
          %1716 = vmatprep.subr.mxu0 %v1642
          %1717 = vmatpush1.msra.mxu0 %v1641
          %1718 = vmatprep.subr.mxu0 %v1644
          %1719 = vmatpush1.msra.mxu0 %v1643
          %1720 = vmatprep.subr.mxu0 %v1646
          %1721 = vmatpush1.msra.mxu0 %v1645
          %1722 = vmatprep.subr.mxu0 %v1648
          %1723 = vmatpush1.msra.mxu0 %v1647
          %1724 = vmatprep.subr.mxu0 %v1650
          %1725 = vmatpush1.msra.mxu0 %v1649
          %1726 = vmatprep.subr.mxu0 %v1652
          %1727 = vmatpush1.msra.mxu0 %v1651
          %1728 = vmatprep.subr.mxu0 %v1654
          %1729 = vmatpush1.msra.mxu0 %v1653
          %1730 = vmatprep.subr.mxu0 %v1656
          %1731 = vmatpush1.msra.mxu0 %v1655
          %1732 = vmatprep.subr.mxu0 %v1658
          %1733 = vmatpush1.msra.mxu0 %v1657
          %1734 = vmatprep.subr.mxu0 %v1660
          %1735 = vmatpush1.msra.mxu0 %v1659
          %1736 = vmatprep.subr.mxu0 %v1662
          %1737 = vmatpush1.msra.mxu0 %v1661
          %1738 = vmatprep.mubr.f32.mxu0 %v1597
          %1739 = vmatmul.mubr.f32.gmra.mrb[0].mxu0 %v1595
          %v1740 = vpop.f32.mrb[0].mxu0
          %v1741 = vadd.f32 %v1667, %v1740
          %v1742 = vpop.f32.mrb[0].mxu0
          %v1743 = vadd.f32 %v1671, %v1742
          %1744 = vmatprep.mubr.f32.mxu0 %v1598
          %1745 = vmatmul.mubr.f32.gmra.mrb[0].mxu0 %v1596
          %v1746 = vpop.f32.mrb[0].mxu0
          %v1747 = vadd.f32 %v1667, %v1746
          %v1748 = vpop.f32.mrb[0].mxu0
          %v1749 = vadd.f32 %v1671, %v1748
          %1750 = vdwg.mxu0
          %v1751 = vadd.f32 %v403, %v1741
          %v1752 = vadd.f32 %v404, %v1743
          %v1753 = vadd.f32 %v405, %v1747
          %v1754 = vadd.f32 %v406, %v1749
          %v1755 = vadd.f32 %v1751, %v1752
          %1756 = vadd.xlane.f32.xlu0 %v1755
          %v1757 = vpop.xlane.xlu0 %1756
          %v1758 = vadd.f32 %v1753, %v1754
          %1759 = vadd.xlane.f32.xlu0 %v1758
          %v1760 = vpop.xlane.xlu0 %1759
          %v1761 = vrcp.pop 256.0
          %v1762 = vmul.f32 %v1757, %v1761
          %v1763 = vmul.f32 %v1760, %v1761
          %v1764 = vsub.f32 %v1751, %v1762
          %v1765 = vsub.f32 %v1752, %v1762
          %v1766 = vsub.f32 %v1753, %v1763
          %v1767 = vsub.f32 %v1754, %v1763
          %v1768 = vmul.f32 %v1764, %v1764
          %v1769 = vmul.f32 %v1765, %v1765
          %v1770 = vmul.f32 %v1766, %v1766
          %v1771 = vmul.f32 %v1767, %v1767
          %v1772 = vadd.f32 %v1768, %v1769
          %1773 = vadd.xlane.f32.xlu0 %v1772
          %v1774 = vpop.xlane.xlu0 %1773
          %v1775 = vadd.f32 %v1770, %v1771
          %1776 = vadd.xlane.f32.xlu0 %v1775
          %v1777 = vpop.xlane.xlu0 %1776
          %v1778 = vmul.f32 %v1774, %v1761
          %v1779 = vmul.f32 %v1777, %v1761
          %v1780 = vadd.f32 %v1778, 1e-05
          %v1781 = vadd.f32 %v1779, 1e-05
          %v1782 = vrsqrt.pop %v1780
          %v1783 = vrsqrt.pop %v1781
          %v1784 = vmul.f32 %v1764, %v1782
          %v1785 = vmul.f32 %v1765, %v1782
          %v1786 = vmul.f32 %v1766, %v1783
          %v1787 = vmul.f32 %v1767, %v1783
          %v1789 = vlaneseq
          %v1790 = vshrl.u32 %v1789, 7
          %v1791 = vsub.s32 0, %v1790
          %v1792 = vrot.slane %v384, %v1791
          %v1793 = vlaneseq
          %v1794 = vshrl.u32 %v1793, 7
          %v1795 = vsub.s32 1, %v1794
          %v1796 = vrot.slane %v384, %v1795
          %v1799 = vmul.f32 %v1784, %v1792
          %v1800 = vmul.f32 %v1785, %v1796
          %v1801 = vmul.f32 %v1786, %v1792
          %v1802 = vmul.f32 %v1787, %v1796
          %v1804 = vlaneseq
          %v1805 = vshrl.u32 %v1804, 7
          %v1806 = vsub.s32 0, %v1805
          %v1807 = vrot.slane %v386, %v1806
          %v1808 = vlaneseq
          %v1809 = vshrl.u32 %v1808, 7
          %v1810 = vsub.s32 1, %v1809
          %v1811 = vrot.slane %v386, %v1810
          %v1814 = vadd.f32 %v1799, %v1807
          %v1815 = vadd.f32 %v1800, %v1811
          %v1816 = vadd.f32 %v1801, %v1807
          %v1817 = vadd.f32 %v1802, %v1811
          %v1818 = vld [vmem:[#allocation8] sm:$0xff]
          %v1819 = vld [vmem:[#allocation8 + $0x8] sm:$0xff]
          %v1820 = vld [vmem:[#allocation8 + $0x10] sm:$0xff]
          %v1821 = vld [vmem:[#allocation8 + $0x18] sm:$0xff]
          %v1822 = vld [vmem:[#allocation8 + $0x20] sm:$0xff]
          %v1823 = vld [vmem:[#allocation8 + $0x28] sm:$0xff]
          %v1824 = vld [vmem:[#allocation8 + $0x30] sm:$0xff]
          %v1825 = vld [vmem:[#allocation8 + $0x38] sm:$0xff]
          %v1826 = vld [vmem:[#allocation8 + $0x40] sm:$0xff]
          %v1827 = vld [vmem:[#allocation8 + $0x48] sm:$0xff]
          %v1828 = vld [vmem:[#allocation8 + $0x50] sm:$0xff]
          %v1829 = vld [vmem:[#allocation8 + $0x58] sm:$0xff]
          %v1830 = vld [vmem:[#allocation8 + $0x60] sm:$0xff]
          %v1831 = vld [vmem:[#allocation8 + $0x68] sm:$0xff]
          %v1832 = vld [vmem:[#allocation8 + $0x70] sm:$0xff]
          %v1833 = vld [vmem:[#allocation8 + $0x78] sm:$0xff]
          %v1834 = vld [vmem:[#allocation8 + $0x80] sm:$0xff]
          %v1835 = vld [vmem:[#allocation8 + $0x88] sm:$0xff]
          %v1836 = vld [vmem:[#allocation8 + $0x90] sm:$0xff]
          %v1837 = vld [vmem:[#allocation8 + $0x98] sm:$0xff]
          %v1838 = vld [vmem:[#allocation8 + $0xa0] sm:$0xff]
          %v1839 = vld [vmem:[#allocation8 + $0xa8] sm:$0xff]
          %v1840 = vld [vmem:[#allocation8 + $0xb0] sm:$0xff]
          %v1841 = vld [vmem:[#allocation8 + $0xb8] sm:$0xff]
          %v1842 = vld [vmem:[#allocation8 + $0xc0] sm:$0xff]
          %v1843 = vld [vmem:[#allocation8 + $0xc8] sm:$0xff]
          %v1844 = vld [vmem:[#allocation8 + $0xd0] sm:$0xff]
          %v1845 = vld [vmem:[#allocation8 + $0xd8] sm:$0xff]
          %v1846 = vld [vmem:[#allocation8 + $0xe0] sm:$0xff]
          %v1847 = vld [vmem:[#allocation8 + $0xe8] sm:$0xff]
          %v1848 = vld [vmem:[#allocation8 + $0xf0] sm:$0xff]
          %v1849 = vld [vmem:[#allocation8 + $0xf8] sm:$0xff]
          %v1850 = vld [vmem:[#allocation8 + $0x100] sm:$0xff]
          %v1851 = vld [vmem:[#allocation8 + $0x108] sm:$0xff]
          %v1852 = vld [vmem:[#allocation8 + $0x110] sm:$0xff]
          %v1853 = vld [vmem:[#allocation8 + $0x118] sm:$0xff]
          %v1854 = vld [vmem:[#allocation8 + $0x120] sm:$0xff]
          %v1855 = vld [vmem:[#allocation8 + $0x128] sm:$0xff]
          %v1856 = vld [vmem:[#allocation8 + $0x130] sm:$0xff]
          %v1857 = vld [vmem:[#allocation8 + $0x138] sm:$0xff]
          %v1858 = vld [vmem:[#allocation8 + $0x140] sm:$0xff]
          %v1859 = vld [vmem:[#allocation8 + $0x148] sm:$0xff]
          %v1860 = vld [vmem:[#allocation8 + $0x150] sm:$0xff]
          %v1861 = vld [vmem:[#allocation8 + $0x158] sm:$0xff]
          %v1862 = vld [vmem:[#allocation8 + $0x160] sm:$0xff]
          %v1863 = vld [vmem:[#allocation8 + $0x168] sm:$0xff]
          %v1864 = vld [vmem:[#allocation8 + $0x170] sm:$0xff]
          %v1865 = vld [vmem:[#allocation8 + $0x178] sm:$0xff]
          %v1866 = vld [vmem:[#allocation8 + $0x180] sm:$0xff]
          %v1867 = vld [vmem:[#allocation8 + $0x188] sm:$0xff]
          %v1868 = vld [vmem:[#allocation8 + $0x190] sm:$0xff]
          %v1869 = vld [vmem:[#allocation8 + $0x198] sm:$0xff]
          %v1870 = vld [vmem:[#allocation8 + $0x1a0] sm:$0xff]
          %v1871 = vld [vmem:[#allocation8 + $0x1a8] sm:$0xff]
          %v1872 = vld [vmem:[#allocation8 + $0x1b0] sm:$0xff]
          %v1873 = vld [vmem:[#allocation8 + $0x1b8] sm:$0xff]
          %v1874 = vld [vmem:[#allocation8 + $0x1c0] sm:$0xff]
          %v1875 = vld [vmem:[#allocation8 + $0x1c8] sm:$0xff]
          %v1876 = vld [vmem:[#allocation8 + $0x1d0] sm:$0xff]
          %v1877 = vld [vmem:[#allocation8 + $0x1d8] sm:$0xff]
          %v1878 = vld [vmem:[#allocation8 + $0x1e0] sm:$0xff]
          %v1879 = vld [vmem:[#allocation8 + $0x1e8] sm:$0xff]
          %v1880 = vld [vmem:[#allocation8 + $0x1f0] sm:$0xff]
          %v1881 = vld [vmem:[#allocation8 + $0x1f8] sm:$0xff]
          %v1882 = vld [vmem:[#allocation8 + $0x200] sm:$0xff]
          %v1883 = vld [vmem:[#allocation8 + $0x208] sm:$0xff]
          %v1884 = vld [vmem:[#allocation8 + $0x210] sm:$0xff]
          %v1885 = vld [vmem:[#allocation8 + $0x218] sm:$0xff]
          %v1886 = vld [vmem:[#allocation8 + $0x220] sm:$0xff]
          %v1887 = vld [vmem:[#allocation8 + $0x228] sm:$0xff]
          %v1888 = vld [vmem:[#allocation8 + $0x230] sm:$0xff]
          %v1889 = vld [vmem:[#allocation8 + $0x238] sm:$0xff]
          %v1890 = vld [vmem:[#allocation8 + $0x240] sm:$0xff]
          %v1891 = vld [vmem:[#allocation8 + $0x248] sm:$0xff]
          %v1892 = vld [vmem:[#allocation8 + $0x250] sm:$0xff]
          %v1893 = vld [vmem:[#allocation8 + $0x258] sm:$0xff]
          %v1894 = vld [vmem:[#allocation8 + $0x260] sm:$0xff]
          %v1895 = vld [vmem:[#allocation8 + $0x268] sm:$0xff]
          %v1896 = vld [vmem:[#allocation8 + $0x270] sm:$0xff]
          %v1897 = vld [vmem:[#allocation8 + $0x278] sm:$0xff]
          %v1898 = vld [vmem:[#allocation8 + $0x280] sm:$0xff]
          %v1899 = vld [vmem:[#allocation8 + $0x288] sm:$0xff]
          %v1900 = vld [vmem:[#allocation8 + $0x290] sm:$0xff]
          %v1901 = vld [vmem:[#allocation8 + $0x298] sm:$0xff]
          %v1902 = vld [vmem:[#allocation8 + $0x2a0] sm:$0xff]
          %v1903 = vld [vmem:[#allocation8 + $0x2a8] sm:$0xff]
          %v1904 = vld [vmem:[#allocation8 + $0x2b0] sm:$0xff]
          %v1905 = vld [vmem:[#allocation8 + $0x2b8] sm:$0xff]
          %v1906 = vld [vmem:[#allocation8 + $0x2c0] sm:$0xff]
          %v1907 = vld [vmem:[#allocation8 + $0x2c8] sm:$0xff]
          %v1908 = vld [vmem:[#allocation8 + $0x2d0] sm:$0xff]
          %v1909 = vld [vmem:[#allocation8 + $0x2d8] sm:$0xff]
          %v1910 = vld [vmem:[#allocation8 + $0x2e0] sm:$0xff]
          %v1911 = vld [vmem:[#allocation8 + $0x2e8] sm:$0xff]
          %v1912 = vld [vmem:[#allocation8 + $0x2f0] sm:$0xff]
          %v1913 = vld [vmem:[#allocation8 + $0x2f8] sm:$0xff]
          %v1914 = vld [vmem:[#allocation8 + $0x300] sm:$0xff]
          %v1915 = vld [vmem:[#allocation8 + $0x308] sm:$0xff]
          %v1916 = vld [vmem:[#allocation8 + $0x310] sm:$0xff]
          %v1917 = vld [vmem:[#allocation8 + $0x318] sm:$0xff]
          %v1918 = vld [vmem:[#allocation8 + $0x320] sm:$0xff]
          %v1919 = vld [vmem:[#allocation8 + $0x328] sm:$0xff]
          %v1920 = vld [vmem:[#allocation8 + $0x330] sm:$0xff]
          %v1921 = vld [vmem:[#allocation8 + $0x338] sm:$0xff]
          %v1922 = vld [vmem:[#allocation8 + $0x340] sm:$0xff]
          %v1923 = vld [vmem:[#allocation8 + $0x348] sm:$0xff]
          %v1924 = vld [vmem:[#allocation8 + $0x350] sm:$0xff]
          %v1925 = vld [vmem:[#allocation8 + $0x358] sm:$0xff]
          %v1926 = vld [vmem:[#allocation8 + $0x360] sm:$0xff]
          %v1927 = vld [vmem:[#allocation8 + $0x368] sm:$0xff]
          %v1928 = vld [vmem:[#allocation8 + $0x370] sm:$0xff]
          %v1929 = vld [vmem:[#allocation8 + $0x378] sm:$0xff]
          %v1930 = vld [vmem:[#allocation8 + $0x380] sm:$0xff]
          %v1931 = vld [vmem:[#allocation8 + $0x388] sm:$0xff]
          %v1932 = vld [vmem:[#allocation8 + $0x390] sm:$0xff]
          %v1933 = vld [vmem:[#allocation8 + $0x398] sm:$0xff]
          %v1934 = vld [vmem:[#allocation8 + $0x3a0] sm:$0xff]
          %v1935 = vld [vmem:[#allocation8 + $0x3a8] sm:$0xff]
          %v1936 = vld [vmem:[#allocation8 + $0x3b0] sm:$0xff]
          %v1937 = vld [vmem:[#allocation8 + $0x3b8] sm:$0xff]
          %v1938 = vld [vmem:[#allocation8 + $0x3c0] sm:$0xff]
          %v1939 = vld [vmem:[#allocation8 + $0x3c8] sm:$0xff]
          %v1940 = vld [vmem:[#allocation8 + $0x3d0] sm:$0xff]
          %v1941 = vld [vmem:[#allocation8 + $0x3d8] sm:$0xff]
          %v1942 = vld [vmem:[#allocation8 + $0x3e0] sm:$0xff]
          %v1943 = vld [vmem:[#allocation8 + $0x3e8] sm:$0xff]
          %v1944 = vld [vmem:[#allocation8 + $0x3f0] sm:$0xff]
          %v1945 = vld [vmem:[#allocation8 + $0x3f8] sm:$0xff]
          %v1946 = vld [vmem:[%s5] sm:$0xf]
          %v1948 = vlaneseq
          %v1949 = vshrl.u32 %v1948, 7
          %v1950 = vsub.s32 0, %v1949
          %v1951 = vrot.slane %v1946, %v1950
          %v1952 = vlaneseq
          %v1953 = vshrl.u32 %v1952, 7
          %v1954 = vsub.s32 1, %v1953
          %v1955 = vrot.slane %v1946, %v1954
          %v1956 = vlaneseq
          %v1957 = vshrl.u32 %v1956, 7
          %v1958 = vsub.s32 2, %v1957
          %v1959 = vrot.slane %v1946, %v1958
          %v1960 = vlaneseq
          %v1961 = vshrl.u32 %v1960, 7
          %v1962 = vsub.s32 3, %v1961
          %v1963 = vrot.slane %v1946, %v1962
          %1968 = vmatprep.subr.mxu0 %v1819
          %1969 = vmatpush1.msra.mxu0 %v1818
          %1970 = vmatprep.subr.mxu0 %v1823
          %1971 = vmatpush1.msra.mxu0 %v1822
          %1972 = vmatprep.subr.mxu0 %v1827
          %1973 = vmatpush1.msra.mxu0 %v1826
          %1974 = vmatprep.subr.mxu0 %v1831
          %1975 = vmatpush1.msra.mxu0 %v1830
          %1976 = vmatprep.subr.mxu0 %v1835
          %1977 = vmatpush1.msra.mxu0 %v1834
          %1978 = vmatprep.subr.mxu0 %v1839
          %1979 = vmatpush1.msra.mxu0 %v1838
          %1980 = vmatprep.subr.mxu0 %v1843
          %1981 = vmatpush1.msra.mxu0 %v1842
          %1982 = vmatprep.subr.mxu0 %v1847
          %1983 = vmatpush1.msra.mxu0 %v1846
          %1984 = vmatprep.subr.mxu0 %v1851
          %1985 = vmatpush1.msra.mxu0 %v1850
          %1986 = vmatprep.subr.mxu0 %v1855
          %1987 = vmatpush1.msra.mxu0 %v1854
          %1988 = vmatprep.subr.mxu0 %v1859
          %1989 = vmatpush1.msra.mxu0 %v1858
          %1990 = vmatprep.subr.mxu0 %v1863
          %1991 = vmatpush1.msra.mxu0 %v1862
          %1992 = vmatprep.subr.mxu0 %v1867
          %1993 = vmatpush1.msra.mxu0 %v1866
          %1994 = vmatprep.subr.mxu0 %v1871
          %1995 = vmatpush1.msra.mxu0 %v1870
          %1996 = vmatprep.subr.mxu0 %v1875
          %1997 = vmatpush1.msra.mxu0 %v1874
          %1998 = vmatprep.subr.mxu0 %v1879
          %1999 = vmatpush1.msra.mxu0 %v1878
          %2000 = vmatprep.subr.mxu0 %v1883
          %2001 = vmatpush1.msra.mxu0 %v1882
          %2002 = vmatprep.subr.mxu0 %v1887
          %2003 = vmatpush1.msra.mxu0 %v1886
          %2004 = vmatprep.subr.mxu0 %v1891
          %2005 = vmatpush1.msra.mxu0 %v1890
          %2006 = vmatprep.subr.mxu0 %v1895
          %2007 = vmatpush1.msra.mxu0 %v1894
          %2008 = vmatprep.subr.mxu0 %v1899
          %2009 = vmatpush1.msra.mxu0 %v1898
          %2010 = vmatprep.subr.mxu0 %v1903
          %2011 = vmatpush1.msra.mxu0 %v1902
          %2012 = vmatprep.subr.mxu0 %v1907
          %2013 = vmatpush1.msra.mxu0 %v1906
          %2014 = vmatprep.subr.mxu0 %v1911
          %2015 = vmatpush1.msra.mxu0 %v1910
          %2016 = vmatprep.subr.mxu0 %v1915
          %2017 = vmatpush1.msra.mxu0 %v1914
          %2018 = vmatprep.subr.mxu0 %v1919
          %2019 = vmatpush1.msra.mxu0 %v1918
          %2020 = vmatprep.subr.mxu0 %v1923
          %2021 = vmatpush1.msra.mxu0 %v1922
          %2022 = vmatprep.subr.mxu0 %v1927
          %2023 = vmatpush1.msra.mxu0 %v1926
          %2024 = vmatprep.subr.mxu0 %v1931
          %2025 = vmatpush1.msra.mxu0 %v1930
          %2026 = vmatprep.subr.mxu0 %v1935
          %2027 = vmatpush1.msra.mxu0 %v1934
          %2028 = vmatprep.subr.mxu0 %v1939
          %2029 = vmatpush1.msra.mxu0 %v1938
          %2030 = vmatprep.subr.mxu0 %v1943
          %2031 = vmatpush1.msra.mxu0 %v1942
          %2032 = vmatprep.mubr.f32.mxu0 %v1815
          %2033 = vmatmul.mubr.f32.gmra.mrb[0].mxu0 %v1814
          %v2034 = vpop.f32.mrb[0].mxu0
          %v2035 = vadd.f32 %v1951, %v2034
          %v2036 = vpop.f32.mrb[0].mxu0
          %v2037 = vadd.f32 %v1955, %v2036
          %2038 = vmatprep.mubr.f32.mxu0 %v1817
          %2039 = vmatmul.mubr.f32.gmra.mrb[0].mxu0 %v1816
          %v2040 = vpop.f32.mrb[0].mxu0
          %v2041 = vadd.f32 %v1951, %v2040
          %v2042 = vpop.f32.mrb[0].mxu0
          %v2043 = vadd.f32 %v1955, %v2042
          %2044 = vdwg.mxu0
          %2045 = vmatprep.subr.mxu0 %v1821
          %2046 = vmatpush1.msra.mxu0 %v1820
          %2047 = vmatprep.subr.mxu0 %v1825
          %2048 = vmatpush1.msra.mxu0 %v1824
          %2049 = vmatprep.subr.mxu0 %v1829
          %2050 = vmatpush1.msra.mxu0 %v1828
          %2051 = vmatprep.subr.mxu0 %v1833
          %2052 = vmatpush1.msra.mxu0 %v1832
          %2053 = vmatprep.subr.mxu0 %v1837
          %2054 = vmatpush1.msra.mxu0 %v1836
          %2055 = vmatprep.subr.mxu0 %v1841
          %2056 = vmatpush1.msra.mxu0 %v1840
          %2057 = vmatprep.subr.mxu0 %v1845
          %2058 = vmatpush1.msra.mxu0 %v1844
          %2059 = vmatprep.subr.mxu0 %v1849
          %2060 = vmatpush1.msra.mxu0 %v1848
          %2061 = vmatprep.subr.mxu0 %v1853
          %2062 = vmatpush1.msra.mxu0 %v1852
          %2063 = vmatprep.subr.mxu0 %v1857
          %2064 = vmatpush1.msra.mxu0 %v1856
          %2065 = vmatprep.subr.mxu0 %v1861
          %2066 = vmatpush1.msra.mxu0 %v1860
          %2067 = vmatprep.subr.mxu0 %v1865
          %2068 = vmatpush1.msra.mxu0 %v1864
          %2069 = vmatprep.subr.mxu0 %v1869
          %2070 = vmatpush1.msra.mxu0 %v1868
          %2071 = vmatprep.subr.mxu0 %v1873
          %2072 = vmatpush1.msra.mxu0 %v1872
          %2073 = vmatprep.subr.mxu0 %v1877
          %2074 = vmatpush1.msra.mxu0 %v1876
          %2075 = vmatprep.subr.mxu0 %v1881
          %2076 = vmatpush1.msra.mxu0 %v1880
          %2077 = vmatprep.subr.mxu0 %v1885
          %2078 = vmatpush1.msra.mxu0 %v1884
          %2079 = vmatprep.subr.mxu0 %v1889
          %2080 = vmatpush1.msra.mxu0 %v1888
          %2081 = vmatprep.subr.mxu0 %v1893
          %2082 = vmatpush1.msra.mxu0 %v1892
          %2083 = vmatprep.subr.mxu0 %v1897
          %2084 = vmatpush1.msra.mxu0 %v1896
          %2085 = vmatprep.subr.mxu0 %v1901
          %2086 = vmatpush1.msra.mxu0 %v1900
          %2087 = vmatprep.subr.mxu0 %v1905
          %2088 = vmatpush1.msra.mxu0 %v1904
          %2089 = vmatprep.subr.mxu0 %v1909
          %2090 = vmatpush1.msra.mxu0 %v1908
          %2091 = vmatprep.subr.mxu0 %v1913
          %2092 = vmatpush1.msra.mxu0 %v1912
          %2093 = vmatprep.subr.mxu0 %v1917
          %2094 = vmatpush1.msra.mxu0 %v1916
          %2095 = vmatprep.subr.mxu0 %v1921
          %2096 = vmatpush1.msra.mxu0 %v1920
          %2097 = vmatprep.subr.mxu0 %v1925
          %2098 = vmatpush1.msra.mxu0 %v1924
          %2099 = vmatprep.subr.mxu0 %v1929
          %2100 = vmatpush1.msra.mxu0 %v1928
          %2101 = vmatprep.subr.mxu0 %v1933
          %2102 = vmatpush1.msra.mxu0 %v1932
          %2103 = vmatprep.subr.mxu0 %v1937
          %2104 = vmatpush1.msra.mxu0 %v1936
          %2105 = vmatprep.subr.mxu0 %v1941
          %2106 = vmatpush1.msra.mxu0 %v1940
          %2107 = vmatprep.subr.mxu0 %v1945
          %2108 = vmatpush1.msra.mxu0 %v1944
          %2109 = vmatprep.mubr.f32.mxu0 %v1815
          %2110 = vmatmul.mubr.f32.gmra.mrb[0].mxu0 %v1814
          %v2111 = vpop.f32.mrb[0].mxu0
          %v2112 = vadd.f32 %v1959, %v2111
          %v2113 = vpop.f32.mrb[0].mxu0
          %v2114 = vadd.f32 %v1963, %v2113
          %2115 = vmatprep.mubr.f32.mxu0 %v1817
          %2116 = vmatmul.mubr.f32.gmra.mrb[0].mxu0 %v1816
          %v2117 = vpop.f32.mrb[0].mxu0
          %v2118 = vadd.f32 %v1959, %v2117
          %v2119 = vpop.f32.mrb[0].mxu0
          %v2120 = vadd.f32 %v1963, %v2119
          %2121 = vdwg.mxu0
          %v2122 = vmax.f32 %v2035, 0.0
          %v2123 = vmax.f32 %v2037, 0.0
          %v2124 = vmax.f32 %v2112, 0.0
          %v2125 = vmax.f32 %v2114, 0.0
          %v2126 = vmax.f32 %v2041, 0.0
          %v2127 = vmax.f32 %v2043, 0.0
          %v2128 = vmax.f32 %v2118, 0.0
          %v2129 = vmax.f32 %v2120, 0.0
          %v2130 = vld [vmem:[#allocation10] sm:$0xff]
          %v2131 = vld [vmem:[#allocation10 + $0x8] sm:$0xff]
          %v2132 = vld [vmem:[#allocation10 + $0x10] sm:$0xff]
          %v2133 = vld [vmem:[#allocation10 + $0x18] sm:$0xff]
          %v2134 = vld [vmem:[#allocation10 + $0x20] sm:$0xff]
          %v2135 = vld [vmem:[#allocation10 + $0x28] sm:$0xff]
          %v2136 = vld [vmem:[#allocation10 + $0x30] sm:$0xff]
          %v2137 = vld [vmem:[#allocation10 + $0x38] sm:$0xff]
          %v2138 = vld [vmem:[#allocation10 + $0x40] sm:$0xff]
          %v2139 = vld [vmem:[#allocation10 + $0x48] sm:$0xff]
          %v2140 = vld [vmem:[#allocation10 + $0x50] sm:$0xff]
          %v2141 = vld [vmem:[#allocation10 + $0x58] sm:$0xff]
          %v2142 = vld [vmem:[#allocation10 + $0x60] sm:$0xff]
          %v2143 = vld [vmem:[#allocation10 + $0x68] sm:$0xff]
          %v2144 = vld [vmem:[#allocation10 + $0x70] sm:$0xff]
          %v2145 = vld [vmem:[#allocation10 + $0x78] sm:$0xff]
          %v2146 = vld [vmem:[#allocation10 + $0x80] sm:$0xff]
          %v2147 = vld [vmem:[#allocation10 + $0x88] sm:$0xff]
          %v2148 = vld [vmem:[#allocation10 + $0x90] sm:$0xff]
          %v2149 = vld [vmem:[#allocation10 + $0x98] sm:$0xff]
          %v2150 = vld [vmem:[#allocation10 + $0xa0] sm:$0xff]
          %v2151 = vld [vmem:[#allocation10 + $0xa8] sm:$0xff]
          %v2152 = vld [vmem:[#allocation10 + $0xb0] sm:$0xff]
          %v2153 = vld [vmem:[#allocation10 + $0xb8] sm:$0xff]
          %v2154 = vld [vmem:[#allocation10 + $0xc0] sm:$0xff]
          %v2155 = vld [vmem:[#allocation10 + $0xc8] sm:$0xff]
          %v2156 = vld [vmem:[#allocation10 + $0xd0] sm:$0xff]
          %v2157 = vld [vmem:[#allocation10 + $0xd8] sm:$0xff]
          %v2158 = vld [vmem:[#allocation10 + $0xe0] sm:$0xff]
          %v2159 = vld [vmem:[#allocation10 + $0xe8] sm:$0xff]
          %v2160 = vld [vmem:[#allocation10 + $0xf0] sm:$0xff]
          %v2161 = vld [vmem:[#allocation10 + $0xf8] sm:$0xff]
          %v2162 = vld [vmem:[#allocation10 + $0x100] sm:$0xff]
          %v2163 = vld [vmem:[#allocation10 + $0x108] sm:$0xff]
          %v2164 = vld [vmem:[#allocation10 + $0x110] sm:$0xff]
          %v2165 = vld [vmem:[#allocation10 + $0x118] sm:$0xff]
          %v2166 = vld [vmem:[#allocation10 + $0x120] sm:$0xff]
          %v2167 = vld [vmem:[#allocation10 + $0x128] sm:$0xff]
          %v2168 = vld [vmem:[#allocation10 + $0x130] sm:$0xff]
          %v2169 = vld [vmem:[#allocation10 + $0x138] sm:$0xff]
          %v2170 = vld [vmem:[#allocation10 + $0x140] sm:$0xff]
          %v2171 = vld [vmem:[#allocation10 + $0x148] sm:$0xff]
          %v2172 = vld [vmem:[#allocation10 + $0x150] sm:$0xff]
          %v2173 = vld [vmem:[#allocation10 + $0x158] sm:$0xff]
          %v2174 = vld [vmem:[#allocation10 + $0x160] sm:$0xff]
          %v2175 = vld [vmem:[#allocation10 + $0x168] sm:$0xff]
          %v2176 = vld [vmem:[#allocation10 + $0x170] sm:$0xff]
          %v2177 = vld [vmem:[#allocation10 + $0x178] sm:$0xff]
          %v2178 = vld [vmem:[#allocation10 + $0x180] sm:$0xff]
          %v2179 = vld [vmem:[#allocation10 + $0x188] sm:$0xff]
          %v2180 = vld [vmem:[#allocation10 + $0x190] sm:$0xff]
          %v2181 = vld [vmem:[#allocation10 + $0x198] sm:$0xff]
          %v2182 = vld [vmem:[#allocation10 + $0x1a0] sm:$0xff]
          %v2183 = vld [vmem:[#allocation10 + $0x1a8] sm:$0xff]
          %v2184 = vld [vmem:[#allocation10 + $0x1b0] sm:$0xff]
          %v2185 = vld [vmem:[#allocation10 + $0x1b8] sm:$0xff]
          %v2186 = vld [vmem:[#allocation10 + $0x1c0] sm:$0xff]
          %v2187 = vld [vmem:[#allocation10 + $0x1c8] sm:$0xff]
          %v2188 = vld [vmem:[#allocation10 + $0x1d0] sm:$0xff]
          %v2189 = vld [vmem:[#allocation10 + $0x1d8] sm:$0xff]
          %v2190 = vld [vmem:[#allocation10 + $0x1e0] sm:$0xff]
          %v2191 = vld [vmem:[#allocation10 + $0x1e8] sm:$0xff]
          %v2192 = vld [vmem:[#allocation10 + $0x1f0] sm:$0xff]
          %v2193 = vld [vmem:[#allocation10 + $0x1f8] sm:$0xff]
          %v2194 = vld [vmem:[#allocation10 + $0x200] sm:$0xff]
          %v2195 = vld [vmem:[#allocation10 + $0x208] sm:$0xff]
          %v2196 = vld [vmem:[#allocation10 + $0x210] sm:$0xff]
          %v2197 = vld [vmem:[#allocation10 + $0x218] sm:$0xff]
          %v2198 = vld [vmem:[#allocation10 + $0x220] sm:$0xff]
          %v2199 = vld [vmem:[#allocation10 + $0x228] sm:$0xff]
          %v2200 = vld [vmem:[#allocation10 + $0x230] sm:$0xff]
          %v2201 = vld [vmem:[#allocation10 + $0x238] sm:$0xff]
          %v2202 = vld [vmem:[#allocation10 + $0x240] sm:$0xff]
          %v2203 = vld [vmem:[#allocation10 + $0x248] sm:$0xff]
          %v2204 = vld [vmem:[#allocation10 + $0x250] sm:$0xff]
          %v2205 = vld [vmem:[#allocation10 + $0x258] sm:$0xff]
          %v2206 = vld [vmem:[#allocation10 + $0x260] sm:$0xff]
          %v2207 = vld [vmem:[#allocation10 + $0x268] sm:$0xff]
          %v2208 = vld [vmem:[#allocation10 + $0x270] sm:$0xff]
          %v2209 = vld [vmem:[#allocation10 + $0x278] sm:$0xff]
          %v2210 = vld [vmem:[#allocation10 + $0x280] sm:$0xff]
          %v2211 = vld [vmem:[#allocation10 + $0x288] sm:$0xff]
          %v2212 = vld [vmem:[#allocation10 + $0x290] sm:$0xff]
          %v2213 = vld [vmem:[#allocation10 + $0x298] sm:$0xff]
          %v2214 = vld [vmem:[#allocation10 + $0x2a0] sm:$0xff]
          %v2215 = vld [vmem:[#allocation10 + $0x2a8] sm:$0xff]
          %v2216 = vld [vmem:[#allocation10 + $0x2b0] sm:$0xff]
          %v2217 = vld [vmem:[#allocation10 + $0x2b8] sm:$0xff]
          %v2218 = vld [vmem:[#allocation10 + $0x2c0] sm:$0xff]
          %v2219 = vld [vmem:[#allocation10 + $0x2c8] sm:$0xff]
          %v2220 = vld [vmem:[#allocation10 + $0x2d0] sm:$0xff]
          %v2221 = vld [vmem:[#allocation10 + $0x2d8] sm:$0xff]
          %v2222 = vld [vmem:[#allocation10 + $0x2e0] sm:$0xff]
          %v2223 = vld [vmem:[#allocation10 + $0x2e8] sm:$0xff]
          %v2224 = vld [vmem:[#allocation10 + $0x2f0] sm:$0xff]
          %v2225 = vld [vmem:[#allocation10 + $0x2f8] sm:$0xff]
          %v2226 = vld [vmem:[#allocation10 + $0x300] sm:$0xff]
          %v2227 = vld [vmem:[#allocation10 + $0x308] sm:$0xff]
          %v2228 = vld [vmem:[#allocation10 + $0x310] sm:$0xff]
          %v2229 = vld [vmem:[#allocation10 + $0x318] sm:$0xff]
          %v2230 = vld [vmem:[#allocation10 + $0x320] sm:$0xff]
          %v2231 = vld [vmem:[#allocation10 + $0x328] sm:$0xff]
          %v2232 = vld [vmem:[#allocation10 + $0x330] sm:$0xff]
          %v2233 = vld [vmem:[#allocation10 + $0x338] sm:$0xff]
          %v2234 = vld [vmem:[#allocation10 + $0x340] sm:$0xff]
          %v2235 = vld [vmem:[#allocation10 + $0x348] sm:$0xff]
          %v2236 = vld [vmem:[#allocation10 + $0x350] sm:$0xff]
          %v2237 = vld [vmem:[#allocation10 + $0x358] sm:$0xff]
          %v2238 = vld [vmem:[#allocation10 + $0x360] sm:$0xff]
          %v2239 = vld [vmem:[#allocation10 + $0x368] sm:$0xff]
          %v2240 = vld [vmem:[#allocation10 + $0x370] sm:$0xff]
          %v2241 = vld [vmem:[#allocation10 + $0x378] sm:$0xff]
          %v2242 = vld [vmem:[#allocation10 + $0x380] sm:$0xff]
          %v2243 = vld [vmem:[#allocation10 + $0x388] sm:$0xff]
          %v2244 = vld [vmem:[#allocation10 + $0x390] sm:$0xff]
          %v2245 = vld [vmem:[#allocation10 + $0x398] sm:$0xff]
          %v2246 = vld [vmem:[#allocation10 + $0x3a0] sm:$0xff]
          %v2247 = vld [vmem:[#allocation10 + $0x3a8] sm:$0xff]
          %v2248 = vld [vmem:[#allocation10 + $0x3b0] sm:$0xff]
          %v2249 = vld [vmem:[#allocation10 + $0x3b8] sm:$0xff]
          %v2250 = vld [vmem:[#allocation10 + $0x3c0] sm:$0xff]
          %v2251 = vld [vmem:[#allocation10 + $0x3c8] sm:$0xff]
          %v2252 = vld [vmem:[#allocation10 + $0x3d0] sm:$0xff]
          %v2253 = vld [vmem:[#allocation10 + $0x3d8] sm:$0xff]
          %v2254 = vld [vmem:[#allocation10 + $0x3e0] sm:$0xff]
          %v2255 = vld [vmem:[#allocation10 + $0x3e8] sm:$0xff]
          %v2256 = vld [vmem:[#allocation10 + $0x3f0] sm:$0xff]
          %v2257 = vld [vmem:[#allocation10 + $0x3f8] sm:$0xff]
          %v2259 = vlaneseq
          %v2260 = vshrl.u32 %v2259, 7
          %v2261 = vsub.s32 0, %v2260
          %v2262 = vrot.slane %v388, %v2261
          %v2263 = vlaneseq
          %v2264 = vshrl.u32 %v2263, 7
          %v2265 = vsub.s32 1, %v2264
          %v2266 = vrot.slane %v388, %v2265
          %2269 = vmatprep.subr.mxu0 %v2131
          %2270 = vmatpush1.msra.mxu0 %v2130
          %2271 = vmatprep.subr.mxu0 %v2133
          %2272 = vmatpush1.msra.mxu0 %v2132
          %2273 = vmatprep.subr.mxu0 %v2135
          %2274 = vmatpush1.msra.mxu0 %v2134
          %2275 = vmatprep.subr.mxu0 %v2137
          %2276 = vmatpush1.msra.mxu0 %v2136
          %2277 = vmatprep.subr.mxu0 %v2139
          %2278 = vmatpush1.msra.mxu0 %v2138
          %2279 = vmatprep.subr.mxu0 %v2141
          %2280 = vmatpush1.msra.mxu0 %v2140
          %2281 = vmatprep.subr.mxu0 %v2143
          %2282 = vmatpush1.msra.mxu0 %v2142
          %2283 = vmatprep.subr.mxu0 %v2145
          %2284 = vmatpush1.msra.mxu0 %v2144
          %2285 = vmatprep.subr.mxu0 %v2147
          %2286 = vmatpush1.msra.mxu0 %v2146
          %2287 = vmatprep.subr.mxu0 %v2149
          %2288 = vmatpush1.msra.mxu0 %v2148
          %2289 = vmatprep.subr.mxu0 %v2151
          %2290 = vmatpush1.msra.mxu0 %v2150
          %2291 = vmatprep.subr.mxu0 %v2153
          %2292 = vmatpush1.msra.mxu0 %v2152
          %2293 = vmatprep.subr.mxu0 %v2155
          %2294 = vmatpush1.msra.mxu0 %v2154
          %2295 = vmatprep.subr.mxu0 %v2157
          %2296 = vmatpush1.msra.mxu0 %v2156
          %2297 = vmatprep.subr.mxu0 %v2159
          %2298 = vmatpush1.msra.mxu0 %v2158
          %2299 = vmatprep.subr.mxu0 %v2161
          %2300 = vmatpush1.msra.mxu0 %v2160
          %2301 = vmatprep.subr.mxu0 %v2163
          %2302 = vmatpush1.msra.mxu0 %v2162
          %2303 = vmatprep.subr.mxu0 %v2165
          %2304 = vmatpush1.msra.mxu0 %v2164
          %2305 = vmatprep.subr.mxu0 %v2167
          %2306 = vmatpush1.msra.mxu0 %v2166
          %2307 = vmatprep.subr.mxu0 %v2169
          %2308 = vmatpush1.msra.mxu0 %v2168
          %2309 = vmatprep.subr.mxu0 %v2171
          %2310 = vmatpush1.msra.mxu0 %v2170
          %2311 = vmatprep.subr.mxu0 %v2173
          %2312 = vmatpush1.msra.mxu0 %v2172
          %2313 = vmatprep.subr.mxu0 %v2175
          %2314 = vmatpush1.msra.mxu0 %v2174
          %2315 = vmatprep.subr.mxu0 %v2177
          %2316 = vmatpush1.msra.mxu0 %v2176
          %2317 = vmatprep.subr.mxu0 %v2179
          %2318 = vmatpush1.msra.mxu0 %v2178
          %2319 = vmatprep.subr.mxu0 %v2181
          %2320 = vmatpush1.msra.mxu0 %v2180
          %2321 = vmatprep.subr.mxu0 %v2183
          %2322 = vmatpush1.msra.mxu0 %v2182
          %2323 = vmatprep.subr.mxu0 %v2185
          %2324 = vmatpush1.msra.mxu0 %v2184
          %2325 = vmatprep.subr.mxu0 %v2187
          %2326 = vmatpush1.msra.mxu0 %v2186
          %2327 = vmatprep.subr.mxu0 %v2189
          %2328 = vmatpush1.msra.mxu0 %v2188
          %2329 = vmatprep.subr.mxu0 %v2191
          %2330 = vmatpush1.msra.mxu0 %v2190
          %2331 = vmatprep.subr.mxu0 %v2193
          %2332 = vmatpush1.msra.mxu0 %v2192
          %2333 = vmatprep.mubr.f32.mxu0 %v2123
          %2334 = vmatmul.mubr.f32.gmra.mrb[0].mxu0 %v2122
          %v2335 = vpop.f32.mrb[0].mxu0
          %v2336 = vadd.f32 %v2262, %v2335
          %v2337 = vpop.f32.mrb[0].mxu0
          %v2338 = vadd.f32 %v2266, %v2337
          %2339 = vmatprep.mubr.f32.mxu0 %v2127
          %2340 = vmatmul.mubr.f32.gmra.mrb[0].mxu0 %v2126
          %v2341 = vpop.f32.mrb[0].mxu0
          %v2342 = vadd.f32 %v2262, %v2341
          %v2343 = vpop.f32.mrb[0].mxu0
          %v2344 = vadd.f32 %v2266, %v2343
          %2345 = vdwg.mxu0
          %2346 = vmatprep.subr.mxu0 %v2195
          %2347 = vmatpush1.msra.mxu0 %v2194
          %2348 = vmatprep.subr.mxu0 %v2197
          %2349 = vmatpush1.msra.mxu0 %v2196
          %2350 = vmatprep.subr.mxu0 %v2199
          %2351 = vmatpush1.msra.mxu0 %v2198
          %2352 = vmatprep.subr.mxu0 %v2201
          %2353 = vmatpush1.msra.mxu0 %v2200
          %2354 = vmatprep.subr.mxu0 %v2203
          %2355 = vmatpush1.msra.mxu0 %v2202
          %2356 = vmatprep.subr.mxu0 %v2205
          %2357 = vmatpush1.msra.mxu0 %v2204
          %2358 = vmatprep.subr.mxu0 %v2207
          %2359 = vmatpush1.msra.mxu0 %v2206
          %2360 = vmatprep.subr.mxu0 %v2209
          %2361 = vmatpush1.msra.mxu0 %v2208
          %2362 = vmatprep.subr.mxu0 %v2211
          %2363 = vmatpush1.msra.mxu0 %v2210
          %2364 = vmatprep.subr.mxu0 %v2213
          %2365 = vmatpush1.msra.mxu0 %v2212
          %2366 = vmatprep.subr.mxu0 %v2215
          %2367 = vmatpush1.msra.mxu0 %v2214
          %2368 = vmatprep.subr.mxu0 %v2217
          %2369 = vmatpush1.msra.mxu0 %v2216
          %2370 = vmatprep.subr.mxu0 %v2219
          %2371 = vmatpush1.msra.mxu0 %v2218
          %2372 = vmatprep.subr.mxu0 %v2221
          %2373 = vmatpush1.msra.mxu0 %v2220
          %2374 = vmatprep.subr.mxu0 %v2223
          %2375 = vmatpush1.msra.mxu0 %v2222
          %2376 = vmatprep.subr.mxu0 %v2225
          %2377 = vmatpush1.msra.mxu0 %v2224
          %2378 = vmatprep.subr.mxu0 %v2227
          %2379 = vmatpush1.msra.mxu0 %v2226
          %2380 = vmatprep.subr.mxu0 %v2229
          %2381 = vmatpush1.msra.mxu0 %v2228
          %2382 = vmatprep.subr.mxu0 %v2231
          %2383 = vmatpush1.msra.mxu0 %v2230
          %2384 = vmatprep.subr.mxu0 %v2233
          %2385 = vmatpush1.msra.mxu0 %v2232
          %2386 = vmatprep.subr.mxu0 %v2235
          %2387 = vmatpush1.msra.mxu0 %v2234
          %2388 = vmatprep.subr.mxu0 %v2237
          %2389 = vmatpush1.msra.mxu0 %v2236
          %2390 = vmatprep.subr.mxu0 %v2239
          %2391 = vmatpush1.msra.mxu0 %v2238
          %2392 = vmatprep.subr.mxu0 %v2241
          %2393 = vmatpush1.msra.mxu0 %v2240
          %2394 = vmatprep.subr.mxu0 %v2243
          %2395 = vmatpush1.msra.mxu0 %v2242
          %2396 = vmatprep.subr.mxu0 %v2245
          %2397 = vmatpush1.msra.mxu0 %v2244
          %2398 = vmatprep.subr.mxu0 %v2247
          %2399 = vmatpush1.msra.mxu0 %v2246
          %2400 = vmatprep.subr.mxu0 %v2249
          %2401 = vmatpush1.msra.mxu0 %v2248
          %2402 = vmatprep.subr.mxu0 %v2251
          %2403 = vmatpush1.msra.mxu0 %v2250
          %2404 = vmatprep.subr.mxu0 %v2253
          %2405 = vmatpush1.msra.mxu0 %v2252
          %2406 = vmatprep.subr.mxu0 %v2255
          %2407 = vmatpush1.msra.mxu0 %v2254
          %2408 = vmatprep.subr.mxu0 %v2257
          %2409 = vmatpush1.msra.mxu0 %v2256
          %2410 = vmatprep.mubr.f32.mxu0 %v2125
          %2411 = vmatmul.mubr.f32.gmra.mrb[0].mxu0 %v2124
          %v2412 = vpop.f32.mrb[0].mxu0
          %v2413 = vadd.f32 %v2336, %v2412
          %v2414 = vpop.f32.mrb[0].mxu0
          %v2415 = vadd.f32 %v2338, %v2414
          %2416 = vmatprep.mubr.f32.mxu0 %v2129
          %2417 = vmatmul.mubr.f32.gmra.mrb[0].mxu0 %v2128
          %v2418 = vpop.f32.mrb[0].mxu0
          %v2419 = vadd.f32 %v2342, %v2418
          %v2420 = vpop.f32.mrb[0].mxu0
          %v2421 = vadd.f32 %v2344, %v2420
          %2422 = vdwg.mxu0
          %v2423 = vadd.f32 %v1814, %v2413
          %v2424 = vadd.f32 %v1815, %v2415
          %v2425 = vadd.f32 %v1816, %v2419
          %v2426 = vadd.f32 %v1817, %v2421
          %v2427 = vadd.f32 %v2423, %v2424
          %2428 = vadd.xlane.f32.xlu0 %v2427
          %v2429 = vpop.xlane.xlu0 %2428
          %v2430 = vadd.f32 %v2425, %v2426
          %2431 = vadd.xlane.f32.xlu0 %v2430
          %v2432 = vpop.xlane.xlu0 %2431
          %v2433 = vmul.f32 %v2429, %v1761
          %v2434 = vmul.f32 %v2432, %v1761
          %v2435 = vsub.f32 %v2423, %v2433
          %v2436 = vsub.f32 %v2424, %v2433
          %v2437 = vsub.f32 %v2425, %v2434
          %v2438 = vsub.f32 %v2426, %v2434
          %v2439 = vmul.f32 %v2435, %v2435
          %v2440 = vmul.f32 %v2436, %v2436
          %v2441 = vmul.f32 %v2437, %v2437
          %v2442 = vmul.f32 %v2438, %v2438
          %v2443 = vadd.f32 %v2439, %v2440
          %2444 = vadd.xlane.f32.xlu0 %v2443
          %v2445 = vpop.xlane.xlu0 %2444
          %v2446 = vadd.f32 %v2441, %v2442
          %2447 = vadd.xlane.f32.xlu0 %v2446
          %v2448 = vpop.xlane.xlu0 %2447
          %v2449 = vmul.f32 %v2445, %v1761
          %v2450 = vmul.f32 %v2448, %v1761
          %v2451 = vadd.f32 %v2449, 1e-05
          %v2452 = vadd.f32 %v2450, 1e-05
          %v2453 = vrsqrt.pop %v2451
          %v2454 = vrsqrt.pop %v2452
          %v2455 = vmul.f32 %v2435, %v2453
          %v2456 = vmul.f32 %v2436, %v2453
          %v2457 = vmul.f32 %v2437, %v2454
          %v2458 = vmul.f32 %v2438, %v2454
          %v2460 = vlaneseq
          %v2461 = vshrl.u32 %v2460, 7
          %v2462 = vsub.s32 0, %v2461
          %v2463 = vrot.slane %v390, %v2462
          %v2464 = vlaneseq
          %v2465 = vshrl.u32 %v2464, 7
          %v2466 = vsub.s32 1, %v2465
          %v2467 = vrot.slane %v390, %v2466
          %v2470 = vmul.f32 %v2455, %v2463
          %v2471 = vmul.f32 %v2456, %v2467
          %v2472 = vmul.f32 %v2457, %v2463
          %v2473 = vmul.f32 %v2458, %v2467
          %v2475 = vlaneseq
          %v2476 = vshrl.u32 %v2475, 7
          %v2477 = vsub.s32 0, %v2476
          %v2478 = vrot.slane %v392, %v2477
          %v2479 = vlaneseq
          %v2480 = vshrl.u32 %v2479, 7
          %v2481 = vsub.s32 1, %v2480
          %v2482 = vrot.slane %v392, %v2481
          %v2485 = vadd.f32 %v2470, %v2478
          %v2486 = vadd.f32 %v2471, %v2482
          %v2487 = vadd.f32 %v2472, %v2478
          %v2488 = vadd.f32 %v2473, %v2482
        $region77: #{tpu_custom_call.1} parent=51 // loop_footer
          %s402 = sadd.s32 1, %s398
        $region78: #{tpu_custom_call.1} parent=51 // loop_footer_branch
          %397 = sbr.rel target = $region74
        $region79: #{tpu_custom_call.1} parent=51 // loop_exit
          _
        %2489 = vst [vmem:[%s381] sm:$0xff] %v403
        %2490 = vst [vmem:[%s381 + $0x8] sm:$0xff] %v404
        %2491 = vst [vmem:[%s381 + $0x10] sm:$0xff] %v405
        %2492 = vst [vmem:[%s381 + $0x18] sm:$0xff] %v406
        %s2493 = sand.u32 %s208, 1
        %s2494 = scalar_lea.sflag [#allocation4], %s2493
        %s2495 = sand.u32 %s208, 1
        %s2496 = smul.addr %s2495, 32
        %s2497 = scalar_lea.vmem [#allocation11], %s2496
        // Predicated region
        $region80: #{tpu_custom_call.1} parent=51 // pred_check
          %p2498 = pneg %p218
        $region81: #{tpu_custom_call.1} parent=51 // pred_check_branch
          %2500 = sbr.rel (%p2498) target = $region83
        $region82: #{tpu_custom_call.1} parent=51 // pred_region
          %s2502 = ssub.s32 512, 512
          %2503 = vsyncadd %s2494, %s2502
          %s2504 = smul.addr %s27, 4
          %s2505 = smul.addr %s2504, 128
          %s2506 = scalar_lea.hbm %s8, %s2505
          %s2507 = sshll.u32 %s2497, 4
          %s2508 = int_to_ptr.vmem [resolvable:$true] %s2507
          %2513 = dma.vmem_to_hbm [thread:$0]  %s2508, 512, %s2506, %s2494, 256, 256, 16
        $region83: #{tpu_custom_call.1} parent=51 // pred_fallthru
          _
      $region52: #{tpu_custom_call.1} parent=5 // pred_fallthru
        _
      %p2514 = scmp.le.s32.totalorder 2, %s22
      // Predicated region
      $region84: #{tpu_custom_call.1} parent=5 // pred_check
        %p2515 = pneg %p2514
      $region85: #{tpu_custom_call.1} parent=5 // pred_check_branch
        %2517 = sbr.rel (%p2515) target = $region87
      $region86: #{tpu_custom_call.1} parent=5 // pred_region
        %s2518 = ssub.s32 %s22, 2
        // Predicated region
        $region88: #{tpu_custom_call.1} parent=86 // pred_check
          %p2519 = pneg %p224
        $region89: #{tpu_custom_call.1} parent=86 // pred_check_branch
          %2521 = sbr.rel (%p2519) target = $region91
        $region90: #{tpu_custom_call.1} parent=86 // pred_region
          %s2522 = sand.u32 %s209, 1
          %s2523 = scalar_lea.sflag [#allocation4], %s2522
          %s2524 = sand.u32 %s209, 1
          %s2525 = smul.addr %s2524, 32
          %s2526 = scalar_lea.vmem [#allocation11], %s2525
          %2527 = dma.done %s2523, 512
        $region91: #{tpu_custom_call.1} parent=86 // pred_fallthru
          _
      $region87: #{tpu_custom_call.1} parent=5 // pred_fallthru
        _
    $region6: #{tpu_custom_call.1} parent=1 // loop_footer
      %s26 = sadd.s32 1, %s22
    $region7: #{tpu_custom_call.1} parent=1 // loop_footer_branch
      %21 = sbr.rel target = $region3
    $region8: #{tpu_custom_call.1} parent=1 // loop_exit
      _
    %2528 = vsyncpa [#allocation3], 1
    %s2529 = scalar_lea.sflag [#allocation3], 1
    %2530 = vsyncpa %s2529, 1
    %2531 = vsyncpa [#allocation6], 1
    %2532 = vsyncpa [#allocation9], 1
    %2533 = vsyncpa [#allocation4], 1
    %s2534 = scalar_lea.sflag [#allocation4], 1
    %2535 = vsyncpa %s2534, 1

</llo_original>
